<compile_context>
chip_gen: v7x
topology: tpu7x:2x2x1
jax: 0.10.0
libtpu: 0.0.40
codegen_flags: <defaults>
</compile_context>

<pallas_src>
import jax
import jax.numpy as jnp
from jax.experimental import pallas as pl
from jax.experimental.pallas import tpu as pltpu


HIDDEN = (2048, 1024, 512)   # fixed by the module
SLOPE1 = 0.3                 # LeakyReLU negative slope, layer 1
SLOPE2 = 0.15                # LeakyReLU negative slope, layer 2


def _fused_mlp_kernel(x_ref, w1_hbm, b1_ref, w2_hbm, b2_ref, w3_hbm, b3_ref,
                      o_ref,
                      h1_ref, h2_ref, w1_buf, w2_buf, w3_buf, sems):
    """Three fused Linear(+LeakyReLU) layers with manual weight streaming.

    W1 arrives pre-tiled as (n_tiles, F, tn1): each tile is one contiguous DMA.
    W2 / W3 are fetched whole (single DMA each), queued *after* all W1 tiles.
    """
    n1_tiles, _, tn1 = w1_hbm.shape

    def w1_copy(j):
        return pltpu.make_async_copy(w1_hbm.at[j], w1_buf.at[j % 2],
                                     sems.at[j % 2])

    w2_copy = pltpu.make_async_copy(w2_hbm, w2_buf, sems.at[2])
    w3_copy = pltpu.make_async_copy(w3_hbm, w3_buf, sems.at[3])

    # Prime layer-1's double buffer: tile 0 goes first in the DMA queue.
    w1_copy(0).start()

    # ---- Layer 1: x @ W1 + b1, LeakyReLU(0.3) -- streamed column tiles ----
    for j in range(n1_tiles):                    # static unrolled, small count
        if j + 1 < n1_tiles:
            w1_copy(j + 1).start()               # prefetch next tile
        if j + 1 == n1_tiles:
            # All W1 tiles are queued; now queue W2 / W3 behind them so the
            # DMA order matches the compute order (L1 tiles -> W2 -> W3).
            w2_copy.start()
            w3_copy.start()
        w1_copy(j).wait()
        acc = jnp.dot(x_ref[...], w1_buf[j % 2],
                      preferred_element_type=jnp.float32)
        acc = acc + b1_ref[:, j * tn1:(j + 1) * tn1]      # (1, tn1) broadcast
        h1_ref[:, j * tn1:(j + 1) * tn1] = jnp.where(acc >= 0, acc, SLOPE1 * acc)

    # ---- Layer 2: h1 @ W2 + b2, LeakyReLU(0.15) -- whole W2 resident ----
    w2_copy.wait()
    acc = jnp.dot(h1_ref[...].astype(jnp.bfloat16), w2_buf[...],
                  preferred_element_type=jnp.float32)
    acc = acc + b2_ref[...]
    h2_ref[...] = jnp.where(acc >= 0, acc, SLOPE2 * acc)

    # ---- Layer 3: h2 @ W3 + b3 (no activation) -- whole W3 resident ----
    w3_copy.wait()
    acc = jnp.dot(h2_ref[...].astype(jnp.bfloat16), w3_buf[...],
                  preferred_element_type=jnp.float32)
    o_ref[...] = acc + b3_ref[...]


def _choose_tn1(F):
    """Largest W1 column tile whose bf16 double buffer stays within ~16 MiB."""
    for tn in (1024, 512, 256, 128):
        if HIDDEN[0] % tn == 0 and 2 * 2 * F * tn <= (16 << 20):
            return tn
    return 128


def _vmem_limit_bytes(B, F, tn1):
    """Explicit scoped-VMEM budget (v5e default scoped VMEM is only 16 MiB)."""
    n1, n2, n3 = HIDDEN
    w1_db = 2 * 2 * F * tn1                    # bf16 W1 double buffer
    w23 = 2 * (n1 * n2 + n2 * n3)              # whole W2 / W3 bf16 buffers
    acts = 4 * B * (n1 + n2)                   # f32 h1 / h2 scratch
    blocks = 2 * (2 * B * F + 4 * (n1 + n2 + n3) + 4 * B * n3)  # in/out blocks
    return w1_db + w23 + acts + blocks + (2 << 20)


@jax.jit
def embedding_net_forward(x, params):
    """Fused Pallas forward pass. x: (B, F) any float dtype -> (B, 512) f32.

    params[0][0] (W1) must be pre-tiled to (n_tiles, F, tn1) -- see init_params.
    """
    (w1t, b1), (w2, b2), (w3, b3) = params
    n1, n2, n3 = HIDDEN
    n1_tiles, F, tn1 = w1t.shape
    B = x.shape[0]
    assert x.shape == (B, F)
    assert n1_tiles * tn1 == n1
    assert w2.shape == (n1, n2) and w3.shape == (n2, n3)
    assert b1.shape == (1, n1) and b2.shape == (1, n2) and b3.shape == (1, n3)

    # x.type(torch.FloatTensor); stream activations to the MXU as bf16.
    x = x.astype(jnp.float32).astype(jnp.bfloat16)

    flops = 2 * B * (F * n1 + n1 * n2 + n2 * n3)
    bytes_accessed = (
        2 * (F * n1 + n1 * n2 + n2 * n3)       # bf16 weights
        + 4 * (n1 + n2 + n3)                   # f32 biases
        + 2 * B * F + 4 * B * n3)              # bf16 x in, f32 out

    return pl.pallas_call(
        _fused_mlp_kernel,
        out_shape=jax.ShapeDtypeStruct((B, n3), jnp.float32),
        grid_spec=pltpu.PrefetchScalarGridSpec(
            num_scalar_prefetch=0,
            grid=(1,),
            in_specs=[
                pl.BlockSpec((B, F), lambda i: (0, 0)),      # x (bf16) -> VMEM
                pl.BlockSpec(memory_space=pl.ANY),           # W1 tiles stay in HBM
                pl.BlockSpec((1, n1), lambda i: (0, 0)),     # b1 -> VMEM
                pl.BlockSpec(memory_space=pl.ANY),           # W2 stays in HBM
                pl.BlockSpec((1, n2), lambda i: (0, 0)),     # b2 -> VMEM
                pl.BlockSpec(memory_space=pl.ANY),           # W3 stays in HBM
                pl.BlockSpec((1, n3), lambda i: (0, 0)),     # b3 -> VMEM
            ],
            out_specs=pl.BlockSpec((B, n3), lambda i: (0, 0)),
            scratch_shapes=[
                pltpu.VMEM((B, n1), jnp.float32),            # h1 (f32, VMEM-resident)
                pltpu.VMEM((B, n2), jnp.float32),            # h2 (f32, VMEM-resident)
                pltpu.VMEM((2, F, tn1), jnp.bfloat16),       # W1 tile double buffer
                pltpu.VMEM((n1, n2), jnp.bfloat16),          # whole-W2 buffer
                pltpu.VMEM((n2, n3), jnp.bfloat16),          # whole-W3 buffer
                pltpu.SemaphoreType.DMA((4,)),               # [w1 slot0, w1 slot1, W2, W3]
            ],
        ),
        compiler_params=pltpu.CompilerParams(
            dimension_semantics=("arbitrary",),
            vmem_limit_bytes=_vmem_limit_bytes(B, F, tn1),
        ),
        cost_estimate=pl.CostEstimate(
            flops=flops, transcendentals=0, bytes_accessed=bytes_accessed),
    )(x, w1t, b1, w2, b2, w3, b3)


def init_params(key, input_shape, weight_dtype=jnp.bfloat16):
    """nn.Linear-style U(-1/sqrt(fan_in), +1/sqrt(fan_in)) init.

    Weights are stored (in, out) -- the transpose of torch's (out, in).
    W1 is additionally pre-tiled ONCE to (n_tiles, F, tn1) so the kernel's
    streamed weight DMAs are fully contiguous.  Weights are cast to
    `weight_dtype` (bf16 by default); biases stay f32 with shape (1, out).
    """
    F = input_shape
    dims = [(F, HIDDEN[0]), (HIDDEN[0], HIDDEN[1]), (HIDDEN[1], HIDDEN[2])]
    raw = []
    for fan_in, fan_out in dims:
        key, kw, kb = jax.random.split(key, 3)
        bound = 1.0 / jnp.sqrt(jnp.float32(fan_in))
        w = jax.random.uniform(kw, (fan_in, fan_out), jnp.float32, -bound, bound)
        b = jax.random.uniform(kb, (1, fan_out), jnp.float32, -bound, bound)
        raw.append((w, b))

    (w1, b1), (w2, b2), (w3, b3) = raw
    tn1 = _choose_tn1(F)
    n1_tiles = HIDDEN[0] // tn1
    # (F, n1) -> (n_tiles, F, tn1): tile j holds columns [j*tn1, (j+1)*tn1).
    w1t = w1.reshape(F, n1_tiles, tn1).transpose(1, 0, 2)
    return [(w1t.astype(weight_dtype), b1),
            (w2.astype(weight_dtype), b2),
            (w3.astype(weight_dtype), b3)]


def reference_forward(x, params):
    """Pure-jnp reference mirroring the kernel's bf16 operand rounding."""
    (w1t, b1), (w2, b2), (w3, b3) = params
    n_t, F, tn = w1t.shape
    w1 = w1t.transpose(1, 0, 2).reshape(F, n_t * tn)
    h = x.astype(jnp.float32)
    for w, b, slope in ((w1, b1, SLOPE1), (w2, b2, SLOPE2), (w3, b3, None)):
        h = h.astype(jnp.bfloat16).astype(jnp.float32)
        h = h @ w.astype(jnp.float32) + b
        if slope is not None:
            h = jnp.where(h >= 0, h, slope * h)
    return h


if __name__ == "__main__":
    # Module default is TFIDF_SHAPE=3657; small demo shape here. Hidden sizes
    # 2048/1024/512 are fixed by the module and kept exactly.
    BATCH = 8
    INPUT_SHAPE = 384

    key = jax.random.PRNGKey(0)
    key_x, key_p = jax.random.split(key)
    x = jax.random.normal(key_x, (BATCH, INPUT_SHAPE), dtype=jnp.float32)
    params = init_params(key_p, INPUT_SHAPE)

    out = jax.block_until_ready(embedding_net_forward(x, params))
    ref = jax.block_until_ready(reference_forward(x, params))

    assert out.shape == (BATCH, 512), out.shape
    assert out.dtype == jnp.float32, out.dtype
    assert jnp.allclose(out, ref, atol=2e-3, rtol=2e-3), "mismatch vs reference"

    print("KERNEL_OK")
</pallas_src>

<mosaic_0001>
module attributes {stable_mosaic.version = 11 : i64} {
  func.func @_fused_mlp_kernel(%arg0: i32, %arg1: memref<8x384xbf16, #tpu.memory_space<vmem>>, %arg2: memref<2x384x1024xbf16, #tpu.memory_space<any>>, %arg3: memref<1x2048xf32, #tpu.memory_space<vmem>>, %arg4: memref<2048x1024xbf16, #tpu.memory_space<any>>, %arg5: memref<1x1024xf32, #tpu.memory_space<vmem>>, %arg6: memref<1024x512xbf16, #tpu.memory_space<any>>, %arg7: memref<1x512xf32, #tpu.memory_space<vmem>>, %arg8: memref<8x512xf32, #tpu.memory_space<vmem>>, %arg9: memref<8x2048xf32, #tpu.memory_space<vmem>>, %arg10: memref<8x1024xf32, #tpu.memory_space<vmem>>, %arg11: memref<2x384x1024xbf16, #tpu.memory_space<vmem>>, %arg12: memref<2048x1024xbf16, #tpu.memory_space<vmem>>, %arg13: memref<1024x512xbf16, #tpu.memory_space<vmem>>, %arg14: memref<4x!tpu.dma_semaphore, #tpu.memory_space<semaphore_mem>>) attributes {dimension_semantics = [#tpu.dimension_semantics<arbitrary>], iteration_bounds = array<i64: 1>, scalar_prefetch = 0 : i64, scratch_operands = 6 : i64, tpu.core_type = #tpu.core_type<tc>, window_params = [{pipeline_mode = #tpu.pipeline_mode<synchronous>, transform_indices = @transform_0, window_bounds = array<i64: 8, 384>}, {}, {pipeline_mode = #tpu.pipeline_mode<synchronous>, transform_indices = @transform_2, window_bounds = array<i64: 1, 2048>}, {}, {pipeline_mode = #tpu.pipeline_mode<synchronous>, transform_indices = @transform_4, window_bounds = array<i64: 1, 1024>}, {}, {pipeline_mode = #tpu.pipeline_mode<synchronous>, transform_indices = @transform_6, window_bounds = array<i64: 1, 512>}, {pipeline_mode = #tpu.pipeline_mode<synchronous>, transform_indices = @transform_7, window_bounds = array<i64: 8, 512>}]} {
    %c0_i32 = arith.constant 0 : i32
    %c0_i32_0 = arith.constant 0 : i32
    %c0_i32_1 = arith.constant 0 : i32
    %c0_i32_2 = arith.constant 0 : i32
    %c0_i32_3 = arith.constant 0 : i32
    %0 = tpu.memref_slice %arg2[%c0_i32, %c0_i32_2, %c0_i32_3] : memref<2x384x1024xbf16, #tpu.memory_space<any>> -> memref<1x384x1024xbf16, #tpu.memory_space<any>>
    %1 = tpu.memref_squeeze %0 : memref<1x384x1024xbf16, #tpu.memory_space<any>> -> memref<384x1024xbf16, #tpu.memory_space<any>>
    %c0_i32_4 = arith.constant 0 : i32
    %c0_i32_5 = arith.constant 0 : i32
    %2 = tpu.memref_slice %arg11[%c0_i32_0, %c0_i32_4, %c0_i32_5] : memref<2x384x1024xbf16, #tpu.memory_space<vmem>> -> memref<1x384x1024xbf16, #tpu.memory_space<vmem>>
    %3 = tpu.memref_squeeze %2 : memref<1x384x1024xbf16, #tpu.memory_space<vmem>> -> memref<384x1024xbf16, #tpu.memory_space<vmem>>
    %4 = tpu.memref_slice %arg14[%c0_i32_1] : memref<4x!tpu.dma_semaphore, #tpu.memory_space<semaphore_mem>> -> memref<1x!tpu.dma_semaphore, #tpu.memory_space<semaphore_mem>>
    %5 = tpu.memref_squeeze %4 : memref<1x!tpu.dma_semaphore, #tpu.memory_space<semaphore_mem>> -> memref<!tpu.dma_semaphore, #tpu.memory_space<semaphore_mem>>
    tpu.enqueue_dma source(%1 : memref<384x1024xbf16, #tpu.memory_space<any>>) target(%3 : memref<384x1024xbf16, #tpu.memory_space<vmem>>) target_semaphore(%5 : memref<!tpu.dma_semaphore, #tpu.memory_space<semaphore_mem>>)
    %c1_i32 = arith.constant 1 : i32
    %c1_i32_6 = arith.constant 1 : i32
    %c1_i32_7 = arith.constant 1 : i32
    %c0_i32_8 = arith.constant 0 : i32
    %c0_i32_9 = arith.constant 0 : i32
    %6 = tpu.memref_slice %arg2[%c1_i32, %c0_i32_8, %c0_i32_9] : memref<2x384x1024xbf16, #tpu.memory_space<any>> -> memref<1x384x1024xbf16, #tpu.memory_space<any>>
    %7 = tpu.memref_squeeze %6 : memref<1x384x1024xbf16, #tpu.memory_space<any>> -> memref<384x1024xbf16, #tpu.memory_space<any>>
    %c0_i32_10 = arith.constant 0 : i32
    %c0_i32_11 = arith.constant 0 : i32
    %8 = tpu.memref_slice %arg11[%c1_i32_6, %c0_i32_10, %c0_i32_11] : memref<2x384x1024xbf16, #tpu.memory_space<vmem>> -> memref<1x384x1024xbf16, #tpu.memory_space<vmem>>
    %9 = tpu.memref_squeeze %8 : memref<1x384x1024xbf16, #tpu.memory_space<vmem>> -> memref<384x1024xbf16, #tpu.memory_space<vmem>>
    %10 = tpu.memref_slice %arg14[%c1_i32_7] : memref<4x!tpu.dma_semaphore, #tpu.memory_space<semaphore_mem>> -> memref<1x!tpu.dma_semaphore, #tpu.memory_space<semaphore_mem>>
    %11 = tpu.memref_squeeze %10 : memref<1x!tpu.dma_semaphore, #tpu.memory_space<semaphore_mem>> -> memref<!tpu.dma_semaphore, #tpu.memory_space<semaphore_mem>>
    tpu.enqueue_dma source(%7 : memref<384x1024xbf16, #tpu.memory_space<any>>) target(%9 : memref<384x1024xbf16, #tpu.memory_space<vmem>>) target_semaphore(%11 : memref<!tpu.dma_semaphore, #tpu.memory_space<semaphore_mem>>)
    %c0_i32_12 = arith.constant 0 : i32
    %c0_i32_13 = arith.constant 0 : i32
    %c0_i32_14 = arith.constant 0 : i32
    %c0_i32_15 = arith.constant 0 : i32
    %c0_i32_16 = arith.constant 0 : i32
    %12 = tpu.memref_slice %arg2[%c0_i32_12, %c0_i32_15, %c0_i32_16] : memref<2x384x1024xbf16, #tpu.memory_space<any>> -> memref<1x384x1024xbf16, #tpu.memory_space<any>>
    %13 = tpu.memref_squeeze %12 : memref<1x384x1024xbf16, #tpu.memory_space<any>> -> memref<384x1024xbf16, #tpu.memory_space<any>>
    %c0_i32_17 = arith.constant 0 : i32
    %c0_i32_18 = arith.constant 0 : i32
    %14 = tpu.memref_slice %arg11[%c0_i32_13, %c0_i32_17, %c0_i32_18] : memref<2x384x1024xbf16, #tpu.memory_space<vmem>> -> memref<1x384x1024xbf16, #tpu.memory_space<vmem>>
    %15 = tpu.memref_squeeze %14 : memref<1x384x1024xbf16, #tpu.memory_space<vmem>> -> memref<384x1024xbf16, #tpu.memory_space<vmem>>
    %16 = tpu.memref_slice %arg14[%c0_i32_14] : memref<4x!tpu.dma_semaphore, #tpu.memory_space<semaphore_mem>> -> memref<1x!tpu.dma_semaphore, #tpu.memory_space<semaphore_mem>>
    %17 = tpu.memref_squeeze %16 : memref<1x!tpu.dma_semaphore, #tpu.memory_space<semaphore_mem>> -> memref<!tpu.dma_semaphore, #tpu.memory_space<semaphore_mem>>
    tpu.wait_dma2 semaphore(%17 : memref<!tpu.dma_semaphore, #tpu.memory_space<semaphore_mem>>) src(%13 : memref<384x1024xbf16, #tpu.memory_space<any>>) dst(%15 : memref<384x1024xbf16, #tpu.memory_space<vmem>>)
    %c0 = arith.constant 0 : index
    %c0_19 = arith.constant 0 : index
    %18 = vector.load %arg1[%c0, %c0_19] : memref<8x384xbf16, #tpu.memory_space<vmem>>, vector<8x384xbf16>
    %c0_20 = arith.constant 0 : index
    %c0_21 = arith.constant 0 : index
    %c0_22 = arith.constant 0 : index
    %19 = vector.load %arg11[%c0_20, %c0_21, %c0_22] : memref<2x384x1024xbf16, #tpu.memory_space<vmem>>, vector<1x384x1024xbf16>
    %20 = vector.shape_cast %19 : vector<1x384x1024xbf16> to vector<384x1024xbf16>
    %cst = arith.constant dense<0.000000e+00> : vector<8x1024xf32>
    %21 = tpu.matmul %18, %20, %cst {dimension_numbers = #tpu.dot_dimension_numbers<[1], [0], [0], [1], [0, 0, 1, 1], [], []>} : vector<8x384xbf16>, vector<384x1024xbf16>, vector<8x1024xf32> -> vector<8x1024xf32>
    %c0_23 = arith.constant 0 : index
    %c0_24 = arith.constant 0 : index
    %22 = vector.load %arg3[%c0_23, %c0_24] : memref<1x2048xf32, #tpu.memory_space<vmem>>, vector<1x1024xf32>
    %23 = vector.broadcast %22 : vector<1x1024xf32> to vector<8x1024xf32>
    %24 = arith.addf %21, %23 : vector<8x1024xf32>
    %cst_25 = arith.constant 0.000000e+00 : f32
    %25 = vector.broadcast %cst_25 : f32 to vector<8x1024xf32>
    %26 = arith.cmpf oge, %24, %25 : vector<8x1024xf32>
    %cst_26 = arith.constant 3.000000e-01 : f32
    %27 = vector.broadcast %cst_26 : f32 to vector<8x1024xf32>
    %28 = arith.mulf %27, %24 : vector<8x1024xf32>
    %29 = arith.select %26, %24, %28 : vector<8x1024xi1>, vector<8x1024xf32>
    %c0_27 = arith.constant 0 : index
    %c0_28 = arith.constant 0 : index
    %30 = vector.load %arg9[%c0_27, %c0_28] : memref<8x2048xf32, #tpu.memory_space<vmem>>, vector<8x1024xf32>
    tpu.vector_store %arg9[%c0_27, %c0_28], %29 {strides = array<i32>} : memref<8x2048xf32, #tpu.memory_space<vmem>>, vector<8x1024xf32>,
    %c2_i32 = arith.constant 2 : i32
    %31 = tpu.memref_slice %arg14[%c2_i32] : memref<4x!tpu.dma_semaphore, #tpu.memory_space<semaphore_mem>> -> memref<1x!tpu.dma_semaphore, #tpu.memory_space<semaphore_mem>>
    %32 = tpu.memref_squeeze %31 : memref<1x!tpu.dma_semaphore, #tpu.memory_space<semaphore_mem>> -> memref<!tpu.dma_semaphore, #tpu.memory_space<semaphore_mem>>
    tpu.enqueue_dma source(%arg4 : memref<2048x1024xbf16, #tpu.memory_space<any>>) target(%arg12 : memref<2048x1024xbf16, #tpu.memory_space<vmem>>) target_semaphore(%32 : memref<!tpu.dma_semaphore, #tpu.memory_space<semaphore_mem>>)
    %c3_i32 = arith.constant 3 : i32
    %33 = tpu.memref_slice %arg14[%c3_i32] : memref<4x!tpu.dma_semaphore, #tpu.memory_space<semaphore_mem>> -> memref<1x!tpu.dma_semaphore, #tpu.memory_space<semaphore_mem>>
    %34 = tpu.memref_squeeze %33 : memref<1x!tpu.dma_semaphore, #tpu.memory_space<semaphore_mem>> -> memref<!tpu.dma_semaphore, #tpu.memory_space<semaphore_mem>>
    tpu.enqueue_dma source(%arg6 : memref<1024x512xbf16, #tpu.memory_space<any>>) target(%arg13 : memref<1024x512xbf16, #tpu.memory_space<vmem>>) target_semaphore(%34 : memref<!tpu.dma_semaphore, #tpu.memory_space<semaphore_mem>>)
    %c1_i32_29 = arith.constant 1 : i32
    %c1_i32_30 = arith.constant 1 : i32
    %c1_i32_31 = arith.constant 1 : i32
    %c0_i32_32 = arith.constant 0 : i32
    %c0_i32_33 = arith.constant 0 : i32
    %35 = tpu.memref_slice %arg2[%c1_i32_29, %c0_i32_32, %c0_i32_33] : memref<2x384x1024xbf16, #tpu.memory_space<any>> -> memref<1x384x1024xbf16, #tpu.memory_space<any>>
    %36 = tpu.memref_squeeze %35 : memref<1x384x1024xbf16, #tpu.memory_space<any>> -> memref<384x1024xbf16, #tpu.memory_space<any>>
    %c0_i32_34 = arith.constant 0 : i32
    %c0_i32_35 = arith.constant 0 : i32
    %37 = tpu.memref_slice %arg11[%c1_i32_30, %c0_i32_34, %c0_i32_35] : memref<2x384x1024xbf16, #tpu.memory_space<vmem>> -> memref<1x384x1024xbf16, #tpu.memory_space<vmem>>
    %38 = tpu.memref_squeeze %37 : memref<1x384x1024xbf16, #tpu.memory_space<vmem>> -> memref<384x1024xbf16, #tpu.memory_space<vmem>>
    %39 = tpu.memref_slice %arg14[%c1_i32_31] : memref<4x!tpu.dma_semaphore, #tpu.memory_space<semaphore_mem>> -> memref<1x!tpu.dma_semaphore, #tpu.memory_space<semaphore_mem>>
    %40 = tpu.memref_squeeze %39 : memref<1x!tpu.dma_semaphore, #tpu.memory_space<semaphore_mem>> -> memref<!tpu.dma_semaphore, #tpu.memory_space<semaphore_mem>>
    tpu.wait_dma2 semaphore(%40 : memref<!tpu.dma_semaphore, #tpu.memory_space<semaphore_mem>>) src(%36 : memref<384x1024xbf16, #tpu.memory_space<any>>) dst(%38 : memref<384x1024xbf16, #tpu.memory_space<vmem>>)
    %c0_36 = arith.constant 0 : index
    %c0_37 = arith.constant 0 : index
    %41 = vector.load %arg1[%c0_36, %c0_37] : memref<8x384xbf16, #tpu.memory_space<vmem>>, vector<8x384xbf16>
    %c1 = arith.constant 1 : index
    %c0_38 = arith.constant 0 : index
    %c0_39 = arith.constant 0 : index
    %42 = vector.load %arg11[%c1, %c0_38, %c0_39] : memref<2x384x1024xbf16, #tpu.memory_space<vmem>>, vector<1x384x1024xbf16>
    %43 = vector.shape_cast %42 : vector<1x384x1024xbf16> to vector<384x1024xbf16>
    %cst_40 = arith.constant dense<0.000000e+00> : vector<8x1024xf32>
    %44 = tpu.matmul %41, %43, %cst_40 {dimension_numbers = #tpu.dot_dimension_numbers<[1], [0], [0], [1], [0, 0, 1, 1], [], []>} : vector<8x384xbf16>, vector<384x1024xbf16>, vector<8x1024xf32> -> vector<8x1024xf32>
    %c0_41 = arith.constant 0 : index
    %c1024 = arith.constant 1024 : index
    %45 = vector.load %arg3[%c0_41, %c1024] : memref<1x2048xf32, #tpu.memory_space<vmem>>, vector<1x1024xf32>
    %46 = vector.broadcast %45 : vector<1x1024xf32> to vector<8x1024xf32>
    %47 = arith.addf %44, %46 : vector<8x1024xf32>
    %cst_42 = arith.constant 0.000000e+00 : f32
    %48 = vector.broadcast %cst_42 : f32 to vector<8x1024xf32>
    %49 = arith.cmpf oge, %47, %48 : vector<8x1024xf32>
    %cst_43 = arith.constant 3.000000e-01 : f32
    %50 = vector.broadcast %cst_43 : f32 to vector<8x1024xf32>
    %51 = arith.mulf %50, %47 : vector<8x1024xf32>
    %52 = arith.select %49, %47, %51 : vector<8x1024xi1>, vector<8x1024xf32>
    %c0_44 = arith.constant 0 : index
    %c1024_45 = arith.constant 1024 : index
    %53 = vector.load %arg9[%c0_44, %c1024_45] : memref<8x2048xf32, #tpu.memory_space<vmem>>, vector<8x1024xf32>
    tpu.vector_store %arg9[%c0_44, %c1024_45], %52 {strides = array<i32>} : memref<8x2048xf32, #tpu.memory_space<vmem>>, vector<8x1024xf32>,
    %c2_i32_46 = arith.constant 2 : i32
    %54 = tpu.memref_slice %arg14[%c2_i32_46] : memref<4x!tpu.dma_semaphore, #tpu.memory_space<semaphore_mem>> -> memref<1x!tpu.dma_semaphore, #tpu.memory_space<semaphore_mem>>
    %55 = tpu.memref_squeeze %54 : memref<1x!tpu.dma_semaphore, #tpu.memory_space<semaphore_mem>> -> memref<!tpu.dma_semaphore, #tpu.memory_space<semaphore_mem>>
    tpu.wait_dma2 semaphore(%55 : memref<!tpu.dma_semaphore, #tpu.memory_space<semaphore_mem>>) src(%arg4 : memref<2048x1024xbf16, #tpu.memory_space<any>>) dst(%arg12 : memref<2048x1024xbf16, #tpu.memory_space<vmem>>)
    %c0_47 = arith.constant 0 : index
    %c0_48 = arith.constant 0 : index
    %56 = vector.load %arg9[%c0_47, %c0_48] : memref<8x2048xf32, #tpu.memory_space<vmem>>, vector<8x2048xf32>
    %57 = arith.truncf %56 : vector<8x2048xf32> to vector<8x2048xbf16>
    %c0_49 = arith.constant 0 : index
    %c0_50 = arith.constant 0 : index
    %58 = vector.load %arg12[%c0_49, %c0_50] : memref<2048x1024xbf16, #tpu.memory_space<vmem>>, vector<2048x1024xbf16>
    %cst_51 = arith.constant dense<0.000000e+00> : vector<8x1024xf32>
    %59 = tpu.matmul %57, %58, %cst_51 {dimension_numbers = #tpu.dot_dimension_numbers<[1], [0], [0], [1], [0, 0, 1, 1], [], []>} : vector<8x2048xbf16>, vector<2048x1024xbf16>, vector<8x1024xf32> -> vector<8x1024xf32>
    %c0_52 = arith.constant 0 : index
    %c0_53 = arith.constant 0 : index
    %60 = vector.load %arg5[%c0_52, %c0_53] : memref<1x1024xf32, #tpu.memory_space<vmem>>, vector<1x1024xf32>
    %61 = vector.broadcast %60 : vector<1x1024xf32> to vector<8x1024xf32>
    %62 = arith.addf %59, %61 : vector<8x1024xf32>
    %cst_54 = arith.constant 0.000000e+00 : f32
    %63 = vector.broadcast %cst_54 : f32 to vector<8x1024xf32>
    %64 = arith.cmpf oge, %62, %63 : vector<8x1024xf32>
    %cst_55 = arith.constant 1.500000e-01 : f32
    %65 = vector.broadcast %cst_55 : f32 to vector<8x1024xf32>
    %66 = arith.mulf %65, %62 : vector<8x1024xf32>
    %67 = arith.select %64, %62, %66 : vector<8x1024xi1>, vector<8x1024xf32>
    %c0_56 = arith.constant 0 : index
    %c0_57 = arith.constant 0 : index
    %68 = vector.load %arg10[%c0_56, %c0_57] : memref<8x1024xf32, #tpu.memory_space<vmem>>, vector<8x1024xf32>
    tpu.vector_store %arg10[%c0_56, %c0_57], %67 {strides = array<i32>} : memref<8x1024xf32, #tpu.memory_space<vmem>>, vector<8x1024xf32>,
    %c3_i32_58 = arith.constant 3 : i32
    %69 = tpu.memref_slice %arg14[%c3_i32_58] : memref<4x!tpu.dma_semaphore, #tpu.memory_space<semaphore_mem>> -> memref<1x!tpu.dma_semaphore, #tpu.memory_space<semaphore_mem>>
    %70 = tpu.memref_squeeze %69 : memref<1x!tpu.dma_semaphore, #tpu.memory_space<semaphore_mem>> -> memref<!tpu.dma_semaphore, #tpu.memory_space<semaphore_mem>>
    tpu.wait_dma2 semaphore(%70 : memref<!tpu.dma_semaphore, #tpu.memory_space<semaphore_mem>>) src(%arg6 : memref<1024x512xbf16, #tpu.memory_space<any>>) dst(%arg13 : memref<1024x512xbf16, #tpu.memory_space<vmem>>)
    %c0_59 = arith.constant 0 : index
    %c0_60 = arith.constant 0 : index
    %71 = vector.load %arg10[%c0_59, %c0_60] : memref<8x1024xf32, #tpu.memory_space<vmem>>, vector<8x1024xf32>
    %72 = arith.truncf %71 : vector<8x1024xf32> to vector<8x1024xbf16>
    %c0_61 = arith.constant 0 : index
    %c0_62 = arith.constant 0 : index
    %73 = vector.load %arg13[%c0_61, %c0_62] : memref<1024x512xbf16, #tpu.memory_space<vmem>>, vector<1024x512xbf16>
    %cst_63 = arith.constant dense<0.000000e+00> : vector<8x512xf32>
    %74 = tpu.matmul %72, %73, %cst_63 {dimension_numbers = #tpu.dot_dimension_numbers<[1], [0], [0], [1], [0, 0, 1, 1], [], []>} : vector<8x1024xbf16>, vector<1024x512xbf16>, vector<8x512xf32> -> vector<8x512xf32>
    %c0_64 = arith.constant 0 : index
    %c0_65 = arith.constant 0 : index
    %75 = vector.load %arg7[%c0_64, %c0_65] : memref<1x512xf32, #tpu.memory_space<vmem>>, vector<1x512xf32>
    %76 = vector.broadcast %75 : vector<1x512xf32> to vector<8x512xf32>
    %77 = arith.addf %74, %76 : vector<8x512xf32>
    %c0_66 = arith.constant 0 : index
    %c0_67 = arith.constant 0 : index
    %78 = vector.load %arg8[%c0_66, %c0_67] : memref<8x512xf32, #tpu.memory_space<vmem>>, vector<8x512xf32>
    tpu.vector_store %arg8[%c0_66, %c0_67], %77 {strides = array<i32>} : memref<8x512xf32, #tpu.memory_space<vmem>>, vector<8x512xf32>,
    return
  }
  func.func @transform_0(%arg0: i32) -> (i32, i32) {
    %c0_i32 = arith.constant 0 : i32
    %c0_i32_0 = arith.constant 0 : i32
    %c0_i32_1 = arith.constant 0 : i32
    return %c0_i32, %c0_i32_0 : i32, i32
  }
  func.func @transform_2(%arg0: i32) -> (i32, i32) {
    %c0_i32 = arith.constant 0 : i32
    %c0_i32_0 = arith.constant 0 : i32
    %c0_i32_1 = arith.constant 0 : i32
    return %c0_i32, %c0_i32_0 : i32, i32
  }
  func.func @transform_4(%arg0: i32) -> (i32, i32) {
    %c0_i32 = arith.constant 0 : i32
    %c0_i32_0 = arith.constant 0 : i32
    %c0_i32_1 = arith.constant 0 : i32
    return %c0_i32, %c0_i32_0 : i32, i32
  }
  func.func @transform_6(%arg0: i32) -> (i32, i32) {
    %c0_i32 = arith.constant 0 : i32
    %c0_i32_0 = arith.constant 0 : i32
    %c0_i32_1 = arith.constant 0 : i32
    return %c0_i32, %c0_i32_0 : i32, i32
  }
  func.func @transform_7(%arg0: i32) -> (i32, i32) {
    %c0_i32 = arith.constant 0 : i32
    %c0_i32_0 = arith.constant 0 : i32
    %c0_i32_1 = arith.constant 0 : i32
    return %c0_i32, %c0_i32_0 : i32, i32
  }
}

</mosaic_0001>

<llo_original>
// kernel: embedding_net_forward.1
$region0: #{embedding_net_forward.1}
  #allocation0 [shape = 'u32[]', space=smem, size = 0x4, offset = 0x4, fixed_abs, tag = 'smem constant byte address 0x4 - core index']
  #allocation1 [shape = 'u32[144,128]{1,0:T(1,128)}', space=vmem, size = 0x12000, scoped, tag = 'internal scratch']
  #allocation2 [shape = 'f32[8,2048]{1,0:T(8,128)}', space=vmem, size = 0x10000, scoped, tag = 'scratch operand']
  #allocation3 [shape = 'f32[8,1024]{1,0:T(8,128)}', space=vmem, size = 0x8000, scoped, tag = 'scratch operand']
  #allocation4 [shape = 'bf16[2,384,1024]{2,1,0:T(16,128)(2,1)}', space=vmem, size = 0x180000, scoped, tag = 'scratch operand']
  #allocation5 [shape = 'bf16[2048,1024]{1,0:T(16,128)(2,1)}', space=vmem, size = 0x400000, scoped, tag = 'scratch operand']
  #allocation6 [shape = 'bf16[1024,512]{1,0:T(16,128)(2,1)}', space=vmem, size = 0x100000, scoped, tag = 'scratch operand']
  #allocation7 [shape = 's32[4]{0}', space=sflag, size = 0x10, scoped, tag = 'scratch operand']
  #allocation15 [shape = 's32[]', space=sflag, size = 0x4, offset = 0, fixed_abs, tag = 'sflag constant byte address 0x0 - dummy sync flag']
  #allocation17 [shape = 's32[]', space=sflag, size = 0x4, offset = 0, fixed_abs, tag = 'sflag constant byte address 0x0 - dummy sync flag']
  #allocation19 [shape = 's32[]', space=sflag, size = 0x4, offset = 0, fixed_abs, tag = 'sflag constant byte address 0x0 - dummy sync flag']
  #allocation21 [shape = 's32[]', space=sflag, size = 0x4, offset = 0, fixed_abs, tag = 'sflag constant byte address 0x0 - dummy sync flag']
  %s0 = inlined_call_operand.vmem [shape: bf16[8,384], index: 0, kind: input, shape index: {}]
  %s1 = inlined_call_operand.hbm [shape: bf16[2,384,1024], index: 1, kind: input, shape index: {}]
  %s2 = inlined_call_operand.hbm [shape: f32[1,2048], index: 2, kind: input, shape index: {}]
  %s3 = inlined_call_operand.hbm [shape: bf16[2048,1024], index: 3, kind: input, shape index: {}]
  %s4 = inlined_call_operand.hbm [shape: f32[1,1024], index: 4, kind: input, shape index: {}]
  %s5 = inlined_call_operand.hbm [shape: bf16[1024,512], index: 5, kind: input, shape index: {}]
  %s6 = inlined_call_operand.hbm [shape: f32[1,512], index: 6, kind: input, shape index: {}]
  %s7 = inlined_call_operand.hbm [shape: f32[8,512], index: 7, kind: output, shape index: {}]
  %s8 = sld [smem:[#allocation0]]
  $region38: #{embedding_net_forward.1} parent=0
    _
  %s10 = ssub.s32 1, %s8
  %s11 = scalar_select 0, %s10, %s8
  $region1: #{embedding_net_forward.1} parent=0
    #allocation8 [shape = 'u8[8192]{0}', space=vmem, size = 0x2000, scoped, tag = 'input window, operand 2, single buffered']
    #allocation9 [shape = 's32[1]{0}', space=sflag, size = 0x4, scoped, tag = 'scoped memory for embedding_net_forward.1']
    #allocation10 [shape = 's32[1]{0}', space=sflag, size = 0x4, scoped, tag = 'scoped memory for embedding_net_forward.1']
    #allocation11 [shape = 'u8[4096]{0}', space=vmem, size = 0x1000, scoped, tag = 'input window, operand 4, single buffered']
    #allocation12 [shape = 's32[1]{0}', space=sflag, size = 0x4, scoped, tag = 'scoped memory for embedding_net_forward.1']
    #allocation13 [shape = 'u8[2048]{0}', space=vmem, size = 0x800, scoped, tag = 'input window, operand 6, single buffered']
    #allocation14 [shape = 'u8[16384]{0}', space=vmem, size = 0x4000, scoped, tag = 'output window, operand 0, single buffered']
    #allocation16 [shape = 'u32[9]{0}', space=smem, size = 0x24, scoped, tag = 'DMA stride descriptor']
    #allocation18 [shape = 'u32[9]{0}', space=smem, size = 0x24, scoped, tag = 'DMA stride descriptor']
    #allocation20 [shape = 'u32[9]{0}', space=smem, size = 0x24, scoped, tag = 'DMA stride descriptor']
    #allocation22 [shape = 'u32[9]{0}', space=smem, size = 0x24, scoped, tag = 'DMA stride descriptor']
    %12 = vsyncpa [#allocation9], 0
    %13 = vsyncpa [#allocation12], 0
    %14 = vsyncpa [#allocation10], 0
    // Predicated region
    $region2: #{embedding_net_forward.1} parent=1 // pred_check
      _
    $region3: #{embedding_net_forward.1} parent=1 // pred_check_branch
      %16 = sbr.rel (0) target = $region5
    $region4: #{embedding_net_forward.1} parent=1 // pred_region
      _
    $region5: #{embedding_net_forward.1} parent=1 // pred_fallthru
      _
    // Predicated region
    $region6: #{embedding_net_forward.1} parent=1 // pred_check
      _
    $region7: #{embedding_net_forward.1} parent=1 // pred_check_branch
      %18 = sbr.rel (0) target = $region9
    $region8: #{embedding_net_forward.1} parent=1 // pred_region
      %s20 = ssub.s32 256, 256
      %21 = vsyncadd [#allocation9], %s20
      %s23 = sshll.u32 [#allocation8], 4
      %s24 = int_to_ptr.vmem [resolvable:$true] %s23
      %26 = dma.hbm_to_vmem [thread:$0]  %s2, 256, %s24, [#allocation9]
    $region9: #{embedding_net_forward.1} parent=1 // pred_fallthru
      _
    // Predicated region
    $region10: #{embedding_net_forward.1} parent=1 // pred_check
      _
    $region11: #{embedding_net_forward.1} parent=1 // pred_check_branch
      %28 = sbr.rel (0) target = $region13
    $region12: #{embedding_net_forward.1} parent=1 // pred_region
      %s30 = ssub.s32 128, 128
      %31 = vsyncadd [#allocation12], %s30
      %s33 = sshll.u32 [#allocation11], 4
      %s34 = int_to_ptr.vmem [resolvable:$true] %s33
      %36 = dma.hbm_to_vmem [thread:$0]  %s4, 128, %s34, [#allocation12]
    $region13: #{embedding_net_forward.1} parent=1 // pred_fallthru
      _
    // Predicated region
    $region14: #{embedding_net_forward.1} parent=1 // pred_check
      _
    $region15: #{embedding_net_forward.1} parent=1 // pred_check_branch
      %38 = sbr.rel (0) target = $region17
    $region16: #{embedding_net_forward.1} parent=1 // pred_region
      %s40 = ssub.s32 64, 64
      %41 = vsyncadd [#allocation12], %s40
      %s43 = sshll.u32 [#allocation13], 4
      %s44 = int_to_ptr.vmem [resolvable:$true] %s43
      %46 = dma.hbm_to_vmem [thread:$0]  %s6, 64, %s44, [#allocation12]
    $region17: #{embedding_net_forward.1} parent=1 // pred_fallthru
      _
    // Predicated region
    $region18: #{embedding_net_forward.1} parent=1 // pred_check
      _
    $region19: #{embedding_net_forward.1} parent=1 // pred_check_branch
      %48 = sbr.rel (0) target = $region21
    $region20: #{embedding_net_forward.1} parent=1 // pred_region
      %49 = dma.done [#allocation9], 256
    $region21: #{embedding_net_forward.1} parent=1 // pred_fallthru
      _
    // Predicated region
    $region22: #{embedding_net_forward.1} parent=1 // pred_check
      _
    $region23: #{embedding_net_forward.1} parent=1 // pred_check_branch
      %51 = sbr.rel (0) target = $region25
    $region24: #{embedding_net_forward.1} parent=1 // pred_region
      %52 = dma.done [#allocation12], 128
    $region25: #{embedding_net_forward.1} parent=1 // pred_fallthru
      _
    // Predicated region
    $region26: #{embedding_net_forward.1} parent=1 // pred_check
      _
    $region27: #{embedding_net_forward.1} parent=1 // pred_check_branch
      %54 = sbr.rel (0) target = $region29
    $region28: #{embedding_net_forward.1} parent=1 // pred_region
      %55 = dma.done [#allocation12], 64
    $region29: #{embedding_net_forward.1} parent=1 // pred_fallthru
      _
    %s58 = sshll.u32 1, 14
    %s59 = sxor.u32 4294967295, %s58
    %s61 = sld [smem:[#allocation0]]
    %s62 = sadd.s32 2, %s61
    %s64 = sshll.u32 7, 26
    %s65 = sxor.u32 4294967295, %s64
    %s66 = sand.u32 0, %s65
    %s67 = sshll.u32 %s62, 26
    %s68 = sor.u32 %s66, %s67
    %s69 = sshll.u32 [#allocation4], 4
    %s70 = int_to_ptr.vmem [resolvable:$true] %s69
    %73 = sst [smem:[#allocation16]] 1024
    %s74 = scalar_lea.smem [#allocation16], 1
    %75 = sst [smem:[%s74]] 1024
    %s76 = scalar_lea.smem [#allocation16], 2
    %77 = sst [smem:[%s76]] 8
    %s78 = scalar_lea.smem [#allocation16], 3
    %79 = sst [smem:[%s78]] 64
    %s80 = scalar_lea.smem [#allocation16], 4
    %81 = sst [smem:[%s80]] 128
    %s82 = scalar_lea.smem [#allocation16], 5
    %83 = sst [smem:[%s82]] 2
    %s84 = scalar_lea.smem [#allocation16], 6
    %85 = sst [smem:[%s84]] 512
    %s86 = scalar_lea.smem [#allocation16], 7
    %87 = sst [smem:[%s86]] 64
    %s88 = scalar_lea.smem [#allocation16], 8
    %89 = sst [smem:[%s88]] 4
    %91 = dma.general %s1, 24576, %s70, [#allocation7], [#allocation15], [#allocation16], %s68, 0
    %s92 = scalar_lea.hbm %s1, 24576
    %s93 = scalar_lea.vmem [#allocation4], 1536
    %s94 = scalar_lea.sflag [#allocation7], 1
    %s96 = sshll.u32 1, 14
    %s97 = sxor.u32 4294967295, %s96
    %s99 = sadd.s32 2, %s61
    %s101 = sshll.u32 7, 26
    %s102 = sxor.u32 4294967295, %s101
    %s103 = sand.u32 0, %s102
    %s104 = sshll.u32 %s99, 26
    %s105 = sor.u32 %s103, %s104
    %s106 = sshll.u32 %s93, 4
    %s107 = int_to_ptr.vmem [resolvable:$true] %s106
    %110 = sst [smem:[#allocation18]] 1024
    %s111 = scalar_lea.smem [#allocation18], 1
    %112 = sst [smem:[%s111]] 1024
    %s113 = scalar_lea.smem [#allocation18], 2
    %114 = sst [smem:[%s113]] 8
    %s115 = scalar_lea.smem [#allocation18], 3
    %116 = sst [smem:[%s115]] 64
    %s117 = scalar_lea.smem [#allocation18], 4
    %118 = sst [smem:[%s117]] 128
    %s119 = scalar_lea.smem [#allocation18], 5
    %120 = sst [smem:[%s119]] 2
    %s121 = scalar_lea.smem [#allocation18], 6
    %122 = sst [smem:[%s121]] 512
    %s123 = scalar_lea.smem [#allocation18], 7
    %124 = sst [smem:[%s123]] 64
    %s125 = scalar_lea.smem [#allocation18], 8
    %126 = sst [smem:[%s125]] 4
    %128 = dma.general %s92, 24576, %s107, %s94, [#allocation17], [#allocation18], %s105, 0
    %s129 = smul.u32 4, 48
    %s130 = smul.u32 %s129, 8
    %s131 = sshll.u32 %s130, 4
    %132 = dma.done [#allocation7], %s131
    %v133 = vld [vmem:[%s0] sm:$0xff]
    %v134 = vld [vmem:[%s0 + $0x8] sm:$0xf]
    %v135 = vld [vmem:[#allocation4] sm:$0xff]
    %v136 = vld [vmem:[#allocation4 + $0x8] sm:$0xff]
    %v137 = vld [vmem:[#allocation4 + $0x10] sm:$0xff]
    %v138 = vld [vmem:[#allocation4 + $0x18] sm:$0xff]
    %v139 = vld [vmem:[#allocation4 + $0x20] sm:$0xff]
    %v140 = vld [vmem:[#allocation4 + $0x28] sm:$0xff]
    %v141 = vld [vmem:[#allocation4 + $0x30] sm:$0xff]
    %v142 = vld [vmem:[#allocation4 + $0x38] sm:$0xff]
    %v143 = vld [vmem:[#allocation4 + $0x40] sm:$0xff]
    %v144 = vld [vmem:[#allocation4 + $0x48] sm:$0xff]
    %v145 = vld [vmem:[#allocation4 + $0x50] sm:$0xff]
    %v146 = vld [vmem:[#allocation4 + $0x58] sm:$0xff]
    %v147 = vld [vmem:[#allocation4 + $0x60] sm:$0xff]
    %v148 = vld [vmem:[#allocation4 + $0x68] sm:$0xff]
    %v149 = vld [vmem:[#allocation4 + $0x70] sm:$0xff]
    %v150 = vld [vmem:[#allocation4 + $0x78] sm:$0xff]
    %v151 = vld [vmem:[#allocation4 + $0x80] sm:$0xff]
    %v152 = vld [vmem:[#allocation4 + $0x88] sm:$0xff]
    %v153 = vld [vmem:[#allocation4 + $0x90] sm:$0xff]
    %v154 = vld [vmem:[#allocation4 + $0x98] sm:$0xff]
    %v155 = vld [vmem:[#allocation4 + $0xa0] sm:$0xff]
    %v156 = vld [vmem:[#allocation4 + $0xa8] sm:$0xff]
    %v157 = vld [vmem:[#allocation4 + $0xb0] sm:$0xff]
    %v158 = vld [vmem:[#allocation4 + $0xb8] sm:$0xff]
    %v159 = vld [vmem:[#allocation4 + $0xc0] sm:$0xff]
    %v160 = vld [vmem:[#allocation4 + $0xc8] sm:$0xff]
    %v161 = vld [vmem:[#allocation4 + $0xd0] sm:$0xff]
    %v162 = vld [vmem:[#allocation4 + $0xd8] sm:$0xff]
    %v163 = vld [vmem:[#allocation4 + $0xe0] sm:$0xff]
    %v164 = vld [vmem:[#allocation4 + $0xe8] sm:$0xff]
    %v165 = vld [vmem:[#allocation4 + $0xf0] sm:$0xff]
    %v166 = vld [vmem:[#allocation4 + $0xf8] sm:$0xff]
    %v167 = vld [vmem:[#allocation4 + $0x100] sm:$0xff]
    %v168 = vld [vmem:[#allocation4 + $0x108] sm:$0xff]
    %v169 = vld [vmem:[#allocation4 + $0x110] sm:$0xff]
    %v170 = vld [vmem:[#allocation4 + $0x118] sm:$0xff]
    %v171 = vld [vmem:[#allocation4 + $0x120] sm:$0xff]
    %v172 = vld [vmem:[#allocation4 + $0x128] sm:$0xff]
    %v173 = vld [vmem:[#allocation4 + $0x130] sm:$0xff]
    %v174 = vld [vmem:[#allocation4 + $0x138] sm:$0xff]
    %v175 = vld [vmem:[#allocation4 + $0x140] sm:$0xff]
    %v176 = vld [vmem:[#allocation4 + $0x148] sm:$0xff]
    %v177 = vld [vmem:[#allocation4 + $0x150] sm:$0xff]
    %v178 = vld [vmem:[#allocation4 + $0x158] sm:$0xff]
    %v179 = vld [vmem:[#allocation4 + $0x160] sm:$0xff]
    %v180 = vld [vmem:[#allocation4 + $0x168] sm:$0xff]
    %v181 = vld [vmem:[#allocation4 + $0x170] sm:$0xff]
    %v182 = vld [vmem:[#allocation4 + $0x178] sm:$0xff]
    %v183 = vld [vmem:[#allocation4 + $0x180] sm:$0xff]
    %v184 = vld [vmem:[#allocation4 + $0x188] sm:$0xff]
    %v185 = vld [vmem:[#allocation4 + $0x190] sm:$0xff]
    %v186 = vld [vmem:[#allocation4 + $0x198] sm:$0xff]
    %v187 = vld [vmem:[#allocation4 + $0x1a0] sm:$0xff]
    %v188 = vld [vmem:[#allocation4 + $0x1a8] sm:$0xff]
    %v189 = vld [vmem:[#allocation4 + $0x1b0] sm:$0xff]
    %v190 = vld [vmem:[#allocation4 + $0x1b8] sm:$0xff]
    %v191 = vld [vmem:[#allocation4 + $0x1c0] sm:$0xff]
    %v192 = vld [vmem:[#allocation4 + $0x1c8] sm:$0xff]
    %v193 = vld [vmem:[#allocation4 + $0x1d0] sm:$0xff]
    %v194 = vld [vmem:[#allocation4 + $0x1d8] sm:$0xff]
    %v195 = vld [vmem:[#allocation4 + $0x1e0] sm:$0xff]
    %v196 = vld [vmem:[#allocation4 + $0x1e8] sm:$0xff]
    %v197 = vld [vmem:[#allocation4 + $0x1f0] sm:$0xff]
    %v198 = vld [vmem:[#allocation4 + $0x1f8] sm:$0xff]
    %v199 = vld [vmem:[#allocation4 + $0x200] sm:$0xff]
    %v200 = vld [vmem:[#allocation4 + $0x208] sm:$0xff]
    %v201 = vld [vmem:[#allocation4 + $0x210] sm:$0xff]
    %v202 = vld [vmem:[#allocation4 + $0x218] sm:$0xff]
    %v203 = vld [vmem:[#allocation4 + $0x220] sm:$0xff]
    %v204 = vld [vmem:[#allocation4 + $0x228] sm:$0xff]
    %v205 = vld [vmem:[#allocation4 + $0x230] sm:$0xff]
    %v206 = vld [vmem:[#allocation4 + $0x238] sm:$0xff]
    %v207 = vld [vmem:[#allocation4 + $0x240] sm:$0xff]
    %v208 = vld [vmem:[#allocation4 + $0x248] sm:$0xff]
    %v209 = vld [vmem:[#allocation4 + $0x250] sm:$0xff]
    %v210 = vld [vmem:[#allocation4 + $0x258] sm:$0xff]
    %v211 = vld [vmem:[#allocation4 + $0x260] sm:$0xff]
    %v212 = vld [vmem:[#allocation4 + $0x268] sm:$0xff]
    %v213 = vld [vmem:[#allocation4 + $0x270] sm:$0xff]
    %v214 = vld [vmem:[#allocation4 + $0x278] sm:$0xff]
    %v215 = vld [vmem:[#allocation4 + $0x280] sm:$0xff]
    %v216 = vld [vmem:[#allocation4 + $0x288] sm:$0xff]
    %v217 = vld [vmem:[#allocation4 + $0x290] sm:$0xff]
    %v218 = vld [vmem:[#allocation4 + $0x298] sm:$0xff]
    %v219 = vld [vmem:[#allocation4 + $0x2a0] sm:$0xff]
    %v220 = vld [vmem:[#allocation4 + $0x2a8] sm:$0xff]
    %v221 = vld [vmem:[#allocation4 + $0x2b0] sm:$0xff]
    %v222 = vld [vmem:[#allocation4 + $0x2b8] sm:$0xff]
    %v223 = vld [vmem:[#allocation4 + $0x2c0] sm:$0xff]
    %v224 = vld [vmem:[#allocation4 + $0x2c8] sm:$0xff]
    %v225 = vld [vmem:[#allocation4 + $0x2d0] sm:$0xff]
    %v226 = vld [vmem:[#allocation4 + $0x2d8] sm:$0xff]
    %v227 = vld [vmem:[#allocation4 + $0x2e0] sm:$0xff]
    %v228 = vld [vmem:[#allocation4 + $0x2e8] sm:$0xff]
    %v229 = vld [vmem:[#allocation4 + $0x2f0] sm:$0xff]
    %v230 = vld [vmem:[#allocation4 + $0x2f8] sm:$0xff]
    %v231 = vld [vmem:[#allocation4 + $0x300] sm:$0xff]
    %v232 = vld [vmem:[#allocation4 + $0x308] sm:$0xff]
    %v233 = vld [vmem:[#allocation4 + $0x310] sm:$0xff]
    %v234 = vld [vmem:[#allocation4 + $0x318] sm:$0xff]
    %v235 = vld [vmem:[#allocation4 + $0x320] sm:$0xff]
    %v236 = vld [vmem:[#allocation4 + $0x328] sm:$0xff]
    %v237 = vld [vmem:[#allocation4 + $0x330] sm:$0xff]
    %v238 = vld [vmem:[#allocation4 + $0x338] sm:$0xff]
    %v239 = vld [vmem:[#allocation4 + $0x340] sm:$0xff]
    %v240 = vld [vmem:[#allocation4 + $0x348] sm:$0xff]
    %v241 = vld [vmem:[#allocation4 + $0x350] sm:$0xff]
    %v242 = vld [vmem:[#allocation4 + $0x358] sm:$0xff]
    %v243 = vld [vmem:[#allocation4 + $0x360] sm:$0xff]
    %v244 = vld [vmem:[#allocation4 + $0x368] sm:$0xff]
    %v245 = vld [vmem:[#allocation4 + $0x370] sm:$0xff]
    %v246 = vld [vmem:[#allocation4 + $0x378] sm:$0xff]
    %v247 = vld [vmem:[#allocation4 + $0x380] sm:$0xff]
    %v248 = vld [vmem:[#allocation4 + $0x388] sm:$0xff]
    %v249 = vld [vmem:[#allocation4 + $0x390] sm:$0xff]
    %v250 = vld [vmem:[#allocation4 + $0x398] sm:$0xff]
    %v251 = vld [vmem:[#allocation4 + $0x3a0] sm:$0xff]
    %v252 = vld [vmem:[#allocation4 + $0x3a8] sm:$0xff]
    %v253 = vld [vmem:[#allocation4 + $0x3b0] sm:$0xff]
    %v254 = vld [vmem:[#allocation4 + $0x3b8] sm:$0xff]
    %v255 = vld [vmem:[#allocation4 + $0x3c0] sm:$0xff]
    %v256 = vld [vmem:[#allocation4 + $0x3c8] sm:$0xff]
    %v257 = vld [vmem:[#allocation4 + $0x3d0] sm:$0xff]
    %v258 = vld [vmem:[#allocation4 + $0x3d8] sm:$0xff]
    %v259 = vld [vmem:[#allocation4 + $0x3e0] sm:$0xff]
    %v260 = vld [vmem:[#allocation4 + $0x3e8] sm:$0xff]
    %v261 = vld [vmem:[#allocation4 + $0x3f0] sm:$0xff]
    %v262 = vld [vmem:[#allocation4 + $0x3f8] sm:$0xff]
    %v263 = vld [vmem:[#allocation4 + $0x400] sm:$0xff]
    %v264 = vld [vmem:[#allocation4 + $0x408] sm:$0xff]
    %v265 = vld [vmem:[#allocation4 + $0x410] sm:$0xff]
    %v266 = vld [vmem:[#allocation4 + $0x418] sm:$0xff]
    %v267 = vld [vmem:[#allocation4 + $0x420] sm:$0xff]
    %v268 = vld [vmem:[#allocation4 + $0x428] sm:$0xff]
    %v269 = vld [vmem:[#allocation4 + $0x430] sm:$0xff]
    %v270 = vld [vmem:[#allocation4 + $0x438] sm:$0xff]
    %v271 = vld [vmem:[#allocation4 + $0x440] sm:$0xff]
    %v272 = vld [vmem:[#allocation4 + $0x448] sm:$0xff]
    %v273 = vld [vmem:[#allocation4 + $0x450] sm:$0xff]
    %v274 = vld [vmem:[#allocation4 + $0x458] sm:$0xff]
    %v275 = vld [vmem:[#allocation4 + $0x460] sm:$0xff]
    %v276 = vld [vmem:[#allocation4 + $0x468] sm:$0xff]
    %v277 = vld [vmem:[#allocation4 + $0x470] sm:$0xff]
    %v278 = vld [vmem:[#allocation4 + $0x478] sm:$0xff]
    %v279 = vld [vmem:[#allocation4 + $0x480] sm:$0xff]
    %v280 = vld [vmem:[#allocation4 + $0x488] sm:$0xff]
    %v281 = vld [vmem:[#allocation4 + $0x490] sm:$0xff]
    %v282 = vld [vmem:[#allocation4 + $0x498] sm:$0xff]
    %v283 = vld [vmem:[#allocation4 + $0x4a0] sm:$0xff]
    %v284 = vld [vmem:[#allocation4 + $0x4a8] sm:$0xff]
    %v285 = vld [vmem:[#allocation4 + $0x4b0] sm:$0xff]
    %v286 = vld [vmem:[#allocation4 + $0x4b8] sm:$0xff]
    %v287 = vld [vmem:[#allocation4 + $0x4c0] sm:$0xff]
    %v288 = vld [vmem:[#allocation4 + $0x4c8] sm:$0xff]
    %v289 = vld [vmem:[#allocation4 + $0x4d0] sm:$0xff]
    %v290 = vld [vmem:[#allocation4 + $0x4d8] sm:$0xff]
    %v291 = vld [vmem:[#allocation4 + $0x4e0] sm:$0xff]
    %v292 = vld [vmem:[#allocation4 + $0x4e8] sm:$0xff]
    %v293 = vld [vmem:[#allocation4 + $0x4f0] sm:$0xff]
    %v294 = vld [vmem:[#allocation4 + $0x4f8] sm:$0xff]
    %v295 = vld [vmem:[#allocation4 + $0x500] sm:$0xff]
    %v296 = vld [vmem:[#allocation4 + $0x508] sm:$0xff]
    %v297 = vld [vmem:[#allocation4 + $0x510] sm:$0xff]
    %v298 = vld [vmem:[#allocation4 + $0x518] sm:$0xff]
    %v299 = vld [vmem:[#allocation4 + $0x520] sm:$0xff]
    %v300 = vld [vmem:[#allocation4 + $0x528] sm:$0xff]
    %v301 = vld [vmem:[#allocation4 + $0x530] sm:$0xff]
    %v302 = vld [vmem:[#allocation4 + $0x538] sm:$0xff]
    %v303 = vld [vmem:[#allocation4 + $0x540] sm:$0xff]
    %v304 = vld [vmem:[#allocation4 + $0x548] sm:$0xff]
    %v305 = vld [vmem:[#allocation4 + $0x550] sm:$0xff]
    %v306 = vld [vmem:[#allocation4 + $0x558] sm:$0xff]
    %v307 = vld [vmem:[#allocation4 + $0x560] sm:$0xff]
    %v308 = vld [vmem:[#allocation4 + $0x568] sm:$0xff]
    %v309 = vld [vmem:[#allocation4 + $0x570] sm:$0xff]
    %v310 = vld [vmem:[#allocation4 + $0x578] sm:$0xff]
    %v311 = vld [vmem:[#allocation4 + $0x580] sm:$0xff]
    %v312 = vld [vmem:[#allocation4 + $0x588] sm:$0xff]
    %v313 = vld [vmem:[#allocation4 + $0x590] sm:$0xff]
    %v314 = vld [vmem:[#allocation4 + $0x598] sm:$0xff]
    %v315 = vld [vmem:[#allocation4 + $0x5a0] sm:$0xff]
    %v316 = vld [vmem:[#allocation4 + $0x5a8] sm:$0xff]
    %v317 = vld [vmem:[#allocation4 + $0x5b0] sm:$0xff]
    %v318 = vld [vmem:[#allocation4 + $0x5b8] sm:$0xff]
    %v319 = vld [vmem:[#allocation4 + $0x5c0] sm:$0xff]
    %v320 = vld [vmem:[#allocation4 + $0x5c8] sm:$0xff]
    %v321 = vld [vmem:[#allocation4 + $0x5d0] sm:$0xff]
    %v322 = vld [vmem:[#allocation4 + $0x5d8] sm:$0xff]
    %v323 = vld [vmem:[#allocation4 + $0x5e0] sm:$0xff]
    %v324 = vld [vmem:[#allocation4 + $0x5e8] sm:$0xff]
    %v325 = vld [vmem:[#allocation4 + $0x5f0] sm:$0xff]
    %v326 = vld [vmem:[#allocation4 + $0x5f8] sm:$0xff]
    %v327 = vld [vmem:[#allocation8] sm:$0xff]
    %v329 = vlaneseq
    %v330 = vshrl.u32 %v329, 7
    %v331 = vsub.s32 0, %v330
    %v332 = vrot.slane %v327, %v331
    %v333 = vlaneseq
    %v334 = vshrl.u32 %v333, 7
    %v335 = vsub.s32 1, %v334
    %v336 = vrot.slane %v327, %v335
    %v337 = vlaneseq
    %v338 = vshrl.u32 %v337, 7
    %v339 = vsub.s32 2, %v338
    %v340 = vrot.slane %v327, %v339
    %v341 = vlaneseq
    %v342 = vshrl.u32 %v341, 7
    %v343 = vsub.s32 3, %v342
    %v344 = vrot.slane %v327, %v343
    %v345 = vlaneseq
    %v346 = vshrl.u32 %v345, 7
    %v347 = vsub.s32 4, %v346
    %v348 = vrot.slane %v327, %v347
    %v349 = vlaneseq
    %v350 = vshrl.u32 %v349, 7
    %v351 = vsub.s32 5, %v350
    %v352 = vrot.slane %v327, %v351
    %v353 = vlaneseq
    %v354 = vshrl.u32 %v353, 7
    %v355 = vsub.s32 6, %v354
    %v356 = vrot.slane %v327, %v355
    %v357 = vlaneseq
    %v358 = vshrl.u32 %v357, 7
    %v359 = vsub.s32 7, %v358
    %v360 = vrot.slane %v327, %v359
    %v371 = vunpack.c.l.b16 %v133
    %v372 = vunpack.c.h.b16 %v133
    %v373 = vunpack.c.l.b16 %v134
    %v374 = vpack.c.b16 %v371, %v371
    %v375 = vpack.c.b16 %v372, %v372
    %v376 = vpack.c.b16 %v373, %v373
    %380 = vmatprep.subr.bf16.mxu0 %v136
    %381 = vmatpush1.bf16.msra.mxu0 %v135
    %382 = vmatprep.subr.bf16.mxu0 %v144
    %383 = vmatpush1.bf16.msra.mxu0 %v143
    %384 = vmatprep.subr.bf16.mxu0 %v152
    %385 = vmatpush1.bf16.msra.mxu0 %v151
    %386 = vmatprep.subr.bf16.mxu0 %v160
    %387 = vmatpush1.bf16.msra.mxu0 %v159
    %388 = vmatprep.subr.bf16.mxu0 %v168
    %389 = vmatpush1.bf16.msra.mxu0 %v167
    %390 = vmatprep.subr.bf16.mxu0 %v176
    %391 = vmatpush1.bf16.msra.mxu0 %v175
    %392 = vmatprep.subr.bf16.mxu0 %v184
    %393 = vmatpush1.bf16.msra.mxu0 %v183
    %394 = vmatprep.subr.bf16.mxu0 %v192
    %395 = vmatpush1.bf16.msra.mxu0 %v191
    %396 = vmatprep.subr.bf16.mxu0 %v200
    %397 = vmatpush1.bf16.msra.mxu0 %v199
    %398 = vmatprep.subr.bf16.mxu0 %v208
    %399 = vmatpush1.bf16.msra.mxu0 %v207
    %400 = vmatprep.subr.bf16.mxu0 %v216
    %401 = vmatpush1.bf16.msra.mxu0 %v215
    %402 = vmatprep.subr.bf16.mxu0 %v224
    %403 = vmatpush1.bf16.msra.mxu0 %v223
    %404 = vmatprep.subr.bf16.mxu0 %v232
    %405 = vmatpush1.bf16.msra.mxu0 %v231
    %406 = vmatprep.subr.bf16.mxu0 %v240
    %407 = vmatpush1.bf16.msra.mxu0 %v239
    %408 = vmatprep.subr.bf16.mxu0 %v248
    %409 = vmatpush1.bf16.msra.mxu0 %v247
    %410 = vmatprep.subr.bf16.mxu0 %v256
    %411 = vmatpush1.bf16.msra.mxu0 %v255
    %412 = vmatprep.mubr.bf16.mxu0 %v375
    %413 = vmatmul.mubr.bf16.gmra.mrb[0].mxu0 %v374
    %v414 = vpop.f32.mrb[0].mxu0
    %v415 = vadd.f32 %v332, %v414
    %v416 = vpop.f32.mrb[0].mxu0
    %v417 = vadd.f32 %v336, %v416
    %v418 = vpop.f32.mrb[0].mxu0
    %v419 = vpop.f32.mrb[0].mxu0
    %420 = vdwg.mxu0
    %421 = vmatprep.subr.bf16.mxu0 %v264
    %422 = vmatpush1.bf16.msra.mxu0 %v263
    %423 = vmatprep.subr.bf16.mxu0 %v272
    %424 = vmatpush1.bf16.msra.mxu0 %v271
    %425 = vmatprep.subr.bf16.mxu0 %v280
    %426 = vmatpush1.bf16.msra.mxu0 %v279
    %427 = vmatprep.subr.bf16.mxu0 %v288
    %428 = vmatpush1.bf16.msra.mxu0 %v287
    %429 = vmatprep.subr.bf16.mxu0 %v296
    %430 = vmatpush1.bf16.msra.mxu0 %v295
    %431 = vmatprep.subr.bf16.mxu0 %v304
    %432 = vmatpush1.bf16.msra.mxu0 %v303
    %433 = vmatprep.subr.bf16.mxu0 %v312
    %434 = vmatpush1.bf16.msra.mxu0 %v311
    %435 = vmatprep.subr.bf16.mxu0 %v320
    %436 = vmatpush1.bf16.msra.mxu0 %v319
    %437 = vmatprep.subr.bf16.mxu0 0
    %438 = vmatpush1.bf16.msra.mxu0 0
    %439 = vmatprep.subr.bf16.mxu0 0
    %440 = vmatpush1.bf16.msra.mxu0 0
    %441 = vmatprep.subr.bf16.mxu0 0
    %442 = vmatpush1.bf16.msra.mxu0 0
    %443 = vmatprep.subr.bf16.mxu0 0
    %444 = vmatpush1.bf16.msra.mxu0 0
    %445 = vmatprep.subr.bf16.mxu0 0
    %446 = vmatpush1.bf16.msra.mxu0 0
    %447 = vmatprep.subr.bf16.mxu0 0
    %448 = vmatpush1.bf16.msra.mxu0 0
    %449 = vmatprep.subr.bf16.mxu0 0
    %450 = vmatpush1.bf16.msra.mxu0 0
    %451 = vmatprep.subr.bf16.mxu0 0
    %452 = vmatpush1.bf16.msra.mxu0 0
    %453 = vmatprep.mubr.bf16.mxu0 0
    %454 = vmatmul.mubr.bf16.gmra.mrb[0].mxu0 %v376
    %v455 = vpop.f32.mrb[0].mxu0
    %v456 = vadd.f32 %v415, %v455
    %v457 = vpop.f32.mrb[0].mxu0
    %v458 = vadd.f32 %v417, %v457
    %v459 = vpop.f32.mrb[0].mxu0
    %v460 = vpop.f32.mrb[0].mxu0
    %461 = vdwg.mxu0
    %462 = vmatprep.subr.bf16.mxu0 %v138
    %463 = vmatpush1.bf16.msra.mxu0 %v137
    %464 = vmatprep.subr.bf16.mxu0 %v146
    %465 = vmatpush1.bf16.msra.mxu0 %v145
    %466 = vmatprep.subr.bf16.mxu0 %v154
    %467 = vmatpush1.bf16.msra.mxu0 %v153
    %468 = vmatprep.subr.bf16.mxu0 %v162
    %469 = vmatpush1.bf16.msra.mxu0 %v161
    %470 = vmatprep.subr.bf16.mxu0 %v170
    %471 = vmatpush1.bf16.msra.mxu0 %v169
    %472 = vmatprep.subr.bf16.mxu0 %v178
    %473 = vmatpush1.bf16.msra.mxu0 %v177
    %474 = vmatprep.subr.bf16.mxu0 %v186
    %475 = vmatpush1.bf16.msra.mxu0 %v185
    %476 = vmatprep.subr.bf16.mxu0 %v194
    %477 = vmatpush1.bf16.msra.mxu0 %v193
    %478 = vmatprep.subr.bf16.mxu0 %v202
    %479 = vmatpush1.bf16.msra.mxu0 %v201
    %480 = vmatprep.subr.bf16.mxu0 %v210
    %481 = vmatpush1.bf16.msra.mxu0 %v209
    %482 = vmatprep.subr.bf16.mxu0 %v218
    %483 = vmatpush1.bf16.msra.mxu0 %v217
    %484 = vmatprep.subr.bf16.mxu0 %v226
    %485 = vmatpush1.bf16.msra.mxu0 %v225
    %486 = vmatprep.subr.bf16.mxu0 %v234
    %487 = vmatpush1.bf16.msra.mxu0 %v233
    %488 = vmatprep.subr.bf16.mxu0 %v242
    %489 = vmatpush1.bf16.msra.mxu0 %v241
    %490 = vmatprep.subr.bf16.mxu0 %v250
    %491 = vmatpush1.bf16.msra.mxu0 %v249
    %492 = vmatprep.subr.bf16.mxu0 %v258
    %493 = vmatpush1.bf16.msra.mxu0 %v257
    %494 = vmatprep.mubr.bf16.mxu0 %v375
    %495 = vmatmul.mubr.bf16.gmra.mrb[0].mxu0 %v374
    %v496 = vpop.f32.mrb[0].mxu0
    %v497 = vadd.f32 %v340, %v496
    %v498 = vpop.f32.mrb[0].mxu0
    %v499 = vadd.f32 %v344, %v498
    %v500 = vpop.f32.mrb[0].mxu0
    %v501 = vpop.f32.mrb[0].mxu0
    %502 = vdwg.mxu0
    %503 = vmatprep.subr.bf16.mxu0 %v266
    %504 = vmatpush1.bf16.msra.mxu0 %v265
    %505 = vmatprep.subr.bf16.mxu0 %v274
    %506 = vmatpush1.bf16.msra.mxu0 %v273
    %507 = vmatprep.subr.bf16.mxu0 %v282
    %508 = vmatpush1.bf16.msra.mxu0 %v281
    %509 = vmatprep.subr.bf16.mxu0 %v290
    %510 = vmatpush1.bf16.msra.mxu0 %v289
    %511 = vmatprep.subr.bf16.mxu0 %v298
    %512 = vmatpush1.bf16.msra.mxu0 %v297
    %513 = vmatprep.subr.bf16.mxu0 %v306
    %514 = vmatpush1.bf16.msra.mxu0 %v305
    %515 = vmatprep.subr.bf16.mxu0 %v314
    %516 = vmatpush1.bf16.msra.mxu0 %v313
    %517 = vmatprep.subr.bf16.mxu0 %v322
    %518 = vmatpush1.bf16.msra.mxu0 %v321
    %519 = vmatprep.subr.bf16.mxu0 0
    %520 = vmatpush1.bf16.msra.mxu0 0
    %521 = vmatprep.subr.bf16.mxu0 0
    %522 = vmatpush1.bf16.msra.mxu0 0
    %523 = vmatprep.subr.bf16.mxu0 0
    %524 = vmatpush1.bf16.msra.mxu0 0
    %525 = vmatprep.subr.bf16.mxu0 0
    %526 = vmatpush1.bf16.msra.mxu0 0
    %527 = vmatprep.subr.bf16.mxu0 0
    %528 = vmatpush1.bf16.msra.mxu0 0
    %529 = vmatprep.subr.bf16.mxu0 0
    %530 = vmatpush1.bf16.msra.mxu0 0
    %531 = vmatprep.subr.bf16.mxu0 0
    %532 = vmatpush1.bf16.msra.mxu0 0
    %533 = vmatprep.subr.bf16.mxu0 0
    %534 = vmatpush1.bf16.msra.mxu0 0
    %535 = vmatprep.mubr.bf16.mxu0 0
    %536 = vmatmul.mubr.bf16.gmra.mrb[0].mxu0 %v376
    %v537 = vpop.f32.mrb[0].mxu0
    %v538 = vadd.f32 %v497, %v537
    %v539 = vpop.f32.mrb[0].mxu0
    %v540 = vadd.f32 %v499, %v539
    %v541 = vpop.f32.mrb[0].mxu0
    %v542 = vpop.f32.mrb[0].mxu0
    %543 = vdwg.mxu0
    %544 = vmatprep.subr.bf16.mxu0 %v140
    %545 = vmatpush1.bf16.msra.mxu0 %v139
    %546 = vmatprep.subr.bf16.mxu0 %v148
    %547 = vmatpush1.bf16.msra.mxu0 %v147
    %548 = vmatprep.subr.bf16.mxu0 %v156
    %549 = vmatpush1.bf16.msra.mxu0 %v155
    %550 = vmatprep.subr.bf16.mxu0 %v164
    %551 = vmatpush1.bf16.msra.mxu0 %v163
    %552 = vmatprep.subr.bf16.mxu0 %v172
    %553 = vmatpush1.bf16.msra.mxu0 %v171
    %554 = vmatprep.subr.bf16.mxu0 %v180
    %555 = vmatpush1.bf16.msra.mxu0 %v179
    %556 = vmatprep.subr.bf16.mxu0 %v188
    %557 = vmatpush1.bf16.msra.mxu0 %v187
    %558 = vmatprep.subr.bf16.mxu0 %v196
    %559 = vmatpush1.bf16.msra.mxu0 %v195
    %560 = vmatprep.subr.bf16.mxu0 %v204
    %561 = vmatpush1.bf16.msra.mxu0 %v203
    %562 = vmatprep.subr.bf16.mxu0 %v212
    %563 = vmatpush1.bf16.msra.mxu0 %v211
    %564 = vmatprep.subr.bf16.mxu0 %v220
    %565 = vmatpush1.bf16.msra.mxu0 %v219
    %566 = vmatprep.subr.bf16.mxu0 %v228
    %567 = vmatpush1.bf16.msra.mxu0 %v227
    %568 = vmatprep.subr.bf16.mxu0 %v236
    %569 = vmatpush1.bf16.msra.mxu0 %v235
    %570 = vmatprep.subr.bf16.mxu0 %v244
    %571 = vmatpush1.bf16.msra.mxu0 %v243
    %572 = vmatprep.subr.bf16.mxu0 %v252
    %573 = vmatpush1.bf16.msra.mxu0 %v251
    %574 = vmatprep.subr.bf16.mxu0 %v260
    %575 = vmatpush1.bf16.msra.mxu0 %v259
    %576 = vmatprep.mubr.bf16.mxu0 %v375
    %577 = vmatmul.mubr.bf16.gmra.mrb[0].mxu0 %v374
    %v578 = vpop.f32.mrb[0].mxu0
    %v579 = vadd.f32 %v348, %v578
    %v580 = vpop.f32.mrb[0].mxu0
    %v581 = vadd.f32 %v352, %v580
    %v582 = vpop.f32.mrb[0].mxu0
    %v583 = vpop.f32.mrb[0].mxu0
    %584 = vdwg.mxu0
    %585 = vmatprep.subr.bf16.mxu0 %v268
    %586 = vmatpush1.bf16.msra.mxu0 %v267
    %587 = vmatprep.subr.bf16.mxu0 %v276
    %588 = vmatpush1.bf16.msra.mxu0 %v275
    %589 = vmatprep.subr.bf16.mxu0 %v284
    %590 = vmatpush1.bf16.msra.mxu0 %v283
    %591 = vmatprep.subr.bf16.mxu0 %v292
    %592 = vmatpush1.bf16.msra.mxu0 %v291
    %593 = vmatprep.subr.bf16.mxu0 %v300
    %594 = vmatpush1.bf16.msra.mxu0 %v299
    %595 = vmatprep.subr.bf16.mxu0 %v308
    %596 = vmatpush1.bf16.msra.mxu0 %v307
    %597 = vmatprep.subr.bf16.mxu0 %v316
    %598 = vmatpush1.bf16.msra.mxu0 %v315
    %599 = vmatprep.subr.bf16.mxu0 %v324
    %600 = vmatpush1.bf16.msra.mxu0 %v323
    %601 = vmatprep.subr.bf16.mxu0 0
    %602 = vmatpush1.bf16.msra.mxu0 0
    %603 = vmatprep.subr.bf16.mxu0 0
    %604 = vmatpush1.bf16.msra.mxu0 0
    %605 = vmatprep.subr.bf16.mxu0 0
    %606 = vmatpush1.bf16.msra.mxu0 0
    %607 = vmatprep.subr.bf16.mxu0 0
    %608 = vmatpush1.bf16.msra.mxu0 0
    %609 = vmatprep.subr.bf16.mxu0 0
    %610 = vmatpush1.bf16.msra.mxu0 0
    %611 = vmatprep.subr.bf16.mxu0 0
    %612 = vmatpush1.bf16.msra.mxu0 0
    %613 = vmatprep.subr.bf16.mxu0 0
    %614 = vmatpush1.bf16.msra.mxu0 0
    %615 = vmatprep.subr.bf16.mxu0 0
    %616 = vmatpush1.bf16.msra.mxu0 0
    %617 = vmatprep.mubr.bf16.mxu0 0
    %618 = vmatmul.mubr.bf16.gmra.mrb[0].mxu0 %v376
    %v619 = vpop.f32.mrb[0].mxu0
    %v620 = vadd.f32 %v579, %v619
    %v621 = vpop.f32.mrb[0].mxu0
    %v622 = vadd.f32 %v581, %v621
    %v623 = vpop.f32.mrb[0].mxu0
    %v624 = vpop.f32.mrb[0].mxu0
    %625 = vdwg.mxu0
    %626 = vmatprep.subr.bf16.mxu0 %v142
    %627 = vmatpush1.bf16.msra.mxu0 %v141
    %628 = vmatprep.subr.bf16.mxu0 %v150
    %629 = vmatpush1.bf16.msra.mxu0 %v149
    %630 = vmatprep.subr.bf16.mxu0 %v158
    %631 = vmatpush1.bf16.msra.mxu0 %v157
    %632 = vmatprep.subr.bf16.mxu0 %v166
    %633 = vmatpush1.bf16.msra.mxu0 %v165
    %634 = vmatprep.subr.bf16.mxu0 %v174
    %635 = vmatpush1.bf16.msra.mxu0 %v173
    %636 = vmatprep.subr.bf16.mxu0 %v182
    %637 = vmatpush1.bf16.msra.mxu0 %v181
    %638 = vmatprep.subr.bf16.mxu0 %v190
    %639 = vmatpush1.bf16.msra.mxu0 %v189
    %640 = vmatprep.subr.bf16.mxu0 %v198
    %641 = vmatpush1.bf16.msra.mxu0 %v197
    %642 = vmatprep.subr.bf16.mxu0 %v206
    %643 = vmatpush1.bf16.msra.mxu0 %v205
    %644 = vmatprep.subr.bf16.mxu0 %v214
    %645 = vmatpush1.bf16.msra.mxu0 %v213
    %646 = vmatprep.subr.bf16.mxu0 %v222
    %647 = vmatpush1.bf16.msra.mxu0 %v221
    %648 = vmatprep.subr.bf16.mxu0 %v230
    %649 = vmatpush1.bf16.msra.mxu0 %v229
    %650 = vmatprep.subr.bf16.mxu0 %v238
    %651 = vmatpush1.bf16.msra.mxu0 %v237
    %652 = vmatprep.subr.bf16.mxu0 %v246
    %653 = vmatpush1.bf16.msra.mxu0 %v245
    %654 = vmatprep.subr.bf16.mxu0 %v254
    %655 = vmatpush1.bf16.msra.mxu0 %v253
    %656 = vmatprep.subr.bf16.mxu0 %v262
    %657 = vmatpush1.bf16.msra.mxu0 %v261
    %658 = vmatprep.mubr.bf16.mxu0 %v375
    %659 = vmatmul.mubr.bf16.gmra.mrb[0].mxu0 %v374
    %v660 = vpop.f32.mrb[0].mxu0
    %v661 = vadd.f32 %v356, %v660
    %v662 = vpop.f32.mrb[0].mxu0
    %v663 = vadd.f32 %v360, %v662
    %v664 = vpop.f32.mrb[0].mxu0
    %v665 = vpop.f32.mrb[0].mxu0
    %666 = vdwg.mxu0
    %667 = vmatprep.subr.bf16.mxu0 %v270
    %668 = vmatpush1.bf16.msra.mxu0 %v269
    %669 = vmatprep.subr.bf16.mxu0 %v278
    %670 = vmatpush1.bf16.msra.mxu0 %v277
    %671 = vmatprep.subr.bf16.mxu0 %v286
    %672 = vmatpush1.bf16.msra.mxu0 %v285
    %673 = vmatprep.subr.bf16.mxu0 %v294
    %674 = vmatpush1.bf16.msra.mxu0 %v293
    %675 = vmatprep.subr.bf16.mxu0 %v302
    %676 = vmatpush1.bf16.msra.mxu0 %v301
    %677 = vmatprep.subr.bf16.mxu0 %v310
    %678 = vmatpush1.bf16.msra.mxu0 %v309
    %679 = vmatprep.subr.bf16.mxu0 %v318
    %680 = vmatpush1.bf16.msra.mxu0 %v317
    %681 = vmatprep.subr.bf16.mxu0 %v326
    %682 = vmatpush1.bf16.msra.mxu0 %v325
    %683 = vmatprep.subr.bf16.mxu0 0
    %684 = vmatpush1.bf16.msra.mxu0 0
    %685 = vmatprep.subr.bf16.mxu0 0
    %686 = vmatpush1.bf16.msra.mxu0 0
    %687 = vmatprep.subr.bf16.mxu0 0
    %688 = vmatpush1.bf16.msra.mxu0 0
    %689 = vmatprep.subr.bf16.mxu0 0
    %690 = vmatpush1.bf16.msra.mxu0 0
    %691 = vmatprep.subr.bf16.mxu0 0
    %692 = vmatpush1.bf16.msra.mxu0 0
    %693 = vmatprep.subr.bf16.mxu0 0
    %694 = vmatpush1.bf16.msra.mxu0 0
    %695 = vmatprep.subr.bf16.mxu0 0
    %696 = vmatpush1.bf16.msra.mxu0 0
    %697 = vmatprep.subr.bf16.mxu0 0
    %698 = vmatpush1.bf16.msra.mxu0 0
    %699 = vmatprep.mubr.bf16.mxu0 0
    %700 = vmatmul.mubr.bf16.gmra.mrb[0].mxu0 %v376
    %v701 = vpop.f32.mrb[0].mxu0
    %v702 = vadd.f32 %v661, %v701
    %v703 = vpop.f32.mrb[0].mxu0
    %v704 = vadd.f32 %v663, %v703
    %v705 = vpop.f32.mrb[0].mxu0
    %v706 = vpop.f32.mrb[0].mxu0
    %707 = vdwg.mxu0
    %vm708 = vcmp.ge.f32.partialorder %v456, 0.0
    %vm709 = vcmp.ge.f32.partialorder %v458, 0.0
    %vm710 = vcmp.ge.f32.partialorder %v538, 0.0
    %vm711 = vcmp.ge.f32.partialorder %v540, 0.0
    %vm712 = vcmp.ge.f32.partialorder %v620, 0.0
    %vm713 = vcmp.ge.f32.partialorder %v622, 0.0
    %vm714 = vcmp.ge.f32.partialorder %v702, 0.0
    %vm715 = vcmp.ge.f32.partialorder %v704, 0.0
    %v716 = vmul.f32 %v456, 0.3
    %v717 = vmul.f32 %v458, 0.3
    %v718 = vmul.f32 %v538, 0.3
    %v719 = vmul.f32 %v540, 0.3
    %v720 = vmul.f32 %v620, 0.3
    %v721 = vmul.f32 %v622, 0.3
    %v722 = vmul.f32 %v702, 0.3
    %v723 = vmul.f32 %v704, 0.3
    %v724 = vsel %vm708, %v456, %v716
    %v725 = vsel %vm709, %v458, %v717
    %v726 = vsel %vm710, %v538, %v718
    %v727 = vsel %vm711, %v540, %v719
    %v728 = vsel %vm712, %v620, %v720
    %v729 = vsel %vm713, %v622, %v721
    %v730 = vsel %vm714, %v702, %v722
    %v731 = vsel %vm715, %v704, %v723
    %732 = vst [vmem:[#allocation2] sm:$0xff] %v724
    %733 = vst [vmem:[#allocation2 + $0x8] sm:$0xff] %v725
    %734 = vst [vmem:[#allocation2 + $0x10] sm:$0xff] %v726
    %735 = vst [vmem:[#allocation2 + $0x18] sm:$0xff] %v727
    %736 = vst [vmem:[#allocation2 + $0x20] sm:$0xff] %v728
    %737 = vst [vmem:[#allocation2 + $0x28] sm:$0xff] %v729
    %738 = vst [vmem:[#allocation2 + $0x30] sm:$0xff] %v730
    %739 = vst [vmem:[#allocation2 + $0x38] sm:$0xff] %v731
    %s740 = scalar_lea.sflag [#allocation7], 2
    %s742 = sshll.u32 1, 14
    %s743 = sxor.u32 4294967295, %s742
    %s745 = sadd.s32 2, %s61
    %s747 = sshll.u32 7, 26
    %s748 = sxor.u32 4294967295, %s747
    %s749 = sand.u32 0, %s748
    %s750 = sshll.u32 %s745, 26
    %s751 = sor.u32 %s749, %s750
    %s752 = sshll.u32 [#allocation5], 4
    %s753 = int_to_ptr.vmem [resolvable:$true] %s752
    %756 = sst [smem:[#allocation20]] 1024
    %s757 = scalar_lea.smem [#allocation20], 1
    %758 = sst [smem:[%s757]] 1024
    %s759 = scalar_lea.smem [#allocation20], 2
    %760 = sst [smem:[%s759]] 8
    %s761 = scalar_lea.smem [#allocation20], 3
    %762 = sst [smem:[%s761]] 64
    %s763 = scalar_lea.smem [#allocation20], 4
    %764 = sst [smem:[%s763]] 128
    %s765 = scalar_lea.smem [#allocation20], 5
    %766 = sst [smem:[%s765]] 2
    %s767 = scalar_lea.smem [#allocation20], 6
    %768 = sst [smem:[%s767]] 512
    %s769 = scalar_lea.smem [#allocation20], 7
    %770 = sst [smem:[%s769]] 64
    %s771 = scalar_lea.smem [#allocation20], 8
    %772 = sst [smem:[%s771]] 4
    %774 = dma.general %s3, 131072, %s753, %s740, [#allocation19], [#allocation20], %s751, 0
    %s775 = scalar_lea.sflag [#allocation7], 3
    %s777 = sshll.u32 1, 14
    %s778 = sxor.u32 4294967295, %s777
    %s780 = sadd.s32 2, %s61
    %s782 = sshll.u32 7, 26
    %s783 = sxor.u32 4294967295, %s782
    %s784 = sand.u32 0, %s783
    %s785 = sshll.u32 %s780, 26
    %s786 = sor.u32 %s784, %s785
    %s787 = sshll.u32 [#allocation6], 4
    %s788 = int_to_ptr.vmem [resolvable:$true] %s787
    %791 = sst [smem:[#allocation22]] 512
    %s792 = scalar_lea.smem [#allocation22], 1
    %793 = sst [smem:[%s792]] 512
    %s794 = scalar_lea.smem [#allocation22], 2
    %795 = sst [smem:[%s794]] 4
    %s796 = scalar_lea.smem [#allocation22], 3
    %797 = sst [smem:[%s796]] 64
    %s798 = scalar_lea.smem [#allocation22], 4
    %799 = sst [smem:[%s798]] 128
    %s800 = scalar_lea.smem [#allocation22], 5
    %801 = sst [smem:[%s800]] 2
    %s802 = scalar_lea.smem [#allocation22], 6
    %803 = sst [smem:[%s802]] 256
    %s804 = scalar_lea.smem [#allocation22], 7
    %805 = sst [smem:[%s804]] 64
    %s806 = scalar_lea.smem [#allocation22], 8
    %807 = sst [smem:[%s806]] 4
    %809 = dma.general %s5, 32768, %s788, %s775, [#allocation21], [#allocation22], %s786, 0
    %s810 = sshll.u32 %s130, 4
    %811 = dma.done %s94, %s810
    %v812 = vld [vmem:[%s0] sm:$0xff]
    %v813 = vld [vmem:[%s0 + $0x8] sm:$0xf]
    %v814 = vld [vmem:[%s93] sm:$0xff]
    %v815 = vld [vmem:[%s93 + $0x8] sm:$0xff]
    %v816 = vld [vmem:[%s93 + $0x10] sm:$0xff]
    %v817 = vld [vmem:[%s93 + $0x18] sm:$0xff]
    %v818 = vld [vmem:[%s93 + $0x20] sm:$0xff]
    %v819 = vld [vmem:[%s93 + $0x28] sm:$0xff]
    %v820 = vld [vmem:[%s93 + $0x30] sm:$0xff]
    %v821 = vld [vmem:[%s93 + $0x38] sm:$0xff]
    %v822 = vld [vmem:[%s93 + $0x40] sm:$0xff]
    %v823 = vld [vmem:[%s93 + $0x48] sm:$0xff]
    %v824 = vld [vmem:[%s93 + $0x50] sm:$0xff]
    %v825 = vld [vmem:[%s93 + $0x58] sm:$0xff]
    %v826 = vld [vmem:[%s93 + $0x60] sm:$0xff]
    %v827 = vld [vmem:[%s93 + $0x68] sm:$0xff]
    %v828 = vld [vmem:[%s93 + $0x70] sm:$0xff]
    %v829 = vld [vmem:[%s93 + $0x78] sm:$0xff]
    %v830 = vld [vmem:[%s93 + $0x80] sm:$0xff]
    %v831 = vld [vmem:[%s93 + $0x88] sm:$0xff]
    %v832 = vld [vmem:[%s93 + $0x90] sm:$0xff]
    %v833 = vld [vmem:[%s93 + $0x98] sm:$0xff]
    %v834 = vld [vmem:[%s93 + $0xa0] sm:$0xff]
    %v835 = vld [vmem:[%s93 + $0xa8] sm:$0xff]
    %v836 = vld [vmem:[%s93 + $0xb0] sm:$0xff]
    %v837 = vld [vmem:[%s93 + $0xb8] sm:$0xff]
    %v838 = vld [vmem:[%s93 + $0xc0] sm:$0xff]
    %v839 = vld [vmem:[%s93 + $0xc8] sm:$0xff]
    %v840 = vld [vmem:[%s93 + $0xd0] sm:$0xff]
    %v841 = vld [vmem:[%s93 + $0xd8] sm:$0xff]
    %v842 = vld [vmem:[%s93 + $0xe0] sm:$0xff]
    %v843 = vld [vmem:[%s93 + $0xe8] sm:$0xff]
    %v844 = vld [vmem:[%s93 + $0xf0] sm:$0xff]
    %v845 = vld [vmem:[%s93 + $0xf8] sm:$0xff]
    %v846 = vld [vmem:[%s93 + $0x100] sm:$0xff]
    %v847 = vld [vmem:[%s93 + $0x108] sm:$0xff]
    %v848 = vld [vmem:[%s93 + $0x110] sm:$0xff]
    %v849 = vld [vmem:[%s93 + $0x118] sm:$0xff]
    %v850 = vld [vmem:[%s93 + $0x120] sm:$0xff]
    %v851 = vld [vmem:[%s93 + $0x128] sm:$0xff]
    %v852 = vld [vmem:[%s93 + $0x130] sm:$0xff]
    %v853 = vld [vmem:[%s93 + $0x138] sm:$0xff]
    %v854 = vld [vmem:[%s93 + $0x140] sm:$0xff]
    %v855 = vld [vmem:[%s93 + $0x148] sm:$0xff]
    %v856 = vld [vmem:[%s93 + $0x150] sm:$0xff]
    %v857 = vld [vmem:[%s93 + $0x158] sm:$0xff]
    %v858 = vld [vmem:[%s93 + $0x160] sm:$0xff]
    %v859 = vld [vmem:[%s93 + $0x168] sm:$0xff]
    %v860 = vld [vmem:[%s93 + $0x170] sm:$0xff]
    %v861 = vld [vmem:[%s93 + $0x178] sm:$0xff]
    %v862 = vld [vmem:[%s93 + $0x180] sm:$0xff]
    %v863 = vld [vmem:[%s93 + $0x188] sm:$0xff]
    %v864 = vld [vmem:[%s93 + $0x190] sm:$0xff]
    %v865 = vld [vmem:[%s93 + $0x198] sm:$0xff]
    %v866 = vld [vmem:[%s93 + $0x1a0] sm:$0xff]
    %v867 = vld [vmem:[%s93 + $0x1a8] sm:$0xff]
    %v868 = vld [vmem:[%s93 + $0x1b0] sm:$0xff]
    %v869 = vld [vmem:[%s93 + $0x1b8] sm:$0xff]
    %v870 = vld [vmem:[%s93 + $0x1c0] sm:$0xff]
    %v871 = vld [vmem:[%s93 + $0x1c8] sm:$0xff]
    %v872 = vld [vmem:[%s93 + $0x1d0] sm:$0xff]
    %v873 = vld [vmem:[%s93 + $0x1d8] sm:$0xff]
    %v874 = vld [vmem:[%s93 + $0x1e0] sm:$0xff]
    %v875 = vld [vmem:[%s93 + $0x1e8] sm:$0xff]
    %v876 = vld [vmem:[%s93 + $0x1f0] sm:$0xff]
    %v877 = vld [vmem:[%s93 + $0x1f8] sm:$0xff]
    %v878 = vld [vmem:[%s93 + $0x200] sm:$0xff]
    %v879 = vld [vmem:[%s93 + $0x208] sm:$0xff]
    %v880 = vld [vmem:[%s93 + $0x210] sm:$0xff]
    %v881 = vld [vmem:[%s93 + $0x218] sm:$0xff]
    %v882 = vld [vmem:[%s93 + $0x220] sm:$0xff]
    %v883 = vld [vmem:[%s93 + $0x228] sm:$0xff]
    %v884 = vld [vmem:[%s93 + $0x230] sm:$0xff]
    %v885 = vld [vmem:[%s93 + $0x238] sm:$0xff]
    %v886 = vld [vmem:[%s93 + $0x240] sm:$0xff]
    %v887 = vld [vmem:[%s93 + $0x248] sm:$0xff]
    %v888 = vld [vmem:[%s93 + $0x250] sm:$0xff]
    %v889 = vld [vmem:[%s93 + $0x258] sm:$0xff]
    %v890 = vld [vmem:[%s93 + $0x260] sm:$0xff]
    %v891 = vld [vmem:[%s93 + $0x268] sm:$0xff]
    %v892 = vld [vmem:[%s93 + $0x270] sm:$0xff]
    %v893 = vld [vmem:[%s93 + $0x278] sm:$0xff]
    %v894 = vld [vmem:[%s93 + $0x280] sm:$0xff]
    %v895 = vld [vmem:[%s93 + $0x288] sm:$0xff]
    %v896 = vld [vmem:[%s93 + $0x290] sm:$0xff]
    %v897 = vld [vmem:[%s93 + $0x298] sm:$0xff]
    %v898 = vld [vmem:[%s93 + $0x2a0] sm:$0xff]
    %v899 = vld [vmem:[%s93 + $0x2a8] sm:$0xff]
    %v900 = vld [vmem:[%s93 + $0x2b0] sm:$0xff]
    %v901 = vld [vmem:[%s93 + $0x2b8] sm:$0xff]
    %v902 = vld [vmem:[%s93 + $0x2c0] sm:$0xff]
    %v903 = vld [vmem:[%s93 + $0x2c8] sm:$0xff]
    %v904 = vld [vmem:[%s93 + $0x2d0] sm:$0xff]
    %v905 = vld [vmem:[%s93 + $0x2d8] sm:$0xff]
    %v906 = vld [vmem:[%s93 + $0x2e0] sm:$0xff]
    %v907 = vld [vmem:[%s93 + $0x2e8] sm:$0xff]
    %v908 = vld [vmem:[%s93 + $0x2f0] sm:$0xff]
    %v909 = vld [vmem:[%s93 + $0x2f8] sm:$0xff]
    %v910 = vld [vmem:[%s93 + $0x300] sm:$0xff]
    %v911 = vld [vmem:[%s93 + $0x308] sm:$0xff]
    %v912 = vld [vmem:[%s93 + $0x310] sm:$0xff]
    %v913 = vld [vmem:[%s93 + $0x318] sm:$0xff]
    %v914 = vld [vmem:[%s93 + $0x320] sm:$0xff]
    %v915 = vld [vmem:[%s93 + $0x328] sm:$0xff]
    %v916 = vld [vmem:[%s93 + $0x330] sm:$0xff]
    %v917 = vld [vmem:[%s93 + $0x338] sm:$0xff]
    %v918 = vld [vmem:[%s93 + $0x340] sm:$0xff]
    %v919 = vld [vmem:[%s93 + $0x348] sm:$0xff]
    %v920 = vld [vmem:[%s93 + $0x350] sm:$0xff]
    %v921 = vld [vmem:[%s93 + $0x358] sm:$0xff]
    %v922 = vld [vmem:[%s93 + $0x360] sm:$0xff]
    %v923 = vld [vmem:[%s93 + $0x368] sm:$0xff]
    %v924 = vld [vmem:[%s93 + $0x370] sm:$0xff]
    %v925 = vld [vmem:[%s93 + $0x378] sm:$0xff]
    %v926 = vld [vmem:[%s93 + $0x380] sm:$0xff]
    %v927 = vld [vmem:[%s93 + $0x388] sm:$0xff]
    %v928 = vld [vmem:[%s93 + $0x390] sm:$0xff]
    %v929 = vld [vmem:[%s93 + $0x398] sm:$0xff]
    %v930 = vld [vmem:[%s93 + $0x3a0] sm:$0xff]
    %v931 = vld [vmem:[%s93 + $0x3a8] sm:$0xff]
    %v932 = vld [vmem:[%s93 + $0x3b0] sm:$0xff]
    %v933 = vld [vmem:[%s93 + $0x3b8] sm:$0xff]
    %v934 = vld [vmem:[%s93 + $0x3c0] sm:$0xff]
    %v935 = vld [vmem:[%s93 + $0x3c8] sm:$0xff]
    %v936 = vld [vmem:[%s93 + $0x3d0] sm:$0xff]
    %v937 = vld [vmem:[%s93 + $0x3d8] sm:$0xff]
    %v938 = vld [vmem:[%s93 + $0x3e0] sm:$0xff]
    %v939 = vld [vmem:[%s93 + $0x3e8] sm:$0xff]
    %v940 = vld [vmem:[%s93 + $0x3f0] sm:$0xff]
    %v941 = vld [vmem:[%s93 + $0x3f8] sm:$0xff]
    %v942 = vld [vmem:[%s93 + $0x400] sm:$0xff]
    %v943 = vld [vmem:[%s93 + $0x408] sm:$0xff]
    %v944 = vld [vmem:[%s93 + $0x410] sm:$0xff]
    %v945 = vld [vmem:[%s93 + $0x418] sm:$0xff]
    %v946 = vld [vmem:[%s93 + $0x420] sm:$0xff]
    %v947 = vld [vmem:[%s93 + $0x428] sm:$0xff]
    %v948 = vld [vmem:[%s93 + $0x430] sm:$0xff]
    %v949 = vld [vmem:[%s93 + $0x438] sm:$0xff]
    %v950 = vld [vmem:[%s93 + $0x440] sm:$0xff]
    %v951 = vld [vmem:[%s93 + $0x448] sm:$0xff]
    %v952 = vld [vmem:[%s93 + $0x450] sm:$0xff]
    %v953 = vld [vmem:[%s93 + $0x458] sm:$0xff]
    %v954 = vld [vmem:[%s93 + $0x460] sm:$0xff]
    %v955 = vld [vmem:[%s93 + $0x468] sm:$0xff]
    %v956 = vld [vmem:[%s93 + $0x470] sm:$0xff]
    %v957 = vld [vmem:[%s93 + $0x478] sm:$0xff]
    %v958 = vld [vmem:[%s93 + $0x480] sm:$0xff]
    %v959 = vld [vmem:[%s93 + $0x488] sm:$0xff]
    %v960 = vld [vmem:[%s93 + $0x490] sm:$0xff]
    %v961 = vld [vmem:[%s93 + $0x498] sm:$0xff]
    %v962 = vld [vmem:[%s93 + $0x4a0] sm:$0xff]
    %v963 = vld [vmem:[%s93 + $0x4a8] sm:$0xff]
    %v964 = vld [vmem:[%s93 + $0x4b0] sm:$0xff]
    %v965 = vld [vmem:[%s93 + $0x4b8] sm:$0xff]
    %v966 = vld [vmem:[%s93 + $0x4c0] sm:$0xff]
    %v967 = vld [vmem:[%s93 + $0x4c8] sm:$0xff]
    %v968 = vld [vmem:[%s93 + $0x4d0] sm:$0xff]
    %v969 = vld [vmem:[%s93 + $0x4d8] sm:$0xff]
    %v970 = vld [vmem:[%s93 + $0x4e0] sm:$0xff]
    %v971 = vld [vmem:[%s93 + $0x4e8] sm:$0xff]
    %v972 = vld [vmem:[%s93 + $0x4f0] sm:$0xff]
    %v973 = vld [vmem:[%s93 + $0x4f8] sm:$0xff]
    %v974 = vld [vmem:[%s93 + $0x500] sm:$0xff]
    %v975 = vld [vmem:[%s93 + $0x508] sm:$0xff]
    %v976 = vld [vmem:[%s93 + $0x510] sm:$0xff]
    %v977 = vld [vmem:[%s93 + $0x518] sm:$0xff]
    %v978 = vld [vmem:[%s93 + $0x520] sm:$0xff]
    %v979 = vld [vmem:[%s93 + $0x528] sm:$0xff]
    %v980 = vld [vmem:[%s93 + $0x530] sm:$0xff]
    %v981 = vld [vmem:[%s93 + $0x538] sm:$0xff]
    %v982 = vld [vmem:[%s93 + $0x540] sm:$0xff]
    %v983 = vld [vmem:[%s93 + $0x548] sm:$0xff]
    %v984 = vld [vmem:[%s93 + $0x550] sm:$0xff]
    %v985 = vld [vmem:[%s93 + $0x558] sm:$0xff]
    %v986 = vld [vmem:[%s93 + $0x560] sm:$0xff]
    %v987 = vld [vmem:[%s93 + $0x568] sm:$0xff]
    %v988 = vld [vmem:[%s93 + $0x570] sm:$0xff]
    %v989 = vld [vmem:[%s93 + $0x578] sm:$0xff]
    %v990 = vld [vmem:[%s93 + $0x580] sm:$0xff]
    %v991 = vld [vmem:[%s93 + $0x588] sm:$0xff]
    %v992 = vld [vmem:[%s93 + $0x590] sm:$0xff]
    %v993 = vld [vmem:[%s93 + $0x598] sm:$0xff]
    %v994 = vld [vmem:[%s93 + $0x5a0] sm:$0xff]
    %v995 = vld [vmem:[%s93 + $0x5a8] sm:$0xff]
    %v996 = vld [vmem:[%s93 + $0x5b0] sm:$0xff]
    %v997 = vld [vmem:[%s93 + $0x5b8] sm:$0xff]
    %v998 = vld [vmem:[%s93 + $0x5c0] sm:$0xff]
    %v999 = vld [vmem:[%s93 + $0x5c8] sm:$0xff]
    %v1000 = vld [vmem:[%s93 + $0x5d0] sm:$0xff]
    %v1001 = vld [vmem:[%s93 + $0x5d8] sm:$0xff]
    %v1002 = vld [vmem:[%s93 + $0x5e0] sm:$0xff]
    %v1003 = vld [vmem:[%s93 + $0x5e8] sm:$0xff]
    %v1004 = vld [vmem:[%s93 + $0x5f0] sm:$0xff]
    %v1005 = vld [vmem:[%s93 + $0x5f8] sm:$0xff]
    %v1006 = vld [vmem:[#allocation8 + $0x8] sm:$0xff]
    %v1008 = vlaneseq
    %v1009 = vshrl.u32 %v1008, 7
    %v1010 = vsub.s32 0, %v1009
    %v1011 = vrot.slane %v1006, %v1010
    %v1012 = vlaneseq
    %v1013 = vshrl.u32 %v1012, 7
    %v1014 = vsub.s32 1, %v1013
    %v1015 = vrot.slane %v1006, %v1014
    %v1016 = vlaneseq
    %v1017 = vshrl.u32 %v1016, 7
    %v1018 = vsub.s32 2, %v1017
    %v1019 = vrot.slane %v1006, %v1018
    %v1020 = vlaneseq
    %v1021 = vshrl.u32 %v1020, 7
    %v1022 = vsub.s32 3, %v1021
    %v1023 = vrot.slane %v1006, %v1022
    %v1024 = vlaneseq
    %v1025 = vshrl.u32 %v1024, 7
    %v1026 = vsub.s32 4, %v1025
    %v1027 = vrot.slane %v1006, %v1026
    %v1028 = vlaneseq
    %v1029 = vshrl.u32 %v1028, 7
    %v1030 = vsub.s32 5, %v1029
    %v1031 = vrot.slane %v1006, %v1030
    %v1032 = vlaneseq
    %v1033 = vshrl.u32 %v1032, 7
    %v1034 = vsub.s32 6, %v1033
    %v1035 = vrot.slane %v1006, %v1034
    %v1036 = vlaneseq
    %v1037 = vshrl.u32 %v1036, 7
    %v1038 = vsub.s32 7, %v1037
    %v1039 = vrot.slane %v1006, %v1038
    %v1050 = vunpack.c.l.b16 %v812
    %v1051 = vunpack.c.h.b16 %v812
    %v1052 = vunpack.c.l.b16 %v813
    %v1053 = vpack.c.b16 %v1050, %v1050
    %v1054 = vpack.c.b16 %v1051, %v1051
    %v1055 = vpack.c.b16 %v1052, %v1052
    %1059 = vmatprep.subr.bf16.mxu0 %v815
    %1060 = vmatpush1.bf16.msra.mxu0 %v814
    %1061 = vmatprep.subr.bf16.mxu0 %v823
    %1062 = vmatpush1.bf16.msra.mxu0 %v822
    %1063 = vmatprep.subr.bf16.mxu0 %v831
    %1064 = vmatpush1.bf16.msra.mxu0 %v830
    %1065 = vmatprep.subr.bf16.mxu0 %v839
    %1066 = vmatpush1.bf16.msra.mxu0 %v838
    %1067 = vmatprep.subr.bf16.mxu0 %v847
    %1068 = vmatpush1.bf16.msra.mxu0 %v846
    %1069 = vmatprep.subr.bf16.mxu0 %v855
    %1070 = vmatpush1.bf16.msra.mxu0 %v854
    %1071 = vmatprep.subr.bf16.mxu0 %v863
    %1072 = vmatpush1.bf16.msra.mxu0 %v862
    %1073 = vmatprep.subr.bf16.mxu0 %v871
    %1074 = vmatpush1.bf16.msra.mxu0 %v870
    %1075 = vmatprep.subr.bf16.mxu0 %v879
    %1076 = vmatpush1.bf16.msra.mxu0 %v878
    %1077 = vmatprep.subr.bf16.mxu0 %v887
    %1078 = vmatpush1.bf16.msra.mxu0 %v886
    %1079 = vmatprep.subr.bf16.mxu0 %v895
    %1080 = vmatpush1.bf16.msra.mxu0 %v894
    %1081 = vmatprep.subr.bf16.mxu0 %v903
    %1082 = vmatpush1.bf16.msra.mxu0 %v902
    %1083 = vmatprep.subr.bf16.mxu0 %v911
    %1084 = vmatpush1.bf16.msra.mxu0 %v910
    %1085 = vmatprep.subr.bf16.mxu0 %v919
    %1086 = vmatpush1.bf16.msra.mxu0 %v918
    %1087 = vmatprep.subr.bf16.mxu0 %v927
    %1088 = vmatpush1.bf16.msra.mxu0 %v926
    %1089 = vmatprep.subr.bf16.mxu0 %v935
    %1090 = vmatpush1.bf16.msra.mxu0 %v934
    %1091 = vmatprep.mubr.bf16.mxu0 %v1054
    %1092 = vmatmul.mubr.bf16.gmra.mrb[0].mxu0 %v1053
    %v1093 = vpop.f32.mrb[0].mxu0
    %v1094 = vadd.f32 %v1011, %v1093
    %v1095 = vpop.f32.mrb[0].mxu0
    %v1096 = vadd.f32 %v1015, %v1095
    %v1097 = vpop.f32.mrb[0].mxu0
    %v1098 = vpop.f32.mrb[0].mxu0
    %1099 = vdwg.mxu0
    %1100 = vmatprep.subr.bf16.mxu0 %v943
    %1101 = vmatpush1.bf16.msra.mxu0 %v942
    %1102 = vmatprep.subr.bf16.mxu0 %v951
    %1103 = vmatpush1.bf16.msra.mxu0 %v950
    %1104 = vmatprep.subr.bf16.mxu0 %v959
    %1105 = vmatpush1.bf16.msra.mxu0 %v958
    %1106 = vmatprep.subr.bf16.mxu0 %v967
    %1107 = vmatpush1.bf16.msra.mxu0 %v966
    %1108 = vmatprep.subr.bf16.mxu0 %v975
    %1109 = vmatpush1.bf16.msra.mxu0 %v974
    %1110 = vmatprep.subr.bf16.mxu0 %v983
    %1111 = vmatpush1.bf16.msra.mxu0 %v982
    %1112 = vmatprep.subr.bf16.mxu0 %v991
    %1113 = vmatpush1.bf16.msra.mxu0 %v990
    %1114 = vmatprep.subr.bf16.mxu0 %v999
    %1115 = vmatpush1.bf16.msra.mxu0 %v998
    %1116 = vmatprep.subr.bf16.mxu0 0
    %1117 = vmatpush1.bf16.msra.mxu0 0
    %1118 = vmatprep.subr.bf16.mxu0 0
    %1119 = vmatpush1.bf16.msra.mxu0 0
    %1120 = vmatprep.subr.bf16.mxu0 0
    %1121 = vmatpush1.bf16.msra.mxu0 0
    %1122 = vmatprep.subr.bf16.mxu0 0
    %1123 = vmatpush1.bf16.msra.mxu0 0
    %1124 = vmatprep.subr.bf16.mxu0 0
    %1125 = vmatpush1.bf16.msra.mxu0 0
    %1126 = vmatprep.subr.bf16.mxu0 0
    %1127 = vmatpush1.bf16.msra.mxu0 0
    %1128 = vmatprep.subr.bf16.mxu0 0
    %1129 = vmatpush1.bf16.msra.mxu0 0
    %1130 = vmatprep.subr.bf16.mxu0 0
    %1131 = vmatpush1.bf16.msra.mxu0 0
    %1132 = vmatprep.mubr.bf16.mxu0 0
    %1133 = vmatmul.mubr.bf16.gmra.mrb[0].mxu0 %v1055
    %v1134 = vpop.f32.mrb[0].mxu0
    %v1135 = vadd.f32 %v1094, %v1134
    %v1136 = vpop.f32.mrb[0].mxu0
    %v1137 = vadd.f32 %v1096, %v1136
    %v1138 = vpop.f32.mrb[0].mxu0
    %v1139 = vpop.f32.mrb[0].mxu0
    %1140 = vdwg.mxu0
    %1141 = vmatprep.subr.bf16.mxu0 %v817
    %1142 = vmatpush1.bf16.msra.mxu0 %v816
    %1143 = vmatprep.subr.bf16.mxu0 %v825
    %1144 = vmatpush1.bf16.msra.mxu0 %v824
    %1145 = vmatprep.subr.bf16.mxu0 %v833
    %1146 = vmatpush1.bf16.msra.mxu0 %v832
    %1147 = vmatprep.subr.bf16.mxu0 %v841
    %1148 = vmatpush1.bf16.msra.mxu0 %v840
    %1149 = vmatprep.subr.bf16.mxu0 %v849
    %1150 = vmatpush1.bf16.msra.mxu0 %v848
    %1151 = vmatprep.subr.bf16.mxu0 %v857
    %1152 = vmatpush1.bf16.msra.mxu0 %v856
    %1153 = vmatprep.subr.bf16.mxu0 %v865
    %1154 = vmatpush1.bf16.msra.mxu0 %v864
    %1155 = vmatprep.subr.bf16.mxu0 %v873
    %1156 = vmatpush1.bf16.msra.mxu0 %v872
    %1157 = vmatprep.subr.bf16.mxu0 %v881
    %1158 = vmatpush1.bf16.msra.mxu0 %v880
    %1159 = vmatprep.subr.bf16.mxu0 %v889
    %1160 = vmatpush1.bf16.msra.mxu0 %v888
    %1161 = vmatprep.subr.bf16.mxu0 %v897
    %1162 = vmatpush1.bf16.msra.mxu0 %v896
    %1163 = vmatprep.subr.bf16.mxu0 %v905
    %1164 = vmatpush1.bf16.msra.mxu0 %v904
    %1165 = vmatprep.subr.bf16.mxu0 %v913
    %1166 = vmatpush1.bf16.msra.mxu0 %v912
    %1167 = vmatprep.subr.bf16.mxu0 %v921
    %1168 = vmatpush1.bf16.msra.mxu0 %v920
    %1169 = vmatprep.subr.bf16.mxu0 %v929
    %1170 = vmatpush1.bf16.msra.mxu0 %v928
    %1171 = vmatprep.subr.bf16.mxu0 %v937
    %1172 = vmatpush1.bf16.msra.mxu0 %v936
    %1173 = vmatprep.mubr.bf16.mxu0 %v1054
    %1174 = vmatmul.mubr.bf16.gmra.mrb[0].mxu0 %v1053
    %v1175 = vpop.f32.mrb[0].mxu0
    %v1176 = vadd.f32 %v1019, %v1175
    %v1177 = vpop.f32.mrb[0].mxu0
    %v1178 = vadd.f32 %v1023, %v1177
    %v1179 = vpop.f32.mrb[0].mxu0
    %v1180 = vpop.f32.mrb[0].mxu0
    %1181 = vdwg.mxu0
    %1182 = vmatprep.subr.bf16.mxu0 %v945
    %1183 = vmatpush1.bf16.msra.mxu0 %v944
    %1184 = vmatprep.subr.bf16.mxu0 %v953
    %1185 = vmatpush1.bf16.msra.mxu0 %v952
    %1186 = vmatprep.subr.bf16.mxu0 %v961
    %1187 = vmatpush1.bf16.msra.mxu0 %v960
    %1188 = vmatprep.subr.bf16.mxu0 %v969
    %1189 = vmatpush1.bf16.msra.mxu0 %v968
    %1190 = vmatprep.subr.bf16.mxu0 %v977
    %1191 = vmatpush1.bf16.msra.mxu0 %v976
    %1192 = vmatprep.subr.bf16.mxu0 %v985
    %1193 = vmatpush1.bf16.msra.mxu0 %v984
    %1194 = vmatprep.subr.bf16.mxu0 %v993
    %1195 = vmatpush1.bf16.msra.mxu0 %v992
    %1196 = vmatprep.subr.bf16.mxu0 %v1001
    %1197 = vmatpush1.bf16.msra.mxu0 %v1000
    %1198 = vmatprep.subr.bf16.mxu0 0
    %1199 = vmatpush1.bf16.msra.mxu0 0
    %1200 = vmatprep.subr.bf16.mxu0 0
    %1201 = vmatpush1.bf16.msra.mxu0 0
    %1202 = vmatprep.subr.bf16.mxu0 0
    %1203 = vmatpush1.bf16.msra.mxu0 0
    %1204 = vmatprep.subr.bf16.mxu0 0
    %1205 = vmatpush1.bf16.msra.mxu0 0
    %1206 = vmatprep.subr.bf16.mxu0 0
    %1207 = vmatpush1.bf16.msra.mxu0 0
    %1208 = vmatprep.subr.bf16.mxu0 0
    %1209 = vmatpush1.bf16.msra.mxu0 0
    %1210 = vmatprep.subr.bf16.mxu0 0
    %1211 = vmatpush1.bf16.msra.mxu0 0
    %1212 = vmatprep.subr.bf16.mxu0 0
    %1213 = vmatpush1.bf16.msra.mxu0 0
    %1214 = vmatprep.mubr.bf16.mxu0 0
    %1215 = vmatmul.mubr.bf16.gmra.mrb[0].mxu0 %v1055
    %v1216 = vpop.f32.mrb[0].mxu0
    %v1217 = vadd.f32 %v1176, %v1216
    %v1218 = vpop.f32.mrb[0].mxu0
    %v1219 = vadd.f32 %v1178, %v1218
    %v1220 = vpop.f32.mrb[0].mxu0
    %v1221 = vpop.f32.mrb[0].mxu0
    %1222 = vdwg.mxu0
    %1223 = vmatprep.subr.bf16.mxu0 %v819
    %1224 = vmatpush1.bf16.msra.mxu0 %v818
    %1225 = vmatprep.subr.bf16.mxu0 %v827
    %1226 = vmatpush1.bf16.msra.mxu0 %v826
    %1227 = vmatprep.subr.bf16.mxu0 %v835
    %1228 = vmatpush1.bf16.msra.mxu0 %v834
    %1229 = vmatprep.subr.bf16.mxu0 %v843
    %1230 = vmatpush1.bf16.msra.mxu0 %v842
    %1231 = vmatprep.subr.bf16.mxu0 %v851
    %1232 = vmatpush1.bf16.msra.mxu0 %v850
    %1233 = vmatprep.subr.bf16.mxu0 %v859
    %1234 = vmatpush1.bf16.msra.mxu0 %v858
    %1235 = vmatprep.subr.bf16.mxu0 %v867
    %1236 = vmatpush1.bf16.msra.mxu0 %v866
    %1237 = vmatprep.subr.bf16.mxu0 %v875
    %1238 = vmatpush1.bf16.msra.mxu0 %v874
    %1239 = vmatprep.subr.bf16.mxu0 %v883
    %1240 = vmatpush1.bf16.msra.mxu0 %v882
    %1241 = vmatprep.subr.bf16.mxu0 %v891
    %1242 = vmatpush1.bf16.msra.mxu0 %v890
    %1243 = vmatprep.subr.bf16.mxu0 %v899
    %1244 = vmatpush1.bf16.msra.mxu0 %v898
    %1245 = vmatprep.subr.bf16.mxu0 %v907
    %1246 = vmatpush1.bf16.msra.mxu0 %v906
    %1247 = vmatprep.subr.bf16.mxu0 %v915
    %1248 = vmatpush1.bf16.msra.mxu0 %v914
    %1249 = vmatprep.subr.bf16.mxu0 %v923
    %1250 = vmatpush1.bf16.msra.mxu0 %v922
    %1251 = vmatprep.subr.bf16.mxu0 %v931
    %1252 = vmatpush1.bf16.msra.mxu0 %v930
    %1253 = vmatprep.subr.bf16.mxu0 %v939
    %1254 = vmatpush1.bf16.msra.mxu0 %v938
    %1255 = vmatprep.mubr.bf16.mxu0 %v1054
    %1256 = vmatmul.mubr.bf16.gmra.mrb[0].mxu0 %v1053
    %v1257 = vpop.f32.mrb[0].mxu0
    %v1258 = vadd.f32 %v1027, %v1257
    %v1259 = vpop.f32.mrb[0].mxu0
    %v1260 = vadd.f32 %v1031, %v1259
    %v1261 = vpop.f32.mrb[0].mxu0
    %v1262 = vpop.f32.mrb[0].mxu0
    %1263 = vdwg.mxu0
    %1264 = vmatprep.subr.bf16.mxu0 %v947
    %1265 = vmatpush1.bf16.msra.mxu0 %v946
    %1266 = vmatprep.subr.bf16.mxu0 %v955
    %1267 = vmatpush1.bf16.msra.mxu0 %v954
    %1268 = vmatprep.subr.bf16.mxu0 %v963
    %1269 = vmatpush1.bf16.msra.mxu0 %v962
    %1270 = vmatprep.subr.bf16.mxu0 %v971
    %1271 = vmatpush1.bf16.msra.mxu0 %v970
    %1272 = vmatprep.subr.bf16.mxu0 %v979
    %1273 = vmatpush1.bf16.msra.mxu0 %v978
    %1274 = vmatprep.subr.bf16.mxu0 %v987
    %1275 = vmatpush1.bf16.msra.mxu0 %v986
    %1276 = vmatprep.subr.bf16.mxu0 %v995
    %1277 = vmatpush1.bf16.msra.mxu0 %v994
    %1278 = vmatprep.subr.bf16.mxu0 %v1003
    %1279 = vmatpush1.bf16.msra.mxu0 %v1002
    %1280 = vmatprep.subr.bf16.mxu0 0
    %1281 = vmatpush1.bf16.msra.mxu0 0
    %1282 = vmatprep.subr.bf16.mxu0 0
    %1283 = vmatpush1.bf16.msra.mxu0 0
    %1284 = vmatprep.subr.bf16.mxu0 0
    %1285 = vmatpush1.bf16.msra.mxu0 0
    %1286 = vmatprep.subr.bf16.mxu0 0
    %1287 = vmatpush1.bf16.msra.mxu0 0
    %1288 = vmatprep.subr.bf16.mxu0 0
    %1289 = vmatpush1.bf16.msra.mxu0 0
    %1290 = vmatprep.subr.bf16.mxu0 0
    %1291 = vmatpush1.bf16.msra.mxu0 0
    %1292 = vmatprep.subr.bf16.mxu0 0
    %1293 = vmatpush1.bf16.msra.mxu0 0
    %1294 = vmatprep.subr.bf16.mxu0 0
    %1295 = vmatpush1.bf16.msra.mxu0 0
    %1296 = vmatprep.mubr.bf16.mxu0 0
    %1297 = vmatmul.mubr.bf16.gmra.mrb[0].mxu0 %v1055
    %v1298 = vpop.f32.mrb[0].mxu0
    %v1299 = vadd.f32 %v1258, %v1298
    %v1300 = vpop.f32.mrb[0].mxu0
    %v1301 = vadd.f32 %v1260, %v1300
    %v1302 = vpop.f32.mrb[0].mxu0
    %v1303 = vpop.f32.mrb[0].mxu0
    %1304 = vdwg.mxu0
    %1305 = vmatprep.subr.bf16.mxu0 %v821
    %1306 = vmatpush1.bf16.msra.mxu0 %v820
    %1307 = vmatprep.subr.bf16.mxu0 %v829
    %1308 = vmatpush1.bf16.msra.mxu0 %v828
    %1309 = vmatprep.subr.bf16.mxu0 %v837
    %1310 = vmatpush1.bf16.msra.mxu0 %v836
    %1311 = vmatprep.subr.bf16.mxu0 %v845
    %1312 = vmatpush1.bf16.msra.mxu0 %v844
    %1313 = vmatprep.subr.bf16.mxu0 %v853
    %1314 = vmatpush1.bf16.msra.mxu0 %v852
    %1315 = vmatprep.subr.bf16.mxu0 %v861
    %1316 = vmatpush1.bf16.msra.mxu0 %v860
    %1317 = vmatprep.subr.bf16.mxu0 %v869
    %1318 = vmatpush1.bf16.msra.mxu0 %v868
    %1319 = vmatprep.subr.bf16.mxu0 %v877
    %1320 = vmatpush1.bf16.msra.mxu0 %v876
    %1321 = vmatprep.subr.bf16.mxu0 %v885
    %1322 = vmatpush1.bf16.msra.mxu0 %v884
    %1323 = vmatprep.subr.bf16.mxu0 %v893
    %1324 = vmatpush1.bf16.msra.mxu0 %v892
    %1325 = vmatprep.subr.bf16.mxu0 %v901
    %1326 = vmatpush1.bf16.msra.mxu0 %v900
    %1327 = vmatprep.subr.bf16.mxu0 %v909
    %1328 = vmatpush1.bf16.msra.mxu0 %v908
    %1329 = vmatprep.subr.bf16.mxu0 %v917
    %1330 = vmatpush1.bf16.msra.mxu0 %v916
    %1331 = vmatprep.subr.bf16.mxu0 %v925
    %1332 = vmatpush1.bf16.msra.mxu0 %v924
    %1333 = vmatprep.subr.bf16.mxu0 %v933
    %1334 = vmatpush1.bf16.msra.mxu0 %v932
    %1335 = vmatprep.subr.bf16.mxu0 %v941
    %1336 = vmatpush1.bf16.msra.mxu0 %v940
    %1337 = vmatprep.mubr.bf16.mxu0 %v1054
    %1338 = vmatmul.mubr.bf16.gmra.mrb[0].mxu0 %v1053
    %v1339 = vpop.f32.mrb[0].mxu0
    %v1340 = vadd.f32 %v1035, %v1339
    %v1341 = vpop.f32.mrb[0].mxu0
    %v1342 = vadd.f32 %v1039, %v1341
    %v1343 = vpop.f32.mrb[0].mxu0
    %v1344 = vpop.f32.mrb[0].mxu0
    %1345 = vdwg.mxu0
    %1346 = vmatprep.subr.bf16.mxu0 %v949
    %1347 = vmatpush1.bf16.msra.mxu0 %v948
    %1348 = vmatprep.subr.bf16.mxu0 %v957
    %1349 = vmatpush1.bf16.msra.mxu0 %v956
    %1350 = vmatprep.subr.bf16.mxu0 %v965
    %1351 = vmatpush1.bf16.msra.mxu0 %v964
    %1352 = vmatprep.subr.bf16.mxu0 %v973
    %1353 = vmatpush1.bf16.msra.mxu0 %v972
    %1354 = vmatprep.subr.bf16.mxu0 %v981
    %1355 = vmatpush1.bf16.msra.mxu0 %v980
    %1356 = vmatprep.subr.bf16.mxu0 %v989
    %1357 = vmatpush1.bf16.msra.mxu0 %v988
    %1358 = vmatprep.subr.bf16.mxu0 %v997
    %1359 = vmatpush1.bf16.msra.mxu0 %v996
    %1360 = vmatprep.subr.bf16.mxu0 %v1005
    %1361 = vmatpush1.bf16.msra.mxu0 %v1004
    %1362 = vmatprep.subr.bf16.mxu0 0
    %1363 = vmatpush1.bf16.msra.mxu0 0
    %1364 = vmatprep.subr.bf16.mxu0 0
    %1365 = vmatpush1.bf16.msra.mxu0 0
    %1366 = vmatprep.subr.bf16.mxu0 0
    %1367 = vmatpush1.bf16.msra.mxu0 0
    %1368 = vmatprep.subr.bf16.mxu0 0
    %1369 = vmatpush1.bf16.msra.mxu0 0
    %1370 = vmatprep.subr.bf16.mxu0 0
    %1371 = vmatpush1.bf16.msra.mxu0 0
    %1372 = vmatprep.subr.bf16.mxu0 0
    %1373 = vmatpush1.bf16.msra.mxu0 0
    %1374 = vmatprep.subr.bf16.mxu0 0
    %1375 = vmatpush1.bf16.msra.mxu0 0
    %1376 = vmatprep.subr.bf16.mxu0 0
    %1377 = vmatpush1.bf16.msra.mxu0 0
    %1378 = vmatprep.mubr.bf16.mxu0 0
    %1379 = vmatmul.mubr.bf16.gmra.mrb[0].mxu0 %v1055
    %v1380 = vpop.f32.mrb[0].mxu0
    %v1381 = vadd.f32 %v1340, %v1380
    %v1382 = vpop.f32.mrb[0].mxu0
    %v1383 = vadd.f32 %v1342, %v1382
    %v1384 = vpop.f32.mrb[0].mxu0
    %v1385 = vpop.f32.mrb[0].mxu0
    %1386 = vdwg.mxu0
    %vm1387 = vcmp.ge.f32.partialorder %v1135, 0.0
    %vm1388 = vcmp.ge.f32.partialorder %v1137, 0.0
    %vm1389 = vcmp.ge.f32.partialorder %v1217, 0.0
    %vm1390 = vcmp.ge.f32.partialorder %v1219, 0.0
    %vm1391 = vcmp.ge.f32.partialorder %v1299, 0.0
    %vm1392 = vcmp.ge.f32.partialorder %v1301, 0.0
    %vm1393 = vcmp.ge.f32.partialorder %v1381, 0.0
    %vm1394 = vcmp.ge.f32.partialorder %v1383, 0.0
    %v1395 = vmul.f32 %v1135, 0.3
    %v1396 = vmul.f32 %v1137, 0.3
    %v1397 = vmul.f32 %v1217, 0.3
    %v1398 = vmul.f32 %v1219, 0.3
    %v1399 = vmul.f32 %v1299, 0.3
    %v1400 = vmul.f32 %v1301, 0.3
    %v1401 = vmul.f32 %v1381, 0.3
    %v1402 = vmul.f32 %v1383, 0.3
    %v1403 = vsel %vm1387, %v1135, %v1395
    %v1404 = vsel %vm1388, %v1137, %v1396
    %v1405 = vsel %vm1389, %v1217, %v1397
    %v1406 = vsel %vm1390, %v1219, %v1398
    %v1407 = vsel %vm1391, %v1299, %v1399
    %v1408 = vsel %vm1392, %v1301, %v1400
    %v1409 = vsel %vm1393, %v1381, %v1401
    %v1410 = vsel %vm1394, %v1383, %v1402
    %1411 = vst [vmem:[#allocation2 + $0x40] sm:$0xff] %v1403
    %1412 = vst [vmem:[#allocation2 + $0x48] sm:$0xff] %v1404
    %1413 = vst [vmem:[#allocation2 + $0x50] sm:$0xff] %v1405
    %1414 = vst [vmem:[#allocation2 + $0x58] sm:$0xff] %v1406
    %1415 = vst [vmem:[#allocation2 + $0x60] sm:$0xff] %v1407
    %1416 = vst [vmem:[#allocation2 + $0x68] sm:$0xff] %v1408
    %1417 = vst [vmem:[#allocation2 + $0x70] sm:$0xff] %v1409
    %1418 = vst [vmem:[#allocation2 + $0x78] sm:$0xff] %v1410
    %s1419 = smul.u32 4, 256
    %s1420 = smul.u32 %s1419, 8
    %s1421 = sshll.u32 %s1420, 4
    %1422 = dma.done %s740, %s1421
    %v1423 = vld [vmem:[#allocation2] sm:$0xff]
    %v1424 = vld [vmem:[#allocation2 + $0x8] sm:$0xff]
    %v1425 = vld [vmem:[#allocation2 + $0x10] sm:$0xff]
    %v1426 = vld [vmem:[#allocation2 + $0x18] sm:$0xff]
    %v1427 = vld [vmem:[#allocation2 + $0x20] sm:$0xff]
    %v1428 = vld [vmem:[#allocation2 + $0x28] sm:$0xff]
    %v1429 = vld [vmem:[#allocation2 + $0x30] sm:$0xff]
    %v1430 = vld [vmem:[#allocation2 + $0x38] sm:$0xff]
    %v1431 = vld [vmem:[#allocation2 + $0x40] sm:$0xff]
    %v1432 = vld [vmem:[#allocation2 + $0x48] sm:$0xff]
    %v1433 = vld [vmem:[#allocation2 + $0x50] sm:$0xff]
    %v1434 = vld [vmem:[#allocation2 + $0x58] sm:$0xff]
    %v1435 = vld [vmem:[#allocation2 + $0x60] sm:$0xff]
    %v1436 = vld [vmem:[#allocation2 + $0x68] sm:$0xff]
    %v1437 = vld [vmem:[#allocation2 + $0x70] sm:$0xff]
    %v1438 = vld [vmem:[#allocation2 + $0x78] sm:$0xff]
    %v1439 = vpack.c.bf16 %v1423, %v1423
    %v1440 = vpack.c.bf16 %v1424, %v1424
    %v1441 = vpack.c.bf16 %v1425, %v1425
    %v1442 = vpack.c.bf16 %v1426, %v1426
    %v1443 = vpack.c.bf16 %v1427, %v1427
    %v1444 = vpack.c.bf16 %v1428, %v1428
    %v1445 = vpack.c.bf16 %v1429, %v1429
    %v1446 = vpack.c.bf16 %v1430, %v1430
    %v1447 = vpack.c.bf16 %v1431, %v1431
    %v1448 = vpack.c.bf16 %v1432, %v1432
    %v1449 = vpack.c.bf16 %v1433, %v1433
    %v1450 = vpack.c.bf16 %v1434, %v1434
    %v1451 = vpack.c.bf16 %v1435, %v1435
    %v1452 = vpack.c.bf16 %v1436, %v1436
    %v1453 = vpack.c.bf16 %v1437, %v1437
    %v1454 = vpack.c.bf16 %v1438, %v1438
    %v1455 = vld [vmem:[#allocation5] sm:$0xff]
    %v1456 = vld [vmem:[#allocation5 + $0x8] sm:$0xff]
    %v1457 = vld [vmem:[#allocation5 + $0x10] sm:$0xff]
    %v1458 = vld [vmem:[#allocation5 + $0x18] sm:$0xff]
    %v1459 = vld [vmem:[#allocation5 + $0x20] sm:$0xff]
    %v1460 = vld [vmem:[#allocation5 + $0x28] sm:$0xff]
    %v1461 = vld [vmem:[#allocation5 + $0x30] sm:$0xff]
    %v1462 = vld [vmem:[#allocation5 + $0x38] sm:$0xff]
    %v1463 = vld [vmem:[#allocation5 + $0x40] sm:$0xff]
    %v1464 = vld [vmem:[#allocation5 + $0x48] sm:$0xff]
    %v1465 = vld [vmem:[#allocation5 + $0x50] sm:$0xff]
    %v1466 = vld [vmem:[#allocation5 + $0x58] sm:$0xff]
    %v1467 = vld [vmem:[#allocation5 + $0x60] sm:$0xff]
    %v1468 = vld [vmem:[#allocation5 + $0x68] sm:$0xff]
    %v1469 = vld [vmem:[#allocation5 + $0x70] sm:$0xff]
    %v1470 = vld [vmem:[#allocation5 + $0x78] sm:$0xff]
    %v1471 = vld [vmem:[#allocation5 + $0x80] sm:$0xff]
    %v1472 = vld [vmem:[#allocation5 + $0x88] sm:$0xff]
    %v1473 = vld [vmem:[#allocation5 + $0x90] sm:$0xff]
    %v1474 = vld [vmem:[#allocation5 + $0x98] sm:$0xff]
    %v1475 = vld [vmem:[#allocation5 + $0xa0] sm:$0xff]
    %v1476 = vld [vmem:[#allocation5 + $0xa8] sm:$0xff]
    %v1477 = vld [vmem:[#allocation5 + $0xb0] sm:$0xff]
    %v1478 = vld [vmem:[#allocation5 + $0xb8] sm:$0xff]
    %v1479 = vld [vmem:[#allocation5 + $0xc0] sm:$0xff]
    %v1480 = vld [vmem:[#allocation5 + $0xc8] sm:$0xff]
    %v1481 = vld [vmem:[#allocation5 + $0xd0] sm:$0xff]
    %v1482 = vld [vmem:[#allocation5 + $0xd8] sm:$0xff]
    %v1483 = vld [vmem:[#allocation5 + $0xe0] sm:$0xff]
    %v1484 = vld [vmem:[#allocation5 + $0xe8] sm:$0xff]
    %v1485 = vld [vmem:[#allocation5 + $0xf0] sm:$0xff]
    %v1486 = vld [vmem:[#allocation5 + $0xf8] sm:$0xff]
    %v1487 = vld [vmem:[#allocation5 + $0x100] sm:$0xff]
    %v1488 = vld [vmem:[#allocation5 + $0x108] sm:$0xff]
    %v1489 = vld [vmem:[#allocation5 + $0x110] sm:$0xff]
    %v1490 = vld [vmem:[#allocation5 + $0x118] sm:$0xff]
    %v1491 = vld [vmem:[#allocation5 + $0x120] sm:$0xff]
    %v1492 = vld [vmem:[#allocation5 + $0x128] sm:$0xff]
    %v1493 = vld [vmem:[#allocation5 + $0x130] sm:$0xff]
    %v1494 = vld [vmem:[#allocation5 + $0x138] sm:$0xff]
    %v1495 = vld [vmem:[#allocation5 + $0x140] sm:$0xff]
    %v1496 = vld [vmem:[#allocation5 + $0x148] sm:$0xff]
    %v1497 = vld [vmem:[#allocation5 + $0x150] sm:$0xff]
    %v1498 = vld [vmem:[#allocation5 + $0x158] sm:$0xff]
    %v1499 = vld [vmem:[#allocation5 + $0x160] sm:$0xff]
    %v1500 = vld [vmem:[#allocation5 + $0x168] sm:$0xff]
    %v1501 = vld [vmem:[#allocation5 + $0x170] sm:$0xff]
    %v1502 = vld [vmem:[#allocation5 + $0x178] sm:$0xff]
    %v1503 = vld [vmem:[#allocation5 + $0x180] sm:$0xff]
    %v1504 = vld [vmem:[#allocation5 + $0x188] sm:$0xff]
    %v1505 = vld [vmem:[#allocation5 + $0x190] sm:$0xff]
    %v1506 = vld [vmem:[#allocation5 + $0x198] sm:$0xff]
    %v1507 = vld [vmem:[#allocation5 + $0x1a0] sm:$0xff]
    %v1508 = vld [vmem:[#allocation5 + $0x1a8] sm:$0xff]
    %v1509 = vld [vmem:[#allocation5 + $0x1b0] sm:$0xff]
    %v1510 = vld [vmem:[#allocation5 + $0x1b8] sm:$0xff]
    %v1511 = vld [vmem:[#allocation5 + $0x1c0] sm:$0xff]
    %v1512 = vld [vmem:[#allocation5 + $0x1c8] sm:$0xff]
    %v1513 = vld [vmem:[#allocation5 + $0x1d0] sm:$0xff]
    %v1514 = vld [vmem:[#allocation5 + $0x1d8] sm:$0xff]
    %v1515 = vld [vmem:[#allocation5 + $0x1e0] sm:$0xff]
    %v1516 = vld [vmem:[#allocation5 + $0x1e8] sm:$0xff]
    %v1517 = vld [vmem:[#allocation5 + $0x1f0] sm:$0xff]
    %v1518 = vld [vmem:[#allocation5 + $0x1f8] sm:$0xff]
    %v1519 = vld [vmem:[#allocation5 + $0x200] sm:$0xff]
    %v1520 = vld [vmem:[#allocation5 + $0x208] sm:$0xff]
    %v1521 = vld [vmem:[#allocation5 + $0x210] sm:$0xff]
    %v1522 = vld [vmem:[#allocation5 + $0x218] sm:$0xff]
    %v1523 = vld [vmem:[#allocation5 + $0x220] sm:$0xff]
    %v1524 = vld [vmem:[#allocation5 + $0x228] sm:$0xff]
    %v1525 = vld [vmem:[#allocation5 + $0x230] sm:$0xff]
    %v1526 = vld [vmem:[#allocation5 + $0x238] sm:$0xff]
    %v1527 = vld [vmem:[#allocation5 + $0x240] sm:$0xff]
    %v1528 = vld [vmem:[#allocation5 + $0x248] sm:$0xff]
    %v1529 = vld [vmem:[#allocation5 + $0x250] sm:$0xff]
    %v1530 = vld [vmem:[#allocation5 + $0x258] sm:$0xff]
    %v1531 = vld [vmem:[#allocation5 + $0x260] sm:$0xff]
    %v1532 = vld [vmem:[#allocation5 + $0x268] sm:$0xff]
    %v1533 = vld [vmem:[#allocation5 + $0x270] sm:$0xff]
    %v1534 = vld [vmem:[#allocation5 + $0x278] sm:$0xff]
    %v1535 = vld [vmem:[#allocation5 + $0x280] sm:$0xff]
    %v1536 = vld [vmem:[#allocation5 + $0x288] sm:$0xff]
    %v1537 = vld [vmem:[#allocation5 + $0x290] sm:$0xff]
    %v1538 = vld [vmem:[#allocation5 + $0x298] sm:$0xff]
    %v1539 = vld [vmem:[#allocation5 + $0x2a0] sm:$0xff]
    %v1540 = vld [vmem:[#allocation5 + $0x2a8] sm:$0xff]
    %v1541 = vld [vmem:[#allocation5 + $0x2b0] sm:$0xff]
    %v1542 = vld [vmem:[#allocation5 + $0x2b8] sm:$0xff]
    %v1543 = vld [vmem:[#allocation5 + $0x2c0] sm:$0xff]
    %v1544 = vld [vmem:[#allocation5 + $0x2c8] sm:$0xff]
    %v1545 = vld [vmem:[#allocation5 + $0x2d0] sm:$0xff]
    %v1546 = vld [vmem:[#allocation5 + $0x2d8] sm:$0xff]
    %v1547 = vld [vmem:[#allocation5 + $0x2e0] sm:$0xff]
    %v1548 = vld [vmem:[#allocation5 + $0x2e8] sm:$0xff]
    %v1549 = vld [vmem:[#allocation5 + $0x2f0] sm:$0xff]
    %v1550 = vld [vmem:[#allocation5 + $0x2f8] sm:$0xff]
    %v1551 = vld [vmem:[#allocation5 + $0x300] sm:$0xff]
    %v1552 = vld [vmem:[#allocation5 + $0x308] sm:$0xff]
    %v1553 = vld [vmem:[#allocation5 + $0x310] sm:$0xff]
    %v1554 = vld [vmem:[#allocation5 + $0x318] sm:$0xff]
    %v1555 = vld [vmem:[#allocation5 + $0x320] sm:$0xff]
    %v1556 = vld [vmem:[#allocation5 + $0x328] sm:$0xff]
    %v1557 = vld [vmem:[#allocation5 + $0x330] sm:$0xff]
    %v1558 = vld [vmem:[#allocation5 + $0x338] sm:$0xff]
    %v1559 = vld [vmem:[#allocation5 + $0x340] sm:$0xff]
    %v1560 = vld [vmem:[#allocation5 + $0x348] sm:$0xff]
    %v1561 = vld [vmem:[#allocation5 + $0x350] sm:$0xff]
    %v1562 = vld [vmem:[#allocation5 + $0x358] sm:$0xff]
    %v1563 = vld [vmem:[#allocation5 + $0x360] sm:$0xff]
    %v1564 = vld [vmem:[#allocation5 + $0x368] sm:$0xff]
    %v1565 = vld [vmem:[#allocation5 + $0x370] sm:$0xff]
    %v1566 = vld [vmem:[#allocation5 + $0x378] sm:$0xff]
    %v1567 = vld [vmem:[#allocation5 + $0x380] sm:$0xff]
    %v1568 = vld [vmem:[#allocation5 + $0x388] sm:$0xff]
    %v1569 = vld [vmem:[#allocation5 + $0x390] sm:$0xff]
    %v1570 = vld [vmem:[#allocation5 + $0x398] sm:$0xff]
    %v1571 = vld [vmem:[#allocation5 + $0x3a0] sm:$0xff]
    %v1572 = vld [vmem:[#allocation5 + $0x3a8] sm:$0xff]
    %v1573 = vld [vmem:[#allocation5 + $0x3b0] sm:$0xff]
    %v1574 = vld [vmem:[#allocation5 + $0x3b8] sm:$0xff]
    %v1575 = vld [vmem:[#allocation5 + $0x3c0] sm:$0xff]
    %v1576 = vld [vmem:[#allocation5 + $0x3c8] sm:$0xff]
    %v1577 = vld [vmem:[#allocation5 + $0x3d0] sm:$0xff]
    %v1578 = vld [vmem:[#allocation5 + $0x3d8] sm:$0xff]
    %v1579 = vld [vmem:[#allocation5 + $0x3e0] sm:$0xff]
    %v1580 = vld [vmem:[#allocation5 + $0x3e8] sm:$0xff]
    %v1581 = vld [vmem:[#allocation5 + $0x3f0] sm:$0xff]
    %v1582 = vld [vmem:[#allocation5 + $0x3f8] sm:$0xff]
    %v1583 = vld [vmem:[#allocation5 + $0x400] sm:$0xff]
    %v1584 = vld [vmem:[#allocation5 + $0x408] sm:$0xff]
    %v1585 = vld [vmem:[#allocation5 + $0x410] sm:$0xff]
    %v1586 = vld [vmem:[#allocation5 + $0x418] sm:$0xff]
    %v1587 = vld [vmem:[#allocation5 + $0x420] sm:$0xff]
    %v1588 = vld [vmem:[#allocation5 + $0x428] sm:$0xff]
    %v1589 = vld [vmem:[#allocation5 + $0x430] sm:$0xff]
    %v1590 = vld [vmem:[#allocation5 + $0x438] sm:$0xff]
    %v1591 = vld [vmem:[#allocation5 + $0x440] sm:$0xff]
    %v1592 = vld [vmem:[#allocation5 + $0x448] sm:$0xff]
    %v1593 = vld [vmem:[#allocation5 + $0x450] sm:$0xff]
    %v1594 = vld [vmem:[#allocation5 + $0x458] sm:$0xff]
    %v1595 = vld [vmem:[#allocation5 + $0x460] sm:$0xff]
    %v1596 = vld [vmem:[#allocation5 + $0x468] sm:$0xff]
    %v1597 = vld [vmem:[#allocation5 + $0x470] sm:$0xff]
    %v1598 = vld [vmem:[#allocation5 + $0x478] sm:$0xff]
    %v1599 = vld [vmem:[#allocation5 + $0x480] sm:$0xff]
    %v1600 = vld [vmem:[#allocation5 + $0x488] sm:$0xff]
    %v1601 = vld [vmem:[#allocation5 + $0x490] sm:$0xff]
    %v1602 = vld [vmem:[#allocation5 + $0x498] sm:$0xff]
    %v1603 = vld [vmem:[#allocation5 + $0x4a0] sm:$0xff]
    %v1604 = vld [vmem:[#allocation5 + $0x4a8] sm:$0xff]
    %v1605 = vld [vmem:[#allocation5 + $0x4b0] sm:$0xff]
    %v1606 = vld [vmem:[#allocation5 + $0x4b8] sm:$0xff]
    %v1607 = vld [vmem:[#allocation5 + $0x4c0] sm:$0xff]
    %v1608 = vld [vmem:[#allocation5 + $0x4c8] sm:$0xff]
    %v1609 = vld [vmem:[#allocation5 + $0x4d0] sm:$0xff]
    %v1610 = vld [vmem:[#allocation5 + $0x4d8] sm:$0xff]
    %v1611 = vld [vmem:[#allocation5 + $0x4e0] sm:$0xff]
    %v1612 = vld [vmem:[#allocation5 + $0x4e8] sm:$0xff]
    %v1613 = vld [vmem:[#allocation5 + $0x4f0] sm:$0xff]
    %v1614 = vld [vmem:[#allocation5 + $0x4f8] sm:$0xff]
    %v1615 = vld [vmem:[#allocation5 + $0x500] sm:$0xff]
    %v1616 = vld [vmem:[#allocation5 + $0x508] sm:$0xff]
    %v1617 = vld [vmem:[#allocation5 + $0x510] sm:$0xff]
    %v1618 = vld [vmem:[#allocation5 + $0x518] sm:$0xff]
    %v1619 = vld [vmem:[#allocation5 + $0x520] sm:$0xff]
    %v1620 = vld [vmem:[#allocation5 + $0x528] sm:$0xff]
    %v1621 = vld [vmem:[#allocation5 + $0x530] sm:$0xff]
    %v1622 = vld [vmem:[#allocation5 + $0x538] sm:$0xff]
    %v1623 = vld [vmem:[#allocation5 + $0x540] sm:$0xff]
    %v1624 = vld [vmem:[#allocation5 + $0x548] sm:$0xff]
    %v1625 = vld [vmem:[#allocation5 + $0x550] sm:$0xff]
    %v1626 = vld [vmem:[#allocation5 + $0x558] sm:$0xff]
    %v1627 = vld [vmem:[#allocation5 + $0x560] sm:$0xff]
    %v1628 = vld [vmem:[#allocation5 + $0x568] sm:$0xff]
    %v1629 = vld [vmem:[#allocation5 + $0x570] sm:$0xff]
    %v1630 = vld [vmem:[#allocation5 + $0x578] sm:$0xff]
    %v1631 = vld [vmem:[#allocation5 + $0x580] sm:$0xff]
    %v1632 = vld [vmem:[#allocation5 + $0x588] sm:$0xff]
    %v1633 = vld [vmem:[#allocation5 + $0x590] sm:$0xff]
    %v1634 = vld [vmem:[#allocation5 + $0x598] sm:$0xff]
    %v1635 = vld [vmem:[#allocation5 + $0x5a0] sm:$0xff]
    %v1636 = vld [vmem:[#allocation5 + $0x5a8] sm:$0xff]
    %v1637 = vld [vmem:[#allocation5 + $0x5b0] sm:$0xff]
    %v1638 = vld [vmem:[#allocation5 + $0x5b8] sm:$0xff]
    %v1639 = vld [vmem:[#allocation5 + $0x5c0] sm:$0xff]
    %v1640 = vld [vmem:[#allocation5 + $0x5c8] sm:$0xff]
    %v1641 = vld [vmem:[#allocation5 + $0x5d0] sm:$0xff]
    %v1642 = vld [vmem:[#allocation5 + $0x5d8] sm:$0xff]
    %v1643 = vld [vmem:[#allocation5 + $0x5e0] sm:$0xff]
    %v1644 = vld [vmem:[#allocation5 + $0x5e8] sm:$0xff]
    %v1645 = vld [vmem:[#allocation5 + $0x5f0] sm:$0xff]
    %v1646 = vld [vmem:[#allocation5 + $0x5f8] sm:$0xff]
    %v1647 = vld [vmem:[#allocation5 + $0x600] sm:$0xff]
    %v1648 = vld [vmem:[#allocation5 + $0x608] sm:$0xff]
    %v1649 = vld [vmem:[#allocation5 + $0x610] sm:$0xff]
    %v1650 = vld [vmem:[#allocation5 + $0x618] sm:$0xff]
    %v1651 = vld [vmem:[#allocation5 + $0x620] sm:$0xff]
    %v1652 = vld [vmem:[#allocation5 + $0x628] sm:$0xff]
    %v1653 = vld [vmem:[#allocation5 + $0x630] sm:$0xff]
    %v1654 = vld [vmem:[#allocation5 + $0x638] sm:$0xff]
    %v1655 = vld [vmem:[#allocation5 + $0x640] sm:$0xff]
    %v1656 = vld [vmem:[#allocation5 + $0x648] sm:$0xff]
    %v1657 = vld [vmem:[#allocation5 + $0x650] sm:$0xff]
    %v1658 = vld [vmem:[#allocation5 + $0x658] sm:$0xff]
    %v1659 = vld [vmem:[#allocation5 + $0x660] sm:$0xff]
    %v1660 = vld [vmem:[#allocation5 + $0x668] sm:$0xff]
    %v1661 = vld [vmem:[#allocation5 + $0x670] sm:$0xff]
    %v1662 = vld [vmem:[#allocation5 + $0x678] sm:$0xff]
    %v1663 = vld [vmem:[#allocation5 + $0x680] sm:$0xff]
    %v1664 = vld [vmem:[#allocation5 + $0x688] sm:$0xff]
    %v1665 = vld [vmem:[#allocation5 + $0x690] sm:$0xff]
    %v1666 = vld [vmem:[#allocation5 + $0x698] sm:$0xff]
    %v1667 = vld [vmem:[#allocation5 + $0x6a0] sm:$0xff]
    %v1668 = vld [vmem:[#allocation5 + $0x6a8] sm:$0xff]
    %v1669 = vld [vmem:[#allocation5 + $0x6b0] sm:$0xff]
    %v1670 = vld [vmem:[#allocation5 + $0x6b8] sm:$0xff]
    %v1671 = vld [vmem:[#allocation5 + $0x6c0] sm:$0xff]
    %v1672 = vld [vmem:[#allocation5 + $0x6c8] sm:$0xff]
    %v1673 = vld [vmem:[#allocation5 + $0x6d0] sm:$0xff]
    %v1674 = vld [vmem:[#allocation5 + $0x6d8] sm:$0xff]
    %v1675 = vld [vmem:[#allocation5 + $0x6e0] sm:$0xff]
    %v1676 = vld [vmem:[#allocation5 + $0x6e8] sm:$0xff]
    %v1677 = vld [vmem:[#allocation5 + $0x6f0] sm:$0xff]
    %v1678 = vld [vmem:[#allocation5 + $0x6f8] sm:$0xff]
    %v1679 = vld [vmem:[#allocation5 + $0x700] sm:$0xff]
    %v1680 = vld [vmem:[#allocation5 + $0x708] sm:$0xff]
    %v1681 = vld [vmem:[#allocation5 + $0x710] sm:$0xff]
    %v1682 = vld [vmem:[#allocation5 + $0x718] sm:$0xff]
    %v1683 = vld [vmem:[#allocation5 + $0x720] sm:$0xff]
    %v1684 = vld [vmem:[#allocation5 + $0x728] sm:$0xff]
    %v1685 = vld [vmem:[#allocation5 + $0x730] sm:$0xff]
    %v1686 = vld [vmem:[#allocation5 + $0x738] sm:$0xff]
    %v1687 = vld [vmem:[#allocation5 + $0x740] sm:$0xff]
    %v1688 = vld [vmem:[#allocation5 + $0x748] sm:$0xff]
    %v1689 = vld [vmem:[#allocation5 + $0x750] sm:$0xff]
    %v1690 = vld [vmem:[#allocation5 + $0x758] sm:$0xff]
    %v1691 = vld [vmem:[#allocation5 + $0x760] sm:$0xff]
    %v1692 = vld [vmem:[#allocation5 + $0x768] sm:$0xff]
    %v1693 = vld [vmem:[#allocation5 + $0x770] sm:$0xff]
    %v1694 = vld [vmem:[#allocation5 + $0x778] sm:$0xff]
    %v1695 = vld [vmem:[#allocation5 + $0x780] sm:$0xff]
    %v1696 = vld [vmem:[#allocation5 + $0x788] sm:$0xff]
    %v1697 = vld [vmem:[#allocation5 + $0x790] sm:$0xff]
    %v1698 = vld [vmem:[#allocation5 + $0x798] sm:$0xff]
    %v1699 = vld [vmem:[#allocation5 + $0x7a0] sm:$0xff]
    %v1700 = vld [vmem:[#allocation5 + $0x7a8] sm:$0xff]
    %v1701 = vld [vmem:[#allocation5 + $0x7b0] sm:$0xff]
    %v1702 = vld [vmem:[#allocation5 + $0x7b8] sm:$0xff]
    %v1703 = vld [vmem:[#allocation5 + $0x7c0] sm:$0xff]
    %v1704 = vld [vmem:[#allocation5 + $0x7c8] sm:$0xff]
    %v1705 = vld [vmem:[#allocation5 + $0x7d0] sm:$0xff]
    %v1706 = vld [vmem:[#allocation5 + $0x7d8] sm:$0xff]
    %v1707 = vld [vmem:[#allocation5 + $0x7e0] sm:$0xff]
    %v1708 = vld [vmem:[#allocation5 + $0x7e8] sm:$0xff]
    %v1709 = vld [vmem:[#allocation5 + $0x7f0] sm:$0xff]
    %v1710 = vld [vmem:[#allocation5 + $0x7f8] sm:$0xff]
    %v1711 = vld [vmem:[#allocation5 + $0x800] sm:$0xff]
    %v1712 = vld [vmem:[#allocation5 + $0x808] sm:$0xff]
    %v1713 = vld [vmem:[#allocation5 + $0x810] sm:$0xff]
    %v1714 = vld [vmem:[#allocation5 + $0x818] sm:$0xff]
    %v1715 = vld [vmem:[#allocation5 + $0x820] sm:$0xff]
    %v1716 = vld [vmem:[#allocation5 + $0x828] sm:$0xff]
    %v1717 = vld [vmem:[#allocation5 + $0x830] sm:$0xff]
    %v1718 = vld [vmem:[#allocation5 + $0x838] sm:$0xff]
    %v1719 = vld [vmem:[#allocation5 + $0x840] sm:$0xff]
    %v1720 = vld [vmem:[#allocation5 + $0x848] sm:$0xff]
    %v1721 = vld [vmem:[#allocation5 + $0x850] sm:$0xff]
    %v1722 = vld [vmem:[#allocation5 + $0x858] sm:$0xff]
    %v1723 = vld [vmem:[#allocation5 + $0x860] sm:$0xff]
    %v1724 = vld [vmem:[#allocation5 + $0x868] sm:$0xff]
    %v1725 = vld [vmem:[#allocation5 + $0x870] sm:$0xff]
    %v1726 = vld [vmem:[#allocation5 + $0x878] sm:$0xff]
    %v1727 = vld [vmem:[#allocation5 + $0x880] sm:$0xff]
    %v1728 = vld [vmem:[#allocation5 + $0x888] sm:$0xff]
    %v1729 = vld [vmem:[#allocation5 + $0x890] sm:$0xff]
    %v1730 = vld [vmem:[#allocation5 + $0x898] sm:$0xff]
    %v1731 = vld [vmem:[#allocation5 + $0x8a0] sm:$0xff]
    %v1732 = vld [vmem:[#allocation5 + $0x8a8] sm:$0xff]
    %v1733 = vld [vmem:[#allocation5 + $0x8b0] sm:$0xff]
    %v1734 = vld [vmem:[#allocation5 + $0x8b8] sm:$0xff]
    %v1735 = vld [vmem:[#allocation5 + $0x8c0] sm:$0xff]
    %v1736 = vld [vmem:[#allocation5 + $0x8c8] sm:$0xff]
    %v1737 = vld [vmem:[#allocation5 + $0x8d0] sm:$0xff]
    %v1738 = vld [vmem:[#allocation5 + $0x8d8] sm:$0xff]
    %v1739 = vld [vmem:[#allocation5 + $0x8e0] sm:$0xff]
    %v1740 = vld [vmem:[#allocation5 + $0x8e8] sm:$0xff]
    %v1741 = vld [vmem:[#allocation5 + $0x8f0] sm:$0xff]
    %v1742 = vld [vmem:[#allocation5 + $0x8f8] sm:$0xff]
    %v1743 = vld [vmem:[#allocation5 + $0x900] sm:$0xff]
    %v1744 = vld [vmem:[#allocation5 + $0x908] sm:$0xff]
    %v1745 = vld [vmem:[#allocation5 + $0x910] sm:$0xff]
    %v1746 = vld [vmem:[#allocation5 + $0x918] sm:$0xff]
    %v1747 = vld [vmem:[#allocation5 + $0x920] sm:$0xff]
    %v1748 = vld [vmem:[#allocation5 + $0x928] sm:$0xff]
    %v1749 = vld [vmem:[#allocation5 + $0x930] sm:$0xff]
    %v1750 = vld [vmem:[#allocation5 + $0x938] sm:$0xff]
    %v1751 = vld [vmem:[#allocation5 + $0x940] sm:$0xff]
    %v1752 = vld [vmem:[#allocation5 + $0x948] sm:$0xff]
    %v1753 = vld [vmem:[#allocation5 + $0x950] sm:$0xff]
    %v1754 = vld [vmem:[#allocation5 + $0x958] sm:$0xff]
    %v1755 = vld [vmem:[#allocation5 + $0x960] sm:$0xff]
    %v1756 = vld [vmem:[#allocation5 + $0x968] sm:$0xff]
    %v1757 = vld [vmem:[#allocation5 + $0x970] sm:$0xff]
    %v1758 = vld [vmem:[#allocation5 + $0x978] sm:$0xff]
    %v1759 = vld [vmem:[#allocation5 + $0x980] sm:$0xff]
    %v1760 = vld [vmem:[#allocation5 + $0x988] sm:$0xff]
    %v1761 = vld [vmem:[#allocation5 + $0x990] sm:$0xff]
    %v1762 = vld [vmem:[#allocation5 + $0x998] sm:$0xff]
    %v1763 = vld [vmem:[#allocation5 + $0x9a0] sm:$0xff]
    %v1764 = vld [vmem:[#allocation5 + $0x9a8] sm:$0xff]
    %v1765 = vld [vmem:[#allocation5 + $0x9b0] sm:$0xff]
    %v1766 = vld [vmem:[#allocation5 + $0x9b8] sm:$0xff]
    %v1767 = vld [vmem:[#allocation5 + $0x9c0] sm:$0xff]
    %v1768 = vld [vmem:[#allocation5 + $0x9c8] sm:$0xff]
    %v1769 = vld [vmem:[#allocation5 + $0x9d0] sm:$0xff]
    %v1770 = vld [vmem:[#allocation5 + $0x9d8] sm:$0xff]
    %v1771 = vld [vmem:[#allocation5 + $0x9e0] sm:$0xff]
    %v1772 = vld [vmem:[#allocation5 + $0x9e8] sm:$0xff]
    %v1773 = vld [vmem:[#allocation5 + $0x9f0] sm:$0xff]
    %v1774 = vld [vmem:[#allocation5 + $0x9f8] sm:$0xff]
    %v1775 = vld [vmem:[#allocation5 + $0xa00] sm:$0xff]
    %v1776 = vld [vmem:[#allocation5 + $0xa08] sm:$0xff]
    %v1777 = vld [vmem:[#allocation5 + $0xa10] sm:$0xff]
    %v1778 = vld [vmem:[#allocation5 + $0xa18] sm:$0xff]
    %v1779 = vld [vmem:[#allocation5 + $0xa20] sm:$0xff]
    %v1780 = vld [vmem:[#allocation5 + $0xa28] sm:$0xff]
    %v1781 = vld [vmem:[#allocation5 + $0xa30] sm:$0xff]
    %v1782 = vld [vmem:[#allocation5 + $0xa38] sm:$0xff]
    %v1783 = vld [vmem:[#allocation5 + $0xa40] sm:$0xff]
    %v1784 = vld [vmem:[#allocation5 + $0xa48] sm:$0xff]
    %v1785 = vld [vmem:[#allocation5 + $0xa50] sm:$0xff]
    %v1786 = vld [vmem:[#allocation5 + $0xa58] sm:$0xff]
    %v1787 = vld [vmem:[#allocation5 + $0xa60] sm:$0xff]
    %v1788 = vld [vmem:[#allocation5 + $0xa68] sm:$0xff]
    %v1789 = vld [vmem:[#allocation5 + $0xa70] sm:$0xff]
    %v1790 = vld [vmem:[#allocation5 + $0xa78] sm:$0xff]
    %v1791 = vld [vmem:[#allocation5 + $0xa80] sm:$0xff]
    %v1792 = vld [vmem:[#allocation5 + $0xa88] sm:$0xff]
    %v1793 = vld [vmem:[#allocation5 + $0xa90] sm:$0xff]
    %v1794 = vld [vmem:[#allocation5 + $0xa98] sm:$0xff]
    %v1795 = vld [vmem:[#allocation5 + $0xaa0] sm:$0xff]
    %v1796 = vld [vmem:[#allocation5 + $0xaa8] sm:$0xff]
    %v1797 = vld [vmem:[#allocation5 + $0xab0] sm:$0xff]
    %v1798 = vld [vmem:[#allocation5 + $0xab8] sm:$0xff]
    %v1799 = vld [vmem:[#allocation5 + $0xac0] sm:$0xff]
    %v1800 = vld [vmem:[#allocation5 + $0xac8] sm:$0xff]
    %v1801 = vld [vmem:[#allocation5 + $0xad0] sm:$0xff]
    %v1802 = vld [vmem:[#allocation5 + $0xad8] sm:$0xff]
    %v1803 = vld [vmem:[#allocation5 + $0xae0] sm:$0xff]
    %v1804 = vld [vmem:[#allocation5 + $0xae8] sm:$0xff]
    %v1805 = vld [vmem:[#allocation5 + $0xaf0] sm:$0xff]
    %v1806 = vld [vmem:[#allocation5 + $0xaf8] sm:$0xff]
    %v1807 = vld [vmem:[#allocation5 + $0xb00] sm:$0xff]
    %v1808 = vld [vmem:[#allocation5 + $0xb08] sm:$0xff]
    %v1809 = vld [vmem:[#allocation5 + $0xb10] sm:$0xff]
    %v1810 = vld [vmem:[#allocation5 + $0xb18] sm:$0xff]
    %v1811 = vld [vmem:[#allocation5 + $0xb20] sm:$0xff]
    %v1812 = vld [vmem:[#allocation5 + $0xb28] sm:$0xff]
    %v1813 = vld [vmem:[#allocation5 + $0xb30] sm:$0xff]
    %v1814 = vld [vmem:[#allocation5 + $0xb38] sm:$0xff]
    %v1815 = vld [vmem:[#allocation5 + $0xb40] sm:$0xff]
    %v1816 = vld [vmem:[#allocation5 + $0xb48] sm:$0xff]
    %v1817 = vld [vmem:[#allocation5 + $0xb50] sm:$0xff]
    %v1818 = vld [vmem:[#allocation5 + $0xb58] sm:$0xff]
    %v1819 = vld [vmem:[#allocation5 + $0xb60] sm:$0xff]
    %v1820 = vld [vmem:[#allocation5 + $0xb68] sm:$0xff]
    %v1821 = vld [vmem:[#allocation5 + $0xb70] sm:$0xff]
    %v1822 = vld [vmem:[#allocation5 + $0xb78] sm:$0xff]
    %v1823 = vld [vmem:[#allocation5 + $0xb80] sm:$0xff]
    %v1824 = vld [vmem:[#allocation5 + $0xb88] sm:$0xff]
    %v1825 = vld [vmem:[#allocation5 + $0xb90] sm:$0xff]
    %v1826 = vld [vmem:[#allocation5 + $0xb98] sm:$0xff]
    %v1827 = vld [vmem:[#allocation5 + $0xba0] sm:$0xff]
    %v1828 = vld [vmem:[#allocation5 + $0xba8] sm:$0xff]
    %v1829 = vld [vmem:[#allocation5 + $0xbb0] sm:$0xff]
    %v1830 = vld [vmem:[#allocation5 + $0xbb8] sm:$0xff]
    %v1831 = vld [vmem:[#allocation5 + $0xbc0] sm:$0xff]
    %v1832 = vld [vmem:[#allocation5 + $0xbc8] sm:$0xff]
    %v1833 = vld [vmem:[#allocation5 + $0xbd0] sm:$0xff]
    %v1834 = vld [vmem:[#allocation5 + $0xbd8] sm:$0xff]
    %v1835 = vld [vmem:[#allocation5 + $0xbe0] sm:$0xff]
    %v1836 = vld [vmem:[#allocation5 + $0xbe8] sm:$0xff]
    %v1837 = vld [vmem:[#allocation5 + $0xbf0] sm:$0xff]
    %v1838 = vld [vmem:[#allocation5 + $0xbf8] sm:$0xff]
    %v1839 = vld [vmem:[#allocation5 + $0xc00] sm:$0xff]
    %v1840 = vld [vmem:[#allocation5 + $0xc08] sm:$0xff]
    %v1841 = vld [vmem:[#allocation5 + $0xc10] sm:$0xff]
    %v1842 = vld [vmem:[#allocation5 + $0xc18] sm:$0xff]
    %v1843 = vld [vmem:[#allocation5 + $0xc20] sm:$0xff]
    %v1844 = vld [vmem:[#allocation5 + $0xc28] sm:$0xff]
    %v1845 = vld [vmem:[#allocation5 + $0xc30] sm:$0xff]
    %v1846 = vld [vmem:[#allocation5 + $0xc38] sm:$0xff]
    %v1847 = vld [vmem:[#allocation5 + $0xc40] sm:$0xff]
    %v1848 = vld [vmem:[#allocation5 + $0xc48] sm:$0xff]
    %v1849 = vld [vmem:[#allocation5 + $0xc50] sm:$0xff]
    %v1850 = vld [vmem:[#allocation5 + $0xc58] sm:$0xff]
    %v1851 = vld [vmem:[#allocation5 + $0xc60] sm:$0xff]
    %v1852 = vld [vmem:[#allocation5 + $0xc68] sm:$0xff]
    %v1853 = vld [vmem:[#allocation5 + $0xc70] sm:$0xff]
    %v1854 = vld [vmem:[#allocation5 + $0xc78] sm:$0xff]
    %v1855 = vld [vmem:[#allocation5 + $0xc80] sm:$0xff]
    %v1856 = vld [vmem:[#allocation5 + $0xc88] sm:$0xff]
    %v1857 = vld [vmem:[#allocation5 + $0xc90] sm:$0xff]
    %v1858 = vld [vmem:[#allocation5 + $0xc98] sm:$0xff]
    %v1859 = vld [vmem:[#allocation5 + $0xca0] sm:$0xff]
    %v1860 = vld [vmem:[#allocation5 + $0xca8] sm:$0xff]
    %v1861 = vld [vmem:[#allocation5 + $0xcb0] sm:$0xff]
    %v1862 = vld [vmem:[#allocation5 + $0xcb8] sm:$0xff]
    %v1863 = vld [vmem:[#allocation5 + $0xcc0] sm:$0xff]
    %v1864 = vld [vmem:[#allocation5 + $0xcc8] sm:$0xff]
    %v1865 = vld [vmem:[#allocation5 + $0xcd0] sm:$0xff]
    %v1866 = vld [vmem:[#allocation5 + $0xcd8] sm:$0xff]
    %v1867 = vld [vmem:[#allocation5 + $0xce0] sm:$0xff]
    %v1868 = vld [vmem:[#allocation5 + $0xce8] sm:$0xff]
    %v1869 = vld [vmem:[#allocation5 + $0xcf0] sm:$0xff]
    %v1870 = vld [vmem:[#allocation5 + $0xcf8] sm:$0xff]
    %v1871 = vld [vmem:[#allocation5 + $0xd00] sm:$0xff]
    %v1872 = vld [vmem:[#allocation5 + $0xd08] sm:$0xff]
    %v1873 = vld [vmem:[#allocation5 + $0xd10] sm:$0xff]
    %v1874 = vld [vmem:[#allocation5 + $0xd18] sm:$0xff]
    %v1875 = vld [vmem:[#allocation5 + $0xd20] sm:$0xff]
    %v1876 = vld [vmem:[#allocation5 + $0xd28] sm:$0xff]
    %v1877 = vld [vmem:[#allocation5 + $0xd30] sm:$0xff]
    %v1878 = vld [vmem:[#allocation5 + $0xd38] sm:$0xff]
    %v1879 = vld [vmem:[#allocation5 + $0xd40] sm:$0xff]
    %v1880 = vld [vmem:[#allocation5 + $0xd48] sm:$0xff]
    %v1881 = vld [vmem:[#allocation5 + $0xd50] sm:$0xff]
    %v1882 = vld [vmem:[#allocation5 + $0xd58] sm:$0xff]
    %v1883 = vld [vmem:[#allocation5 + $0xd60] sm:$0xff]
    %v1884 = vld [vmem:[#allocation5 + $0xd68] sm:$0xff]
    %v1885 = vld [vmem:[#allocation5 + $0xd70] sm:$0xff]
    %v1886 = vld [vmem:[#allocation5 + $0xd78] sm:$0xff]
    %v1887 = vld [vmem:[#allocation5 + $0xd80] sm:$0xff]
    %v1888 = vld [vmem:[#allocation5 + $0xd88] sm:$0xff]
    %v1889 = vld [vmem:[#allocation5 + $0xd90] sm:$0xff]
    %v1890 = vld [vmem:[#allocation5 + $0xd98] sm:$0xff]
    %v1891 = vld [vmem:[#allocation5 + $0xda0] sm:$0xff]
    %v1892 = vld [vmem:[#allocation5 + $0xda8] sm:$0xff]
    %v1893 = vld [vmem:[#allocation5 + $0xdb0] sm:$0xff]
    %v1894 = vld [vmem:[#allocation5 + $0xdb8] sm:$0xff]
    %v1895 = vld [vmem:[#allocation5 + $0xdc0] sm:$0xff]
    %v1896 = vld [vmem:[#allocation5 + $0xdc8] sm:$0xff]
    %v1897 = vld [vmem:[#allocation5 + $0xdd0] sm:$0xff]
    %v1898 = vld [vmem:[#allocation5 + $0xdd8] sm:$0xff]
    %v1899 = vld [vmem:[#allocation5 + $0xde0] sm:$0xff]
    %v1900 = vld [vmem:[#allocation5 + $0xde8] sm:$0xff]
    %v1901 = vld [vmem:[#allocation5 + $0xdf0] sm:$0xff]
    %v1902 = vld [vmem:[#allocation5 + $0xdf8] sm:$0xff]
    %v1903 = vld [vmem:[#allocation5 + $0xe00] sm:$0xff]
    %v1904 = vld [vmem:[#allocation5 + $0xe08] sm:$0xff]
    %v1905 = vld [vmem:[#allocation5 + $0xe10] sm:$0xff]
    %v1906 = vld [vmem:[#allocation5 + $0xe18] sm:$0xff]
    %v1907 = vld [vmem:[#allocation5 + $0xe20] sm:$0xff]
    %v1908 = vld [vmem:[#allocation5 + $0xe28] sm:$0xff]
    %v1909 = vld [vmem:[#allocation5 + $0xe30] sm:$0xff]
    %v1910 = vld [vmem:[#allocation5 + $0xe38] sm:$0xff]
    %v1911 = vld [vmem:[#allocation5 + $0xe40] sm:$0xff]
    %v1912 = vld [vmem:[#allocation5 + $0xe48] sm:$0xff]
    %v1913 = vld [vmem:[#allocation5 + $0xe50] sm:$0xff]
    %v1914 = vld [vmem:[#allocation5 + $0xe58] sm:$0xff]
    %v1915 = vld [vmem:[#allocation5 + $0xe60] sm:$0xff]
    %v1916 = vld [vmem:[#allocation5 + $0xe68] sm:$0xff]
    %v1917 = vld [vmem:[#allocation5 + $0xe70] sm:$0xff]
    %v1918 = vld [vmem:[#allocation5 + $0xe78] sm:$0xff]
    %v1919 = vld [vmem:[#allocation5 + $0xe80] sm:$0xff]
    %v1920 = vld [vmem:[#allocation5 + $0xe88] sm:$0xff]
    %v1921 = vld [vmem:[#allocation5 + $0xe90] sm:$0xff]
    %v1922 = vld [vmem:[#allocation5 + $0xe98] sm:$0xff]
    %v1923 = vld [vmem:[#allocation5 + $0xea0] sm:$0xff]
    %v1924 = vld [vmem:[#allocation5 + $0xea8] sm:$0xff]
    %v1925 = vld [vmem:[#allocation5 + $0xeb0] sm:$0xff]
    %v1926 = vld [vmem:[#allocation5 + $0xeb8] sm:$0xff]
    %v1927 = vld [vmem:[#allocation5 + $0xec0] sm:$0xff]
    %v1928 = vld [vmem:[#allocation5 + $0xec8] sm:$0xff]
    %v1929 = vld [vmem:[#allocation5 + $0xed0] sm:$0xff]
    %v1930 = vld [vmem:[#allocation5 + $0xed8] sm:$0xff]
    %v1931 = vld [vmem:[#allocation5 + $0xee0] sm:$0xff]
    %v1932 = vld [vmem:[#allocation5 + $0xee8] sm:$0xff]
    %v1933 = vld [vmem:[#allocation5 + $0xef0] sm:$0xff]
    %v1934 = vld [vmem:[#allocation5 + $0xef8] sm:$0xff]
    %v1935 = vld [vmem:[#allocation5 + $0xf00] sm:$0xff]
    %v1936 = vld [vmem:[#allocation5 + $0xf08] sm:$0xff]
    %v1937 = vld [vmem:[#allocation5 + $0xf10] sm:$0xff]
    %v1938 = vld [vmem:[#allocation5 + $0xf18] sm:$0xff]
    %v1939 = vld [vmem:[#allocation5 + $0xf20] sm:$0xff]
    %v1940 = vld [vmem:[#allocation5 + $0xf28] sm:$0xff]
    %v1941 = vld [vmem:[#allocation5 + $0xf30] sm:$0xff]
    %v1942 = vld [vmem:[#allocation5 + $0xf38] sm:$0xff]
    %v1943 = vld [vmem:[#allocation5 + $0xf40] sm:$0xff]
    %v1944 = vld [vmem:[#allocation5 + $0xf48] sm:$0xff]
    %v1945 = vld [vmem:[#allocation5 + $0xf50] sm:$0xff]
    %v1946 = vld [vmem:[#allocation5 + $0xf58] sm:$0xff]
    %v1947 = vld [vmem:[#allocation5 + $0xf60] sm:$0xff]
    %v1948 = vld [vmem:[#allocation5 + $0xf68] sm:$0xff]
    %v1949 = vld [vmem:[#allocation5 + $0xf70] sm:$0xff]
    %v1950 = vld [vmem:[#allocation5 + $0xf78] sm:$0xff]
    %v1951 = vld [vmem:[#allocation5 + $0xf80] sm:$0xff]
    %v1952 = vld [vmem:[#allocation5 + $0xf88] sm:$0xff]
    %v1953 = vld [vmem:[#allocation5 + $0xf90] sm:$0xff]
    %v1954 = vld [vmem:[#allocation5 + $0xf98] sm:$0xff]
    %v1955 = vld [vmem:[#allocation5 + $0xfa0] sm:$0xff]
    %v1956 = vld [vmem:[#allocation5 + $0xfa8] sm:$0xff]
    %v1957 = vld [vmem:[#allocation5 + $0xfb0] sm:$0xff]
    %v1958 = vld [vmem:[#allocation5 + $0xfb8] sm:$0xff]
    %v1959 = vld [vmem:[#allocation5 + $0xfc0] sm:$0xff]
    %v1960 = vld [vmem:[#allocation5 + $0xfc8] sm:$0xff]
    %v1961 = vld [vmem:[#allocation5 + $0xfd0] sm:$0xff]
    %v1962 = vld [vmem:[#allocation5 + $0xfd8] sm:$0xff]
    %v1963 = vld [vmem:[#allocation5 + $0xfe0] sm:$0xff]
    %v1964 = vld [vmem:[#allocation5 + $0xfe8] sm:$0xff]
    %v1965 = vld [vmem:[#allocation5 + $0xff0] sm:$0xff]
    %v1966 = vld [vmem:[#allocation5 + $0xff8] sm:$0xff]
    %v1967 = vld [vmem:[#allocation5 + $0x1000] sm:$0xff]
    %v1968 = vld [vmem:[#allocation5 + $0x1008] sm:$0xff]
    %v1969 = vld [vmem:[#allocation5 + $0x1010] sm:$0xff]
    %v1970 = vld [vmem:[#allocation5 + $0x1018] sm:$0xff]
    %v1971 = vld [vmem:[#allocation5 + $0x1020] sm:$0xff]
    %v1972 = vld [vmem:[#allocation5 + $0x1028] sm:$0xff]
    %v1973 = vld [vmem:[#allocation5 + $0x1030] sm:$0xff]
    %v1974 = vld [vmem:[#allocation5 + $0x1038] sm:$0xff]
    %v1975 = vld [vmem:[#allocation5 + $0x1040] sm:$0xff]
    %v1976 = vld [vmem:[#allocation5 + $0x1048] sm:$0xff]
    %v1977 = vld [vmem:[#allocation5 + $0x1050] sm:$0xff]
    %v1978 = vld [vmem:[#allocation5 + $0x1058] sm:$0xff]
    %v1979 = vld [vmem:[#allocation5 + $0x1060] sm:$0xff]
    %v1980 = vld [vmem:[#allocation5 + $0x1068] sm:$0xff]
    %v1981 = vld [vmem:[#allocation5 + $0x1070] sm:$0xff]
    %v1982 = vld [vmem:[#allocation5 + $0x1078] sm:$0xff]
    %v1983 = vld [vmem:[#allocation5 + $0x1080] sm:$0xff]
    %v1984 = vld [vmem:[#allocation5 + $0x1088] sm:$0xff]
    %v1985 = vld [vmem:[#allocation5 + $0x1090] sm:$0xff]
    %v1986 = vld [vmem:[#allocation5 + $0x1098] sm:$0xff]
    %v1987 = vld [vmem:[#allocation5 + $0x10a0] sm:$0xff]
    %v1988 = vld [vmem:[#allocation5 + $0x10a8] sm:$0xff]
    %v1989 = vld [vmem:[#allocation5 + $0x10b0] sm:$0xff]
    %v1990 = vld [vmem:[#allocation5 + $0x10b8] sm:$0xff]
    %v1991 = vld [vmem:[#allocation5 + $0x10c0] sm:$0xff]
    %v1992 = vld [vmem:[#allocation5 + $0x10c8] sm:$0xff]
    %v1993 = vld [vmem:[#allocation5 + $0x10d0] sm:$0xff]
    %v1994 = vld [vmem:[#allocation5 + $0x10d8] sm:$0xff]
    %v1995 = vld [vmem:[#allocation5 + $0x10e0] sm:$0xff]
    %v1996 = vld [vmem:[#allocation5 + $0x10e8] sm:$0xff]
    %v1997 = vld [vmem:[#allocation5 + $0x10f0] sm:$0xff]
    %v1998 = vld [vmem:[#allocation5 + $0x10f8] sm:$0xff]
    %v1999 = vld [vmem:[#allocation5 + $0x1100] sm:$0xff]
    %v2000 = vld [vmem:[#allocation5 + $0x1108] sm:$0xff]
    %v2001 = vld [vmem:[#allocation5 + $0x1110] sm:$0xff]
    %v2002 = vld [vmem:[#allocation5 + $0x1118] sm:$0xff]
    %v2003 = vld [vmem:[#allocation5 + $0x1120] sm:$0xff]
    %v2004 = vld [vmem:[#allocation5 + $0x1128] sm:$0xff]
    %v2005 = vld [vmem:[#allocation5 + $0x1130] sm:$0xff]
    %v2006 = vld [vmem:[#allocation5 + $0x1138] sm:$0xff]
    %v2007 = vld [vmem:[#allocation5 + $0x1140] sm:$0xff]
    %v2008 = vld [vmem:[#allocation5 + $0x1148] sm:$0xff]
    %v2009 = vld [vmem:[#allocation5 + $0x1150] sm:$0xff]
    %v2010 = vld [vmem:[#allocation5 + $0x1158] sm:$0xff]
    %v2011 = vld [vmem:[#allocation5 + $0x1160] sm:$0xff]
    %v2012 = vld [vmem:[#allocation5 + $0x1168] sm:$0xff]
    %v2013 = vld [vmem:[#allocation5 + $0x1170] sm:$0xff]
    %v2014 = vld [vmem:[#allocation5 + $0x1178] sm:$0xff]
    %v2015 = vld [vmem:[#allocation5 + $0x1180] sm:$0xff]
    %v2016 = vld [vmem:[#allocation5 + $0x1188] sm:$0xff]
    %v2017 = vld [vmem:[#allocation5 + $0x1190] sm:$0xff]
    %v2018 = vld [vmem:[#allocation5 + $0x1198] sm:$0xff]
    %v2019 = vld [vmem:[#allocation5 + $0x11a0] sm:$0xff]
    %v2020 = vld [vmem:[#allocation5 + $0x11a8] sm:$0xff]
    %v2021 = vld [vmem:[#allocation5 + $0x11b0] sm:$0xff]
    %v2022 = vld [vmem:[#allocation5 + $0x11b8] sm:$0xff]
    %v2023 = vld [vmem:[#allocation5 + $0x11c0] sm:$0xff]
    %v2024 = vld [vmem:[#allocation5 + $0x11c8] sm:$0xff]
    %v2025 = vld [vmem:[#allocation5 + $0x11d0] sm:$0xff]
    %v2026 = vld [vmem:[#allocation5 + $0x11d8] sm:$0xff]
    %v2027 = vld [vmem:[#allocation5 + $0x11e0] sm:$0xff]
    %v2028 = vld [vmem:[#allocation5 + $0x11e8] sm:$0xff]
    %v2029 = vld [vmem:[#allocation5 + $0x11f0] sm:$0xff]
    %v2030 = vld [vmem:[#allocation5 + $0x11f8] sm:$0xff]
    %v2031 = vld [vmem:[#allocation5 + $0x1200] sm:$0xff]
    %v2032 = vld [vmem:[#allocation5 + $0x1208] sm:$0xff]
    %v2033 = vld [vmem:[#allocation5 + $0x1210] sm:$0xff]
    %v2034 = vld [vmem:[#allocation5 + $0x1218] sm:$0xff]
    %v2035 = vld [vmem:[#allocation5 + $0x1220] sm:$0xff]
    %v2036 = vld [vmem:[#allocation5 + $0x1228] sm:$0xff]
    %v2037 = vld [vmem:[#allocation5 + $0x1230] sm:$0xff]
    %v2038 = vld [vmem:[#allocation5 + $0x1238] sm:$0xff]
    %v2039 = vld [vmem:[#allocation5 + $0x1240] sm:$0xff]
    %v2040 = vld [vmem:[#allocation5 + $0x1248] sm:$0xff]
    %v2041 = vld [vmem:[#allocation5 + $0x1250] sm:$0xff]
    %v2042 = vld [vmem:[#allocation5 + $0x1258] sm:$0xff]
    %v2043 = vld [vmem:[#allocation5 + $0x1260] sm:$0xff]
    %v2044 = vld [vmem:[#allocation5 + $0x1268] sm:$0xff]
    %v2045 = vld [vmem:[#allocation5 + $0x1270] sm:$0xff]
    %v2046 = vld [vmem:[#allocation5 + $0x1278] sm:$0xff]
    %v2047 = vld [vmem:[#allocation5 + $0x1280] sm:$0xff]
    %v2048 = vld [vmem:[#allocation5 + $0x1288] sm:$0xff]
    %v2049 = vld [vmem:[#allocation5 + $0x1290] sm:$0xff]
    %v2050 = vld [vmem:[#allocation5 + $0x1298] sm:$0xff]
    %v2051 = vld [vmem:[#allocation5 + $0x12a0] sm:$0xff]
    %v2052 = vld [vmem:[#allocation5 + $0x12a8] sm:$0xff]
    %v2053 = vld [vmem:[#allocation5 + $0x12b0] sm:$0xff]
    %v2054 = vld [vmem:[#allocation5 + $0x12b8] sm:$0xff]
    %v2055 = vld [vmem:[#allocation5 + $0x12c0] sm:$0xff]
    %v2056 = vld [vmem:[#allocation5 + $0x12c8] sm:$0xff]
    %v2057 = vld [vmem:[#allocation5 + $0x12d0] sm:$0xff]
    %v2058 = vld [vmem:[#allocation5 + $0x12d8] sm:$0xff]
    %v2059 = vld [vmem:[#allocation5 + $0x12e0] sm:$0xff]
    %v2060 = vld [vmem:[#allocation5 + $0x12e8] sm:$0xff]
    %v2061 = vld [vmem:[#allocation5 + $0x12f0] sm:$0xff]
    %v2062 = vld [vmem:[#allocation5 + $0x12f8] sm:$0xff]
    %v2063 = vld [vmem:[#allocation5 + $0x1300] sm:$0xff]
    %v2064 = vld [vmem:[#allocation5 + $0x1308] sm:$0xff]
    %v2065 = vld [vmem:[#allocation5 + $0x1310] sm:$0xff]
    %v2066 = vld [vmem:[#allocation5 + $0x1318] sm:$0xff]
    %v2067 = vld [vmem:[#allocation5 + $0x1320] sm:$0xff]
    %v2068 = vld [vmem:[#allocation5 + $0x1328] sm:$0xff]
    %v2069 = vld [vmem:[#allocation5 + $0x1330] sm:$0xff]
    %v2070 = vld [vmem:[#allocation5 + $0x1338] sm:$0xff]
    %v2071 = vld [vmem:[#allocation5 + $0x1340] sm:$0xff]
    %v2072 = vld [vmem:[#allocation5 + $0x1348] sm:$0xff]
    %v2073 = vld [vmem:[#allocation5 + $0x1350] sm:$0xff]
    %v2074 = vld [vmem:[#allocation5 + $0x1358] sm:$0xff]
    %v2075 = vld [vmem:[#allocation5 + $0x1360] sm:$0xff]
    %v2076 = vld [vmem:[#allocation5 + $0x1368] sm:$0xff]
    %v2077 = vld [vmem:[#allocation5 + $0x1370] sm:$0xff]
    %v2078 = vld [vmem:[#allocation5 + $0x1378] sm:$0xff]
    %v2079 = vld [vmem:[#allocation5 + $0x1380] sm:$0xff]
    %v2080 = vld [vmem:[#allocation5 + $0x1388] sm:$0xff]
    %v2081 = vld [vmem:[#allocation5 + $0x1390] sm:$0xff]
    %v2082 = vld [vmem:[#allocation5 + $0x1398] sm:$0xff]
    %v2083 = vld [vmem:[#allocation5 + $0x13a0] sm:$0xff]
    %v2084 = vld [vmem:[#allocation5 + $0x13a8] sm:$0xff]
    %v2085 = vld [vmem:[#allocation5 + $0x13b0] sm:$0xff]
    %v2086 = vld [vmem:[#allocation5 + $0x13b8] sm:$0xff]
    %v2087 = vld [vmem:[#allocation5 + $0x13c0] sm:$0xff]
    %v2088 = vld [vmem:[#allocation5 + $0x13c8] sm:$0xff]
    %v2089 = vld [vmem:[#allocation5 + $0x13d0] sm:$0xff]
    %v2090 = vld [vmem:[#allocation5 + $0x13d8] sm:$0xff]
    %v2091 = vld [vmem:[#allocation5 + $0x13e0] sm:$0xff]
    %v2092 = vld [vmem:[#allocation5 + $0x13e8] sm:$0xff]
    %v2093 = vld [vmem:[#allocation5 + $0x13f0] sm:$0xff]
    %v2094 = vld [vmem:[#allocation5 + $0x13f8] sm:$0xff]
    %v2095 = vld [vmem:[#allocation5 + $0x1400] sm:$0xff]
    %v2096 = vld [vmem:[#allocation5 + $0x1408] sm:$0xff]
    %v2097 = vld [vmem:[#allocation5 + $0x1410] sm:$0xff]
    %v2098 = vld [vmem:[#allocation5 + $0x1418] sm:$0xff]
    %v2099 = vld [vmem:[#allocation5 + $0x1420] sm:$0xff]
    %v2100 = vld [vmem:[#allocation5 + $0x1428] sm:$0xff]
    %v2101 = vld [vmem:[#allocation5 + $0x1430] sm:$0xff]
    %v2102 = vld [vmem:[#allocation5 + $0x1438] sm:$0xff]
    %v2103 = vld [vmem:[#allocation5 + $0x1440] sm:$0xff]
    %v2104 = vld [vmem:[#allocation5 + $0x1448] sm:$0xff]
    %v2105 = vld [vmem:[#allocation5 + $0x1450] sm:$0xff]
    %v2106 = vld [vmem:[#allocation5 + $0x1458] sm:$0xff]
    %v2107 = vld [vmem:[#allocation5 + $0x1460] sm:$0xff]
    %v2108 = vld [vmem:[#allocation5 + $0x1468] sm:$0xff]
    %v2109 = vld [vmem:[#allocation5 + $0x1470] sm:$0xff]
    %v2110 = vld [vmem:[#allocation5 + $0x1478] sm:$0xff]
    %v2111 = vld [vmem:[#allocation5 + $0x1480] sm:$0xff]
    %v2112 = vld [vmem:[#allocation5 + $0x1488] sm:$0xff]
    %v2113 = vld [vmem:[#allocation5 + $0x1490] sm:$0xff]
    %v2114 = vld [vmem:[#allocation5 + $0x1498] sm:$0xff]
    %v2115 = vld [vmem:[#allocation5 + $0x14a0] sm:$0xff]
    %v2116 = vld [vmem:[#allocation5 + $0x14a8] sm:$0xff]
    %v2117 = vld [vmem:[#allocation5 + $0x14b0] sm:$0xff]
    %v2118 = vld [vmem:[#allocation5 + $0x14b8] sm:$0xff]
    %v2119 = vld [vmem:[#allocation5 + $0x14c0] sm:$0xff]
    %v2120 = vld [vmem:[#allocation5 + $0x14c8] sm:$0xff]
    %v2121 = vld [vmem:[#allocation5 + $0x14d0] sm:$0xff]
    %v2122 = vld [vmem:[#allocation5 + $0x14d8] sm:$0xff]
    %v2123 = vld [vmem:[#allocation5 + $0x14e0] sm:$0xff]
    %v2124 = vld [vmem:[#allocation5 + $0x14e8] sm:$0xff]
    %v2125 = vld [vmem:[#allocation5 + $0x14f0] sm:$0xff]
    %v2126 = vld [vmem:[#allocation5 + $0x14f8] sm:$0xff]
    %v2127 = vld [vmem:[#allocation5 + $0x1500] sm:$0xff]
    %v2128 = vld [vmem:[#allocation5 + $0x1508] sm:$0xff]
    %v2129 = vld [vmem:[#allocation5 + $0x1510] sm:$0xff]
    %v2130 = vld [vmem:[#allocation5 + $0x1518] sm:$0xff]
    %v2131 = vld [vmem:[#allocation5 + $0x1520] sm:$0xff]
    %v2132 = vld [vmem:[#allocation5 + $0x1528] sm:$0xff]
    %v2133 = vld [vmem:[#allocation5 + $0x1530] sm:$0xff]
    %v2134 = vld [vmem:[#allocation5 + $0x1538] sm:$0xff]
    %v2135 = vld [vmem:[#allocation5 + $0x1540] sm:$0xff]
    %v2136 = vld [vmem:[#allocation5 + $0x1548] sm:$0xff]
    %v2137 = vld [vmem:[#allocation5 + $0x1550] sm:$0xff]
    %v2138 = vld [vmem:[#allocation5 + $0x1558] sm:$0xff]
    %v2139 = vld [vmem:[#allocation5 + $0x1560] sm:$0xff]
    %v2140 = vld [vmem:[#allocation5 + $0x1568] sm:$0xff]
    %v2141 = vld [vmem:[#allocation5 + $0x1570] sm:$0xff]
    %v2142 = vld [vmem:[#allocation5 + $0x1578] sm:$0xff]
    %v2143 = vld [vmem:[#allocation5 + $0x1580] sm:$0xff]
    %v2144 = vld [vmem:[#allocation5 + $0x1588] sm:$0xff]
    %v2145 = vld [vmem:[#allocation5 + $0x1590] sm:$0xff]
    %v2146 = vld [vmem:[#allocation5 + $0x1598] sm:$0xff]
    %v2147 = vld [vmem:[#allocation5 + $0x15a0] sm:$0xff]
    %v2148 = vld [vmem:[#allocation5 + $0x15a8] sm:$0xff]
    %v2149 = vld [vmem:[#allocation5 + $0x15b0] sm:$0xff]
    %v2150 = vld [vmem:[#allocation5 + $0x15b8] sm:$0xff]
    %v2151 = vld [vmem:[#allocation5 + $0x15c0] sm:$0xff]
    %v2152 = vld [vmem:[#allocation5 + $0x15c8] sm:$0xff]
    %v2153 = vld [vmem:[#allocation5 + $0x15d0] sm:$0xff]
    %v2154 = vld [vmem:[#allocation5 + $0x15d8] sm:$0xff]
    %v2155 = vld [vmem:[#allocation5 + $0x15e0] sm:$0xff]
    %v2156 = vld [vmem:[#allocation5 + $0x15e8] sm:$0xff]
    %v2157 = vld [vmem:[#allocation5 + $0x15f0] sm:$0xff]
    %v2158 = vld [vmem:[#allocation5 + $0x15f8] sm:$0xff]
    %v2159 = vld [vmem:[#allocation5 + $0x1600] sm:$0xff]
    %v2160 = vld [vmem:[#allocation5 + $0x1608] sm:$0xff]
    %v2161 = vld [vmem:[#allocation5 + $0x1610] sm:$0xff]
    %v2162 = vld [vmem:[#allocation5 + $0x1618] sm:$0xff]
    %v2163 = vld [vmem:[#allocation5 + $0x1620] sm:$0xff]
    %v2164 = vld [vmem:[#allocation5 + $0x1628] sm:$0xff]
    %v2165 = vld [vmem:[#allocation5 + $0x1630] sm:$0xff]
    %v2166 = vld [vmem:[#allocation5 + $0x1638] sm:$0xff]
    %v2167 = vld [vmem:[#allocation5 + $0x1640] sm:$0xff]
    %v2168 = vld [vmem:[#allocation5 + $0x1648] sm:$0xff]
    %v2169 = vld [vmem:[#allocation5 + $0x1650] sm:$0xff]
    %v2170 = vld [vmem:[#allocation5 + $0x1658] sm:$0xff]
    %v2171 = vld [vmem:[#allocation5 + $0x1660] sm:$0xff]
    %v2172 = vld [vmem:[#allocation5 + $0x1668] sm:$0xff]
    %v2173 = vld [vmem:[#allocation5 + $0x1670] sm:$0xff]
    %v2174 = vld [vmem:[#allocation5 + $0x1678] sm:$0xff]
    %v2175 = vld [vmem:[#allocation5 + $0x1680] sm:$0xff]
    %v2176 = vld [vmem:[#allocation5 + $0x1688] sm:$0xff]
    %v2177 = vld [vmem:[#allocation5 + $0x1690] sm:$0xff]
    %v2178 = vld [vmem:[#allocation5 + $0x1698] sm:$0xff]
    %v2179 = vld [vmem:[#allocation5 + $0x16a0] sm:$0xff]
    %v2180 = vld [vmem:[#allocation5 + $0x16a8] sm:$0xff]
    %v2181 = vld [vmem:[#allocation5 + $0x16b0] sm:$0xff]
    %v2182 = vld [vmem:[#allocation5 + $0x16b8] sm:$0xff]
    %v2183 = vld [vmem:[#allocation5 + $0x16c0] sm:$0xff]
    %v2184 = vld [vmem:[#allocation5 + $0x16c8] sm:$0xff]
    %v2185 = vld [vmem:[#allocation5 + $0x16d0] sm:$0xff]
    %v2186 = vld [vmem:[#allocation5 + $0x16d8] sm:$0xff]
    %v2187 = vld [vmem:[#allocation5 + $0x16e0] sm:$0xff]
    %v2188 = vld [vmem:[#allocation5 + $0x16e8] sm:$0xff]
    %v2189 = vld [vmem:[#allocation5 + $0x16f0] sm:$0xff]
    %v2190 = vld [vmem:[#allocation5 + $0x16f8] sm:$0xff]
    %v2191 = vld [vmem:[#allocation5 + $0x1700] sm:$0xff]
    %v2192 = vld [vmem:[#allocation5 + $0x1708] sm:$0xff]
    %v2193 = vld [vmem:[#allocation5 + $0x1710] sm:$0xff]
    %v2194 = vld [vmem:[#allocation5 + $0x1718] sm:$0xff]
    %v2195 = vld [vmem:[#allocation5 + $0x1720] sm:$0xff]
    %v2196 = vld [vmem:[#allocation5 + $0x1728] sm:$0xff]
    %v2197 = vld [vmem:[#allocation5 + $0x1730] sm:$0xff]
    %v2198 = vld [vmem:[#allocation5 + $0x1738] sm:$0xff]
    %v2199 = vld [vmem:[#allocation5 + $0x1740] sm:$0xff]
    %v2200 = vld [vmem:[#allocation5 + $0x1748] sm:$0xff]
    %v2201 = vld [vmem:[#allocation5 + $0x1750] sm:$0xff]
    %v2202 = vld [vmem:[#allocation5 + $0x1758] sm:$0xff]
    %v2203 = vld [vmem:[#allocation5 + $0x1760] sm:$0xff]
    %v2204 = vld [vmem:[#allocation5 + $0x1768] sm:$0xff]
    %v2205 = vld [vmem:[#allocation5 + $0x1770] sm:$0xff]
    %v2206 = vld [vmem:[#allocation5 + $0x1778] sm:$0xff]
    %v2207 = vld [vmem:[#allocation5 + $0x1780] sm:$0xff]
    %v2208 = vld [vmem:[#allocation5 + $0x1788] sm:$0xff]
    %v2209 = vld [vmem:[#allocation5 + $0x1790] sm:$0xff]
    %v2210 = vld [vmem:[#allocation5 + $0x1798] sm:$0xff]
    %v2211 = vld [vmem:[#allocation5 + $0x17a0] sm:$0xff]
    %v2212 = vld [vmem:[#allocation5 + $0x17a8] sm:$0xff]
    %v2213 = vld [vmem:[#allocation5 + $0x17b0] sm:$0xff]
    %v2214 = vld [vmem:[#allocation5 + $0x17b8] sm:$0xff]
    %v2215 = vld [vmem:[#allocation5 + $0x17c0] sm:$0xff]
    %v2216 = vld [vmem:[#allocation5 + $0x17c8] sm:$0xff]
    %v2217 = vld [vmem:[#allocation5 + $0x17d0] sm:$0xff]
    %v2218 = vld [vmem:[#allocation5 + $0x17d8] sm:$0xff]
    %v2219 = vld [vmem:[#allocation5 + $0x17e0] sm:$0xff]
    %v2220 = vld [vmem:[#allocation5 + $0x17e8] sm:$0xff]
    %v2221 = vld [vmem:[#allocation5 + $0x17f0] sm:$0xff]
    %v2222 = vld [vmem:[#allocation5 + $0x17f8] sm:$0xff]
    %v2223 = vld [vmem:[#allocation5 + $0x1800] sm:$0xff]
    %v2224 = vld [vmem:[#allocation5 + $0x1808] sm:$0xff]
    %v2225 = vld [vmem:[#allocation5 + $0x1810] sm:$0xff]
    %v2226 = vld [vmem:[#allocation5 + $0x1818] sm:$0xff]
    %v2227 = vld [vmem:[#allocation5 + $0x1820] sm:$0xff]
    %v2228 = vld [vmem:[#allocation5 + $0x1828] sm:$0xff]
    %v2229 = vld [vmem:[#allocation5 + $0x1830] sm:$0xff]
    %v2230 = vld [vmem:[#allocation5 + $0x1838] sm:$0xff]
    %v2231 = vld [vmem:[#allocation5 + $0x1840] sm:$0xff]
    %v2232 = vld [vmem:[#allocation5 + $0x1848] sm:$0xff]
    %v2233 = vld [vmem:[#allocation5 + $0x1850] sm:$0xff]
    %v2234 = vld [vmem:[#allocation5 + $0x1858] sm:$0xff]
    %v2235 = vld [vmem:[#allocation5 + $0x1860] sm:$0xff]
    %v2236 = vld [vmem:[#allocation5 + $0x1868] sm:$0xff]
    %v2237 = vld [vmem:[#allocation5 + $0x1870] sm:$0xff]
    %v2238 = vld [vmem:[#allocation5 + $0x1878] sm:$0xff]
    %v2239 = vld [vmem:[#allocation5 + $0x1880] sm:$0xff]
    %v2240 = vld [vmem:[#allocation5 + $0x1888] sm:$0xff]
    %v2241 = vld [vmem:[#allocation5 + $0x1890] sm:$0xff]
    %v2242 = vld [vmem:[#allocation5 + $0x1898] sm:$0xff]
    %v2243 = vld [vmem:[#allocation5 + $0x18a0] sm:$0xff]
    %v2244 = vld [vmem:[#allocation5 + $0x18a8] sm:$0xff]
    %v2245 = vld [vmem:[#allocation5 + $0x18b0] sm:$0xff]
    %v2246 = vld [vmem:[#allocation5 + $0x18b8] sm:$0xff]
    %v2247 = vld [vmem:[#allocation5 + $0x18c0] sm:$0xff]
    %v2248 = vld [vmem:[#allocation5 + $0x18c8] sm:$0xff]
    %v2249 = vld [vmem:[#allocation5 + $0x18d0] sm:$0xff]
    %v2250 = vld [vmem:[#allocation5 + $0x18d8] sm:$0xff]
    %v2251 = vld [vmem:[#allocation5 + $0x18e0] sm:$0xff]
    %v2252 = vld [vmem:[#allocation5 + $0x18e8] sm:$0xff]
    %v2253 = vld [vmem:[#allocation5 + $0x18f0] sm:$0xff]
    %v2254 = vld [vmem:[#allocation5 + $0x18f8] sm:$0xff]
    %v2255 = vld [vmem:[#allocation5 + $0x1900] sm:$0xff]
    %v2256 = vld [vmem:[#allocation5 + $0x1908] sm:$0xff]
    %v2257 = vld [vmem:[#allocation5 + $0x1910] sm:$0xff]
    %v2258 = vld [vmem:[#allocation5 + $0x1918] sm:$0xff]
    %v2259 = vld [vmem:[#allocation5 + $0x1920] sm:$0xff]
    %v2260 = vld [vmem:[#allocation5 + $0x1928] sm:$0xff]
    %v2261 = vld [vmem:[#allocation5 + $0x1930] sm:$0xff]
    %v2262 = vld [vmem:[#allocation5 + $0x1938] sm:$0xff]
    %v2263 = vld [vmem:[#allocation5 + $0x1940] sm:$0xff]
    %v2264 = vld [vmem:[#allocation5 + $0x1948] sm:$0xff]
    %v2265 = vld [vmem:[#allocation5 + $0x1950] sm:$0xff]
    %v2266 = vld [vmem:[#allocation5 + $0x1958] sm:$0xff]
    %v2267 = vld [vmem:[#allocation5 + $0x1960] sm:$0xff]
    %v2268 = vld [vmem:[#allocation5 + $0x1968] sm:$0xff]
    %v2269 = vld [vmem:[#allocation5 + $0x1970] sm:$0xff]
    %v2270 = vld [vmem:[#allocation5 + $0x1978] sm:$0xff]
    %v2271 = vld [vmem:[#allocation5 + $0x1980] sm:$0xff]
    %v2272 = vld [vmem:[#allocation5 + $0x1988] sm:$0xff]
    %v2273 = vld [vmem:[#allocation5 + $0x1990] sm:$0xff]
    %v2274 = vld [vmem:[#allocation5 + $0x1998] sm:$0xff]
    %v2275 = vld [vmem:[#allocation5 + $0x19a0] sm:$0xff]
    %v2276 = vld [vmem:[#allocation5 + $0x19a8] sm:$0xff]
    %v2277 = vld [vmem:[#allocation5 + $0x19b0] sm:$0xff]
    %v2278 = vld [vmem:[#allocation5 + $0x19b8] sm:$0xff]
    %v2279 = vld [vmem:[#allocation5 + $0x19c0] sm:$0xff]
    %v2280 = vld [vmem:[#allocation5 + $0x19c8] sm:$0xff]
    %v2281 = vld [vmem:[#allocation5 + $0x19d0] sm:$0xff]
    %v2282 = vld [vmem:[#allocation5 + $0x19d8] sm:$0xff]
    %v2283 = vld [vmem:[#allocation5 + $0x19e0] sm:$0xff]
    %v2284 = vld [vmem:[#allocation5 + $0x19e8] sm:$0xff]
    %v2285 = vld [vmem:[#allocation5 + $0x19f0] sm:$0xff]
    %v2286 = vld [vmem:[#allocation5 + $0x19f8] sm:$0xff]
    %v2287 = vld [vmem:[#allocation5 + $0x1a00] sm:$0xff]
    %v2288 = vld [vmem:[#allocation5 + $0x1a08] sm:$0xff]
    %v2289 = vld [vmem:[#allocation5 + $0x1a10] sm:$0xff]
    %v2290 = vld [vmem:[#allocation5 + $0x1a18] sm:$0xff]
    %v2291 = vld [vmem:[#allocation5 + $0x1a20] sm:$0xff]
    %v2292 = vld [vmem:[#allocation5 + $0x1a28] sm:$0xff]
    %v2293 = vld [vmem:[#allocation5 + $0x1a30] sm:$0xff]
    %v2294 = vld [vmem:[#allocation5 + $0x1a38] sm:$0xff]
    %v2295 = vld [vmem:[#allocation5 + $0x1a40] sm:$0xff]
    %v2296 = vld [vmem:[#allocation5 + $0x1a48] sm:$0xff]
    %v2297 = vld [vmem:[#allocation5 + $0x1a50] sm:$0xff]
    %v2298 = vld [vmem:[#allocation5 + $0x1a58] sm:$0xff]
    %v2299 = vld [vmem:[#allocation5 + $0x1a60] sm:$0xff]
    %v2300 = vld [vmem:[#allocation5 + $0x1a68] sm:$0xff]
    %v2301 = vld [vmem:[#allocation5 + $0x1a70] sm:$0xff]
    %v2302 = vld [vmem:[#allocation5 + $0x1a78] sm:$0xff]
    %v2303 = vld [vmem:[#allocation5 + $0x1a80] sm:$0xff]
    %v2304 = vld [vmem:[#allocation5 + $0x1a88] sm:$0xff]
    %v2305 = vld [vmem:[#allocation5 + $0x1a90] sm:$0xff]
    %v2306 = vld [vmem:[#allocation5 + $0x1a98] sm:$0xff]
    %v2307 = vld [vmem:[#allocation5 + $0x1aa0] sm:$0xff]
    %v2308 = vld [vmem:[#allocation5 + $0x1aa8] sm:$0xff]
    %v2309 = vld [vmem:[#allocation5 + $0x1ab0] sm:$0xff]
    %v2310 = vld [vmem:[#allocation5 + $0x1ab8] sm:$0xff]
    %v2311 = vld [vmem:[#allocation5 + $0x1ac0] sm:$0xff]
    %v2312 = vld [vmem:[#allocation5 + $0x1ac8] sm:$0xff]
    %v2313 = vld [vmem:[#allocation5 + $0x1ad0] sm:$0xff]
    %v2314 = vld [vmem:[#allocation5 + $0x1ad8] sm:$0xff]
    %v2315 = vld [vmem:[#allocation5 + $0x1ae0] sm:$0xff]
    %v2316 = vld [vmem:[#allocation5 + $0x1ae8] sm:$0xff]
    %v2317 = vld [vmem:[#allocation5 + $0x1af0] sm:$0xff]
    %v2318 = vld [vmem:[#allocation5 + $0x1af8] sm:$0xff]
    %v2319 = vld [vmem:[#allocation5 + $0x1b00] sm:$0xff]
    %v2320 = vld [vmem:[#allocation5 + $0x1b08] sm:$0xff]
    %v2321 = vld [vmem:[#allocation5 + $0x1b10] sm:$0xff]
    %v2322 = vld [vmem:[#allocation5 + $0x1b18] sm:$0xff]
    %v2323 = vld [vmem:[#allocation5 + $0x1b20] sm:$0xff]
    %v2324 = vld [vmem:[#allocation5 + $0x1b28] sm:$0xff]
    %v2325 = vld [vmem:[#allocation5 + $0x1b30] sm:$0xff]
    %v2326 = vld [vmem:[#allocation5 + $0x1b38] sm:$0xff]
    %v2327 = vld [vmem:[#allocation5 + $0x1b40] sm:$0xff]
    %v2328 = vld [vmem:[#allocation5 + $0x1b48] sm:$0xff]
    %v2329 = vld [vmem:[#allocation5 + $0x1b50] sm:$0xff]
    %v2330 = vld [vmem:[#allocation5 + $0x1b58] sm:$0xff]
    %v2331 = vld [vmem:[#allocation5 + $0x1b60] sm:$0xff]
    %v2332 = vld [vmem:[#allocation5 + $0x1b68] sm:$0xff]
    %v2333 = vld [vmem:[#allocation5 + $0x1b70] sm:$0xff]
    %v2334 = vld [vmem:[#allocation5 + $0x1b78] sm:$0xff]
    %v2335 = vld [vmem:[#allocation5 + $0x1b80] sm:$0xff]
    %v2336 = vld [vmem:[#allocation5 + $0x1b88] sm:$0xff]
    %v2337 = vld [vmem:[#allocation5 + $0x1b90] sm:$0xff]
    %v2338 = vld [vmem:[#allocation5 + $0x1b98] sm:$0xff]
    %v2339 = vld [vmem:[#allocation5 + $0x1ba0] sm:$0xff]
    %v2340 = vld [vmem:[#allocation5 + $0x1ba8] sm:$0xff]
    %v2341 = vld [vmem:[#allocation5 + $0x1bb0] sm:$0xff]
    %v2342 = vld [vmem:[#allocation5 + $0x1bb8] sm:$0xff]
    %v2343 = vld [vmem:[#allocation5 + $0x1bc0] sm:$0xff]
    %v2344 = vld [vmem:[#allocation5 + $0x1bc8] sm:$0xff]
    %v2345 = vld [vmem:[#allocation5 + $0x1bd0] sm:$0xff]
    %v2346 = vld [vmem:[#allocation5 + $0x1bd8] sm:$0xff]
    %v2347 = vld [vmem:[#allocation5 + $0x1be0] sm:$0xff]
    %v2348 = vld [vmem:[#allocation5 + $0x1be8] sm:$0xff]
    %v2349 = vld [vmem:[#allocation5 + $0x1bf0] sm:$0xff]
    %v2350 = vld [vmem:[#allocation5 + $0x1bf8] sm:$0xff]
    %v2351 = vld [vmem:[#allocation5 + $0x1c00] sm:$0xff]
    %v2352 = vld [vmem:[#allocation5 + $0x1c08] sm:$0xff]
    %v2353 = vld [vmem:[#allocation5 + $0x1c10] sm:$0xff]
    %v2354 = vld [vmem:[#allocation5 + $0x1c18] sm:$0xff]
    %v2355 = vld [vmem:[#allocation5 + $0x1c20] sm:$0xff]
    %v2356 = vld [vmem:[#allocation5 + $0x1c28] sm:$0xff]
    %v2357 = vld [vmem:[#allocation5 + $0x1c30] sm:$0xff]
    %v2358 = vld [vmem:[#allocation5 + $0x1c38] sm:$0xff]
    %v2359 = vld [vmem:[#allocation5 + $0x1c40] sm:$0xff]
    %v2360 = vld [vmem:[#allocation5 + $0x1c48] sm:$0xff]
    %v2361 = vld [vmem:[#allocation5 + $0x1c50] sm:$0xff]
    %v2362 = vld [vmem:[#allocation5 + $0x1c58] sm:$0xff]
    %v2363 = vld [vmem:[#allocation5 + $0x1c60] sm:$0xff]
    %v2364 = vld [vmem:[#allocation5 + $0x1c68] sm:$0xff]
    %v2365 = vld [vmem:[#allocation5 + $0x1c70] sm:$0xff]
    %v2366 = vld [vmem:[#allocation5 + $0x1c78] sm:$0xff]
    %v2367 = vld [vmem:[#allocation5 + $0x1c80] sm:$0xff]
    %v2368 = vld [vmem:[#allocation5 + $0x1c88] sm:$0xff]
    %v2369 = vld [vmem:[#allocation5 + $0x1c90] sm:$0xff]
    %v2370 = vld [vmem:[#allocation5 + $0x1c98] sm:$0xff]
    %v2371 = vld [vmem:[#allocation5 + $0x1ca0] sm:$0xff]
    %v2372 = vld [vmem:[#allocation5 + $0x1ca8] sm:$0xff]
    %v2373 = vld [vmem:[#allocation5 + $0x1cb0] sm:$0xff]
    %v2374 = vld [vmem:[#allocation5 + $0x1cb8] sm:$0xff]
    %v2375 = vld [vmem:[#allocation5 + $0x1cc0] sm:$0xff]
    %v2376 = vld [vmem:[#allocation5 + $0x1cc8] sm:$0xff]
    %v2377 = vld [vmem:[#allocation5 + $0x1cd0] sm:$0xff]
    %v2378 = vld [vmem:[#allocation5 + $0x1cd8] sm:$0xff]
    %v2379 = vld [vmem:[#allocation5 + $0x1ce0] sm:$0xff]
    %v2380 = vld [vmem:[#allocation5 + $0x1ce8] sm:$0xff]
    %v2381 = vld [vmem:[#allocation5 + $0x1cf0] sm:$0xff]
    %v2382 = vld [vmem:[#allocation5 + $0x1cf8] sm:$0xff]
    %v2383 = vld [vmem:[#allocation5 + $0x1d00] sm:$0xff]
    %v2384 = vld [vmem:[#allocation5 + $0x1d08] sm:$0xff]
    %v2385 = vld [vmem:[#allocation5 + $0x1d10] sm:$0xff]
    %v2386 = vld [vmem:[#allocation5 + $0x1d18] sm:$0xff]
    %v2387 = vld [vmem:[#allocation5 + $0x1d20] sm:$0xff]
    %v2388 = vld [vmem:[#allocation5 + $0x1d28] sm:$0xff]
    %v2389 = vld [vmem:[#allocation5 + $0x1d30] sm:$0xff]
    %v2390 = vld [vmem:[#allocation5 + $0x1d38] sm:$0xff]
    %v2391 = vld [vmem:[#allocation5 + $0x1d40] sm:$0xff]
    %v2392 = vld [vmem:[#allocation5 + $0x1d48] sm:$0xff]
    %v2393 = vld [vmem:[#allocation5 + $0x1d50] sm:$0xff]
    %v2394 = vld [vmem:[#allocation5 + $0x1d58] sm:$0xff]
    %v2395 = vld [vmem:[#allocation5 + $0x1d60] sm:$0xff]
    %v2396 = vld [vmem:[#allocation5 + $0x1d68] sm:$0xff]
    %v2397 = vld [vmem:[#allocation5 + $0x1d70] sm:$0xff]
    %v2398 = vld [vmem:[#allocation5 + $0x1d78] sm:$0xff]
    %v2399 = vld [vmem:[#allocation5 + $0x1d80] sm:$0xff]
    %v2400 = vld [vmem:[#allocation5 + $0x1d88] sm:$0xff]
    %v2401 = vld [vmem:[#allocation5 + $0x1d90] sm:$0xff]
    %v2402 = vld [vmem:[#allocation5 + $0x1d98] sm:$0xff]
    %v2403 = vld [vmem:[#allocation5 + $0x1da0] sm:$0xff]
    %v2404 = vld [vmem:[#allocation5 + $0x1da8] sm:$0xff]
    %v2405 = vld [vmem:[#allocation5 + $0x1db0] sm:$0xff]
    %v2406 = vld [vmem:[#allocation5 + $0x1db8] sm:$0xff]
    %v2407 = vld [vmem:[#allocation5 + $0x1dc0] sm:$0xff]
    %v2408 = vld [vmem:[#allocation5 + $0x1dc8] sm:$0xff]
    %v2409 = vld [vmem:[#allocation5 + $0x1dd0] sm:$0xff]
    %v2410 = vld [vmem:[#allocation5 + $0x1dd8] sm:$0xff]
    %v2411 = vld [vmem:[#allocation5 + $0x1de0] sm:$0xff]
    %v2412 = vld [vmem:[#allocation5 + $0x1de8] sm:$0xff]
    %v2413 = vld [vmem:[#allocation5 + $0x1df0] sm:$0xff]
    %v2414 = vld [vmem:[#allocation5 + $0x1df8] sm:$0xff]
    %v2415 = vld [vmem:[#allocation5 + $0x1e00] sm:$0xff]
    %v2416 = vld [vmem:[#allocation5 + $0x1e08] sm:$0xff]
    %v2417 = vld [vmem:[#allocation5 + $0x1e10] sm:$0xff]
    %v2418 = vld [vmem:[#allocation5 + $0x1e18] sm:$0xff]
    %v2419 = vld [vmem:[#allocation5 + $0x1e20] sm:$0xff]
    %v2420 = vld [vmem:[#allocation5 + $0x1e28] sm:$0xff]
    %v2421 = vld [vmem:[#allocation5 + $0x1e30] sm:$0xff]
    %v2422 = vld [vmem:[#allocation5 + $0x1e38] sm:$0xff]
    %v2423 = vld [vmem:[#allocation5 + $0x1e40] sm:$0xff]
    %v2424 = vld [vmem:[#allocation5 + $0x1e48] sm:$0xff]
    %v2425 = vld [vmem:[#allocation5 + $0x1e50] sm:$0xff]
    %v2426 = vld [vmem:[#allocation5 + $0x1e58] sm:$0xff]
    %v2427 = vld [vmem:[#allocation5 + $0x1e60] sm:$0xff]
    %v2428 = vld [vmem:[#allocation5 + $0x1e68] sm:$0xff]
    %v2429 = vld [vmem:[#allocation5 + $0x1e70] sm:$0xff]
    %v2430 = vld [vmem:[#allocation5 + $0x1e78] sm:$0xff]
    %v2431 = vld [vmem:[#allocation5 + $0x1e80] sm:$0xff]
    %v2432 = vld [vmem:[#allocation5 + $0x1e88] sm:$0xff]
    %v2433 = vld [vmem:[#allocation5 + $0x1e90] sm:$0xff]
    %v2434 = vld [vmem:[#allocation5 + $0x1e98] sm:$0xff]
    %v2435 = vld [vmem:[#allocation5 + $0x1ea0] sm:$0xff]
    %v2436 = vld [vmem:[#allocation5 + $0x1ea8] sm:$0xff]
    %v2437 = vld [vmem:[#allocation5 + $0x1eb0] sm:$0xff]
    %v2438 = vld [vmem:[#allocation5 + $0x1eb8] sm:$0xff]
    %v2439 = vld [vmem:[#allocation5 + $0x1ec0] sm:$0xff]
    %v2440 = vld [vmem:[#allocation5 + $0x1ec8] sm:$0xff]
    %v2441 = vld [vmem:[#allocation5 + $0x1ed0] sm:$0xff]
    %v2442 = vld [vmem:[#allocation5 + $0x1ed8] sm:$0xff]
    %v2443 = vld [vmem:[#allocation5 + $0x1ee0] sm:$0xff]
    %v2444 = vld [vmem:[#allocation5 + $0x1ee8] sm:$0xff]
    %v2445 = vld [vmem:[#allocation5 + $0x1ef0] sm:$0xff]
    %v2446 = vld [vmem:[#allocation5 + $0x1ef8] sm:$0xff]
    %v2447 = vld [vmem:[#allocation5 + $0x1f00] sm:$0xff]
    %v2448 = vld [vmem:[#allocation5 + $0x1f08] sm:$0xff]
    %v2449 = vld [vmem:[#allocation5 + $0x1f10] sm:$0xff]
    %v2450 = vld [vmem:[#allocation5 + $0x1f18] sm:$0xff]
    %v2451 = vld [vmem:[#allocation5 + $0x1f20] sm:$0xff]
    %v2452 = vld [vmem:[#allocation5 + $0x1f28] sm:$0xff]
    %v2453 = vld [vmem:[#allocation5 + $0x1f30] sm:$0xff]
    %v2454 = vld [vmem:[#allocation5 + $0x1f38] sm:$0xff]
    %v2455 = vld [vmem:[#allocation5 + $0x1f40] sm:$0xff]
    %v2456 = vld [vmem:[#allocation5 + $0x1f48] sm:$0xff]
    %v2457 = vld [vmem:[#allocation5 + $0x1f50] sm:$0xff]
    %v2458 = vld [vmem:[#allocation5 + $0x1f58] sm:$0xff]
    %v2459 = vld [vmem:[#allocation5 + $0x1f60] sm:$0xff]
    %v2460 = vld [vmem:[#allocation5 + $0x1f68] sm:$0xff]
    %v2461 = vld [vmem:[#allocation5 + $0x1f70] sm:$0xff]
    %v2462 = vld [vmem:[#allocation5 + $0x1f78] sm:$0xff]
    %v2463 = vld [vmem:[#allocation5 + $0x1f80] sm:$0xff]
    %v2464 = vld [vmem:[#allocation5 + $0x1f88] sm:$0xff]
    %v2465 = vld [vmem:[#allocation5 + $0x1f90] sm:$0xff]
    %v2466 = vld [vmem:[#allocation5 + $0x1f98] sm:$0xff]
    %v2467 = vld [vmem:[#allocation5 + $0x1fa0] sm:$0xff]
    %v2468 = vld [vmem:[#allocation5 + $0x1fa8] sm:$0xff]
    %v2469 = vld [vmem:[#allocation5 + $0x1fb0] sm:$0xff]
    %v2470 = vld [vmem:[#allocation5 + $0x1fb8] sm:$0xff]
    %v2471 = vld [vmem:[#allocation5 + $0x1fc0] sm:$0xff]
    %v2472 = vld [vmem:[#allocation5 + $0x1fc8] sm:$0xff]
    %v2473 = vld [vmem:[#allocation5 + $0x1fd0] sm:$0xff]
    %v2474 = vld [vmem:[#allocation5 + $0x1fd8] sm:$0xff]
    %v2475 = vld [vmem:[#allocation5 + $0x1fe0] sm:$0xff]
    %v2476 = vld [vmem:[#allocation5 + $0x1fe8] sm:$0xff]
    %v2477 = vld [vmem:[#allocation5 + $0x1ff0] sm:$0xff]
    %v2478 = vld [vmem:[#allocation5 + $0x1ff8] sm:$0xff]
    %v2479 = vld [vmem:[#allocation11] sm:$0xff]
    %v2481 = vlaneseq
    %v2482 = vshrl.u32 %v2481, 7
    %v2483 = vsub.s32 0, %v2482
    %v2484 = vrot.slane %v2479, %v2483
    %v2485 = vlaneseq
    %v2486 = vshrl.u32 %v2485, 7
    %v2487 = vsub.s32 1, %v2486
    %v2488 = vrot.slane %v2479, %v2487
    %v2489 = vlaneseq
    %v2490 = vshrl.u32 %v2489, 7
    %v2491 = vsub.s32 2, %v2490
    %v2492 = vrot.slane %v2479, %v2491
    %v2493 = vlaneseq
    %v2494 = vshrl.u32 %v2493, 7
    %v2495 = vsub.s32 3, %v2494
    %v2496 = vrot.slane %v2479, %v2495
    %v2497 = vlaneseq
    %v2498 = vshrl.u32 %v2497, 7
    %v2499 = vsub.s32 4, %v2498
    %v2500 = vrot.slane %v2479, %v2499
    %v2501 = vlaneseq
    %v2502 = vshrl.u32 %v2501, 7
    %v2503 = vsub.s32 5, %v2502
    %v2504 = vrot.slane %v2479, %v2503
    %v2505 = vlaneseq
    %v2506 = vshrl.u32 %v2505, 7
    %v2507 = vsub.s32 6, %v2506
    %v2508 = vrot.slane %v2479, %v2507
    %v2509 = vlaneseq
    %v2510 = vshrl.u32 %v2509, 7
    %v2511 = vsub.s32 7, %v2510
    %v2512 = vrot.slane %v2479, %v2511
    %2521 = vmatprep.subr.bf16.mxu0 %v1456
    %2522 = vmatpush1.bf16.msra.mxu0 %v1455
    %2523 = vmatprep.subr.bf16.mxu0 %v1464
    %2524 = vmatpush1.bf16.msra.mxu0 %v1463
    %2525 = vmatprep.subr.bf16.mxu0 %v1472
    %2526 = vmatpush1.bf16.msra.mxu0 %v1471
    %2527 = vmatprep.subr.bf16.mxu0 %v1480
    %2528 = vmatpush1.bf16.msra.mxu0 %v1479
    %2529 = vmatprep.subr.bf16.mxu0 %v1488
    %2530 = vmatpush1.bf16.msra.mxu0 %v1487
    %2531 = vmatprep.subr.bf16.mxu0 %v1496
    %2532 = vmatpush1.bf16.msra.mxu0 %v1495
    %2533 = vmatprep.subr.bf16.mxu0 %v1504
    %2534 = vmatpush1.bf16.msra.mxu0 %v1503
    %2535 = vmatprep.subr.bf16.mxu0 %v1512
    %2536 = vmatpush1.bf16.msra.mxu0 %v1511
    %2537 = vmatprep.subr.bf16.mxu0 %v1520
    %2538 = vmatpush1.bf16.msra.mxu0 %v1519
    %2539 = vmatprep.subr.bf16.mxu0 %v1528
    %2540 = vmatpush1.bf16.msra.mxu0 %v1527
    %2541 = vmatprep.subr.bf16.mxu0 %v1536
    %2542 = vmatpush1.bf16.msra.mxu0 %v1535
    %2543 = vmatprep.subr.bf16.mxu0 %v1544
    %2544 = vmatpush1.bf16.msra.mxu0 %v1543
    %2545 = vmatprep.subr.bf16.mxu0 %v1552
    %2546 = vmatpush1.bf16.msra.mxu0 %v1551
    %2547 = vmatprep.subr.bf16.mxu0 %v1560
    %2548 = vmatpush1.bf16.msra.mxu0 %v1559
    %2549 = vmatprep.subr.bf16.mxu0 %v1568
    %2550 = vmatpush1.bf16.msra.mxu0 %v1567
    %2551 = vmatprep.subr.bf16.mxu0 %v1576
    %2552 = vmatpush1.bf16.msra.mxu0 %v1575
    %2553 = vmatprep.mubr.bf16.mxu0 %v1440
    %2554 = vmatmul.mubr.bf16.gmra.mrb[0].mxu0 %v1439
    %v2555 = vpop.f32.mrb[0].mxu0
    %v2556 = vadd.f32 %v2484, %v2555
    %v2557 = vpop.f32.mrb[0].mxu0
    %v2558 = vadd.f32 %v2488, %v2557
    %v2559 = vpop.f32.mrb[0].mxu0
    %v2560 = vpop.f32.mrb[0].mxu0
    %2561 = vdwg.mxu0
    %2562 = vmatprep.subr.bf16.mxu0 %v1584
    %2563 = vmatpush1.bf16.msra.mxu0 %v1583
    %2564 = vmatprep.subr.bf16.mxu0 %v1592
    %2565 = vmatpush1.bf16.msra.mxu0 %v1591
    %2566 = vmatprep.subr.bf16.mxu0 %v1600
    %2567 = vmatpush1.bf16.msra.mxu0 %v1599
    %2568 = vmatprep.subr.bf16.mxu0 %v1608
    %2569 = vmatpush1.bf16.msra.mxu0 %v1607
    %2570 = vmatprep.subr.bf16.mxu0 %v1616
    %2571 = vmatpush1.bf16.msra.mxu0 %v1615
    %2572 = vmatprep.subr.bf16.mxu0 %v1624
    %2573 = vmatpush1.bf16.msra.mxu0 %v1623
    %2574 = vmatprep.subr.bf16.mxu0 %v1632
    %2575 = vmatpush1.bf16.msra.mxu0 %v1631
    %2576 = vmatprep.subr.bf16.mxu0 %v1640
    %2577 = vmatpush1.bf16.msra.mxu0 %v1639
    %2578 = vmatprep.subr.bf16.mxu0 %v1648
    %2579 = vmatpush1.bf16.msra.mxu0 %v1647
    %2580 = vmatprep.subr.bf16.mxu0 %v1656
    %2581 = vmatpush1.bf16.msra.mxu0 %v1655
    %2582 = vmatprep.subr.bf16.mxu0 %v1664
    %2583 = vmatpush1.bf16.msra.mxu0 %v1663
    %2584 = vmatprep.subr.bf16.mxu0 %v1672
    %2585 = vmatpush1.bf16.msra.mxu0 %v1671
    %2586 = vmatprep.subr.bf16.mxu0 %v1680
    %2587 = vmatpush1.bf16.msra.mxu0 %v1679
    %2588 = vmatprep.subr.bf16.mxu0 %v1688
    %2589 = vmatpush1.bf16.msra.mxu0 %v1687
    %2590 = vmatprep.subr.bf16.mxu0 %v1696
    %2591 = vmatpush1.bf16.msra.mxu0 %v1695
    %2592 = vmatprep.subr.bf16.mxu0 %v1704
    %2593 = vmatpush1.bf16.msra.mxu0 %v1703
    %2594 = vmatprep.mubr.bf16.mxu0 %v1442
    %2595 = vmatmul.mubr.bf16.gmra.mrb[0].mxu0 %v1441
    %v2596 = vpop.f32.mrb[0].mxu0
    %v2597 = vadd.f32 %v2556, %v2596
    %v2598 = vpop.f32.mrb[0].mxu0
    %v2599 = vadd.f32 %v2558, %v2598
    %v2600 = vpop.f32.mrb[0].mxu0
    %v2601 = vpop.f32.mrb[0].mxu0
    %2602 = vdwg.mxu0
    %2603 = vmatprep.subr.bf16.mxu0 %v1712
    %2604 = vmatpush1.bf16.msra.mxu0 %v1711
    %2605 = vmatprep.subr.bf16.mxu0 %v1720
    %2606 = vmatpush1.bf16.msra.mxu0 %v1719
    %2607 = vmatprep.subr.bf16.mxu0 %v1728
    %2608 = vmatpush1.bf16.msra.mxu0 %v1727
    %2609 = vmatprep.subr.bf16.mxu0 %v1736
    %2610 = vmatpush1.bf16.msra.mxu0 %v1735
    %2611 = vmatprep.subr.bf16.mxu0 %v1744
    %2612 = vmatpush1.bf16.msra.mxu0 %v1743
    %2613 = vmatprep.subr.bf16.mxu0 %v1752
    %2614 = vmatpush1.bf16.msra.mxu0 %v1751
    %2615 = vmatprep.subr.bf16.mxu0 %v1760
    %2616 = vmatpush1.bf16.msra.mxu0 %v1759
    %2617 = vmatprep.subr.bf16.mxu0 %v1768
    %2618 = vmatpush1.bf16.msra.mxu0 %v1767
    %2619 = vmatprep.subr.bf16.mxu0 %v1776
    %2620 = vmatpush1.bf16.msra.mxu0 %v1775
    %2621 = vmatprep.subr.bf16.mxu0 %v1784
    %2622 = vmatpush1.bf16.msra.mxu0 %v1783
    %2623 = vmatprep.subr.bf16.mxu0 %v1792
    %2624 = vmatpush1.bf16.msra.mxu0 %v1791
    %2625 = vmatprep.subr.bf16.mxu0 %v1800
    %2626 = vmatpush1.bf16.msra.mxu0 %v1799
    %2627 = vmatprep.subr.bf16.mxu0 %v1808
    %2628 = vmatpush1.bf16.msra.mxu0 %v1807
    %2629 = vmatprep.subr.bf16.mxu0 %v1816
    %2630 = vmatpush1.bf16.msra.mxu0 %v1815
    %2631 = vmatprep.subr.bf16.mxu0 %v1824
    %2632 = vmatpush1.bf16.msra.mxu0 %v1823
    %2633 = vmatprep.subr.bf16.mxu0 %v1832
    %2634 = vmatpush1.bf16.msra.mxu0 %v1831
    %2635 = vmatprep.mubr.bf16.mxu0 %v1444
    %2636 = vmatmul.mubr.bf16.gmra.mrb[0].mxu0 %v1443
    %v2637 = vpop.f32.mrb[0].mxu0
    %v2638 = vadd.f32 %v2597, %v2637
    %v2639 = vpop.f32.mrb[0].mxu0
    %v2640 = vadd.f32 %v2599, %v2639
    %v2641 = vpop.f32.mrb[0].mxu0
    %v2642 = vpop.f32.mrb[0].mxu0
    %2643 = vdwg.mxu0
    %2644 = vmatprep.subr.bf16.mxu0 %v1840
    %2645 = vmatpush1.bf16.msra.mxu0 %v1839
    %2646 = vmatprep.subr.bf16.mxu0 %v1848
    %2647 = vmatpush1.bf16.msra.mxu0 %v1847
    %2648 = vmatprep.subr.bf16.mxu0 %v1856
    %2649 = vmatpush1.bf16.msra.mxu0 %v1855
    %2650 = vmatprep.subr.bf16.mxu0 %v1864
    %2651 = vmatpush1.bf16.msra.mxu0 %v1863
    %2652 = vmatprep.subr.bf16.mxu0 %v1872
    %2653 = vmatpush1.bf16.msra.mxu0 %v1871
    %2654 = vmatprep.subr.bf16.mxu0 %v1880
    %2655 = vmatpush1.bf16.msra.mxu0 %v1879
    %2656 = vmatprep.subr.bf16.mxu0 %v1888
    %2657 = vmatpush1.bf16.msra.mxu0 %v1887
    %2658 = vmatprep.subr.bf16.mxu0 %v1896
    %2659 = vmatpush1.bf16.msra.mxu0 %v1895
    %2660 = vmatprep.subr.bf16.mxu0 %v1904
    %2661 = vmatpush1.bf16.msra.mxu0 %v1903
    %2662 = vmatprep.subr.bf16.mxu0 %v1912
    %2663 = vmatpush1.bf16.msra.mxu0 %v1911
    %2664 = vmatprep.subr.bf16.mxu0 %v1920
    %2665 = vmatpush1.bf16.msra.mxu0 %v1919
    %2666 = vmatprep.subr.bf16.mxu0 %v1928
    %2667 = vmatpush1.bf16.msra.mxu0 %v1927
    %2668 = vmatprep.subr.bf16.mxu0 %v1936
    %2669 = vmatpush1.bf16.msra.mxu0 %v1935
    %2670 = vmatprep.subr.bf16.mxu0 %v1944
    %2671 = vmatpush1.bf16.msra.mxu0 %v1943
    %2672 = vmatprep.subr.bf16.mxu0 %v1952
    %2673 = vmatpush1.bf16.msra.mxu0 %v1951
    %2674 = vmatprep.subr.bf16.mxu0 %v1960
    %2675 = vmatpush1.bf16.msra.mxu0 %v1959
    %2676 = vmatprep.mubr.bf16.mxu0 %v1446
    %2677 = vmatmul.mubr.bf16.gmra.mrb[0].mxu0 %v1445
    %v2678 = vpop.f32.mrb[0].mxu0
    %v2679 = vadd.f32 %v2638, %v2678
    %v2680 = vpop.f32.mrb[0].mxu0
    %v2681 = vadd.f32 %v2640, %v2680
    %v2682 = vpop.f32.mrb[0].mxu0
    %v2683 = vpop.f32.mrb[0].mxu0
    %2684 = vdwg.mxu0
    %2685 = vmatprep.subr.bf16.mxu0 %v1968
    %2686 = vmatpush1.bf16.msra.mxu0 %v1967
    %2687 = vmatprep.subr.bf16.mxu0 %v1976
    %2688 = vmatpush1.bf16.msra.mxu0 %v1975
    %2689 = vmatprep.subr.bf16.mxu0 %v1984
    %2690 = vmatpush1.bf16.msra.mxu0 %v1983
    %2691 = vmatprep.subr.bf16.mxu0 %v1992
    %2692 = vmatpush1.bf16.msra.mxu0 %v1991
    %2693 = vmatprep.subr.bf16.mxu0 %v2000
    %2694 = vmatpush1.bf16.msra.mxu0 %v1999
    %2695 = vmatprep.subr.bf16.mxu0 %v2008
    %2696 = vmatpush1.bf16.msra.mxu0 %v2007
    %2697 = vmatprep.subr.bf16.mxu0 %v2016
    %2698 = vmatpush1.bf16.msra.mxu0 %v2015
    %2699 = vmatprep.subr.bf16.mxu0 %v2024
    %2700 = vmatpush1.bf16.msra.mxu0 %v2023
    %2701 = vmatprep.subr.bf16.mxu0 %v2032
    %2702 = vmatpush1.bf16.msra.mxu0 %v2031
    %2703 = vmatprep.subr.bf16.mxu0 %v2040
    %2704 = vmatpush1.bf16.msra.mxu0 %v2039
    %2705 = vmatprep.subr.bf16.mxu0 %v2048
    %2706 = vmatpush1.bf16.msra.mxu0 %v2047
    %2707 = vmatprep.subr.bf16.mxu0 %v2056
    %2708 = vmatpush1.bf16.msra.mxu0 %v2055
    %2709 = vmatprep.subr.bf16.mxu0 %v2064
    %2710 = vmatpush1.bf16.msra.mxu0 %v2063
    %2711 = vmatprep.subr.bf16.mxu0 %v2072
    %2712 = vmatpush1.bf16.msra.mxu0 %v2071
    %2713 = vmatprep.subr.bf16.mxu0 %v2080
    %2714 = vmatpush1.bf16.msra.mxu0 %v2079
    %2715 = vmatprep.subr.bf16.mxu0 %v2088
    %2716 = vmatpush1.bf16.msra.mxu0 %v2087
    %2717 = vmatprep.mubr.bf16.mxu0 %v1448
    %2718 = vmatmul.mubr.bf16.gmra.mrb[0].mxu0 %v1447
    %v2719 = vpop.f32.mrb[0].mxu0
    %v2720 = vadd.f32 %v2679, %v2719
    %v2721 = vpop.f32.mrb[0].mxu0
    %v2722 = vadd.f32 %v2681, %v2721
    %v2723 = vpop.f32.mrb[0].mxu0
    %v2724 = vpop.f32.mrb[0].mxu0
    %2725 = vdwg.mxu0
    %2726 = vmatprep.subr.bf16.mxu0 %v2096
    %2727 = vmatpush1.bf16.msra.mxu0 %v2095
    %2728 = vmatprep.subr.bf16.mxu0 %v2104
    %2729 = vmatpush1.bf16.msra.mxu0 %v2103
    %2730 = vmatprep.subr.bf16.mxu0 %v2112
    %2731 = vmatpush1.bf16.msra.mxu0 %v2111
    %2732 = vmatprep.subr.bf16.mxu0 %v2120
    %2733 = vmatpush1.bf16.msra.mxu0 %v2119
    %2734 = vmatprep.subr.bf16.mxu0 %v2128
    %2735 = vmatpush1.bf16.msra.mxu0 %v2127
    %2736 = vmatprep.subr.bf16.mxu0 %v2136
    %2737 = vmatpush1.bf16.msra.mxu0 %v2135
    %2738 = vmatprep.subr.bf16.mxu0 %v2144
    %2739 = vmatpush1.bf16.msra.mxu0 %v2143
    %2740 = vmatprep.subr.bf16.mxu0 %v2152
    %2741 = vmatpush1.bf16.msra.mxu0 %v2151
    %2742 = vmatprep.subr.bf16.mxu0 %v2160
    %2743 = vmatpush1.bf16.msra.mxu0 %v2159
    %2744 = vmatprep.subr.bf16.mxu0 %v2168
    %2745 = vmatpush1.bf16.msra.mxu0 %v2167
    %2746 = vmatprep.subr.bf16.mxu0 %v2176
    %2747 = vmatpush1.bf16.msra.mxu0 %v2175
    %2748 = vmatprep.subr.bf16.mxu0 %v2184
    %2749 = vmatpush1.bf16.msra.mxu0 %v2183
    %2750 = vmatprep.subr.bf16.mxu0 %v2192
    %2751 = vmatpush1.bf16.msra.mxu0 %v2191
    %2752 = vmatprep.subr.bf16.mxu0 %v2200
    %2753 = vmatpush1.bf16.msra.mxu0 %v2199
    %2754 = vmatprep.subr.bf16.mxu0 %v2208
    %2755 = vmatpush1.bf16.msra.mxu0 %v2207
    %2756 = vmatprep.subr.bf16.mxu0 %v2216
    %2757 = vmatpush1.bf16.msra.mxu0 %v2215
    %2758 = vmatprep.mubr.bf16.mxu0 %v1450
    %2759 = vmatmul.mubr.bf16.gmra.mrb[0].mxu0 %v1449
    %v2760 = vpop.f32.mrb[0].mxu0
    %v2761 = vadd.f32 %v2720, %v2760
    %v2762 = vpop.f32.mrb[0].mxu0
    %v2763 = vadd.f32 %v2722, %v2762
    %v2764 = vpop.f32.mrb[0].mxu0
    %v2765 = vpop.f32.mrb[0].mxu0
    %2766 = vdwg.mxu0
    %2767 = vmatprep.subr.bf16.mxu0 %v2224
    %2768 = vmatpush1.bf16.msra.mxu0 %v2223
    %2769 = vmatprep.subr.bf16.mxu0 %v2232
    %2770 = vmatpush1.bf16.msra.mxu0 %v2231
    %2771 = vmatprep.subr.bf16.mxu0 %v2240
    %2772 = vmatpush1.bf16.msra.mxu0 %v2239
    %2773 = vmatprep.subr.bf16.mxu0 %v2248
    %2774 = vmatpush1.bf16.msra.mxu0 %v2247
    %2775 = vmatprep.subr.bf16.mxu0 %v2256
    %2776 = vmatpush1.bf16.msra.mxu0 %v2255
    %2777 = vmatprep.subr.bf16.mxu0 %v2264
    %2778 = vmatpush1.bf16.msra.mxu0 %v2263
    %2779 = vmatprep.subr.bf16.mxu0 %v2272
    %2780 = vmatpush1.bf16.msra.mxu0 %v2271
    %2781 = vmatprep.subr.bf16.mxu0 %v2280
    %2782 = vmatpush1.bf16.msra.mxu0 %v2279
    %2783 = vmatprep.subr.bf16.mxu0 %v2288
    %2784 = vmatpush1.bf16.msra.mxu0 %v2287
    %2785 = vmatprep.subr.bf16.mxu0 %v2296
    %2786 = vmatpush1.bf16.msra.mxu0 %v2295
    %2787 = vmatprep.subr.bf16.mxu0 %v2304
    %2788 = vmatpush1.bf16.msra.mxu0 %v2303
    %2789 = vmatprep.subr.bf16.mxu0 %v2312
    %2790 = vmatpush1.bf16.msra.mxu0 %v2311
    %2791 = vmatprep.subr.bf16.mxu0 %v2320
    %2792 = vmatpush1.bf16.msra.mxu0 %v2319
    %2793 = vmatprep.subr.bf16.mxu0 %v2328
    %2794 = vmatpush1.bf16.msra.mxu0 %v2327
    %2795 = vmatprep.subr.bf16.mxu0 %v2336
    %2796 = vmatpush1.bf16.msra.mxu0 %v2335
    %2797 = vmatprep.subr.bf16.mxu0 %v2344
    %2798 = vmatpush1.bf16.msra.mxu0 %v2343
    %2799 = vmatprep.mubr.bf16.mxu0 %v1452
    %2800 = vmatmul.mubr.bf16.gmra.mrb[0].mxu0 %v1451
    %v2801 = vpop.f32.mrb[0].mxu0
    %v2802 = vadd.f32 %v2761, %v2801
    %v2803 = vpop.f32.mrb[0].mxu0
    %v2804 = vadd.f32 %v2763, %v2803
    %v2805 = vpop.f32.mrb[0].mxu0
    %v2806 = vpop.f32.mrb[0].mxu0
    %2807 = vdwg.mxu0
    %2808 = vmatprep.subr.bf16.mxu0 %v2352
    %2809 = vmatpush1.bf16.msra.mxu0 %v2351
    %2810 = vmatprep.subr.bf16.mxu0 %v2360
    %2811 = vmatpush1.bf16.msra.mxu0 %v2359
    %2812 = vmatprep.subr.bf16.mxu0 %v2368
    %2813 = vmatpush1.bf16.msra.mxu0 %v2367
    %2814 = vmatprep.subr.bf16.mxu0 %v2376
    %2815 = vmatpush1.bf16.msra.mxu0 %v2375
    %2816 = vmatprep.subr.bf16.mxu0 %v2384
    %2817 = vmatpush1.bf16.msra.mxu0 %v2383
    %2818 = vmatprep.subr.bf16.mxu0 %v2392
    %2819 = vmatpush1.bf16.msra.mxu0 %v2391
    %2820 = vmatprep.subr.bf16.mxu0 %v2400
    %2821 = vmatpush1.bf16.msra.mxu0 %v2399
    %2822 = vmatprep.subr.bf16.mxu0 %v2408
    %2823 = vmatpush1.bf16.msra.mxu0 %v2407
    %2824 = vmatprep.subr.bf16.mxu0 %v2416
    %2825 = vmatpush1.bf16.msra.mxu0 %v2415
    %2826 = vmatprep.subr.bf16.mxu0 %v2424
    %2827 = vmatpush1.bf16.msra.mxu0 %v2423
    %2828 = vmatprep.subr.bf16.mxu0 %v2432
    %2829 = vmatpush1.bf16.msra.mxu0 %v2431
    %2830 = vmatprep.subr.bf16.mxu0 %v2440
    %2831 = vmatpush1.bf16.msra.mxu0 %v2439
    %2832 = vmatprep.subr.bf16.mxu0 %v2448
    %2833 = vmatpush1.bf16.msra.mxu0 %v2447
    %2834 = vmatprep.subr.bf16.mxu0 %v2456
    %2835 = vmatpush1.bf16.msra.mxu0 %v2455
    %2836 = vmatprep.subr.bf16.mxu0 %v2464
    %2837 = vmatpush1.bf16.msra.mxu0 %v2463
    %2838 = vmatprep.subr.bf16.mxu0 %v2472
    %2839 = vmatpush1.bf16.msra.mxu0 %v2471
    %2840 = vmatprep.mubr.bf16.mxu0 %v1454
    %2841 = vmatmul.mubr.bf16.gmra.mrb[0].mxu0 %v1453
    %v2842 = vpop.f32.mrb[0].mxu0
    %v2843 = vadd.f32 %v2802, %v2842
    %v2844 = vpop.f32.mrb[0].mxu0
    %v2845 = vadd.f32 %v2804, %v2844
    %v2846 = vpop.f32.mrb[0].mxu0
    %v2847 = vpop.f32.mrb[0].mxu0
    %2848 = vdwg.mxu0
    %2849 = vmatprep.subr.bf16.mxu0 %v1458
    %2850 = vmatpush1.bf16.msra.mxu0 %v1457
    %2851 = vmatprep.subr.bf16.mxu0 %v1466
    %2852 = vmatpush1.bf16.msra.mxu0 %v1465
    %2853 = vmatprep.subr.bf16.mxu0 %v1474
    %2854 = vmatpush1.bf16.msra.mxu0 %v1473
    %2855 = vmatprep.subr.bf16.mxu0 %v1482
    %2856 = vmatpush1.bf16.msra.mxu0 %v1481
    %2857 = vmatprep.subr.bf16.mxu0 %v1490
    %2858 = vmatpush1.bf16.msra.mxu0 %v1489
    %2859 = vmatprep.subr.bf16.mxu0 %v1498
    %2860 = vmatpush1.bf16.msra.mxu0 %v1497
    %2861 = vmatprep.subr.bf16.mxu0 %v1506
    %2862 = vmatpush1.bf16.msra.mxu0 %v1505
    %2863 = vmatprep.subr.bf16.mxu0 %v1514
    %2864 = vmatpush1.bf16.msra.mxu0 %v1513
    %2865 = vmatprep.subr.bf16.mxu0 %v1522
    %2866 = vmatpush1.bf16.msra.mxu0 %v1521
    %2867 = vmatprep.subr.bf16.mxu0 %v1530
    %2868 = vmatpush1.bf16.msra.mxu0 %v1529
    %2869 = vmatprep.subr.bf16.mxu0 %v1538
    %2870 = vmatpush1.bf16.msra.mxu0 %v1537
    %2871 = vmatprep.subr.bf16.mxu0 %v1546
    %2872 = vmatpush1.bf16.msra.mxu0 %v1545
    %2873 = vmatprep.subr.bf16.mxu0 %v1554
    %2874 = vmatpush1.bf16.msra.mxu0 %v1553
    %2875 = vmatprep.subr.bf16.mxu0 %v1562
    %2876 = vmatpush1.bf16.msra.mxu0 %v1561
    %2877 = vmatprep.subr.bf16.mxu0 %v1570
    %2878 = vmatpush1.bf16.msra.mxu0 %v1569
    %2879 = vmatprep.subr.bf16.mxu0 %v1578
    %2880 = vmatpush1.bf16.msra.mxu0 %v1577
    %2881 = vmatprep.mubr.bf16.mxu0 %v1440
    %2882 = vmatmul.mubr.bf16.gmra.mrb[0].mxu0 %v1439
    %v2883 = vpop.f32.mrb[0].mxu0
    %v2884 = vadd.f32 %v2492, %v2883
    %v2885 = vpop.f32.mrb[0].mxu0
    %v2886 = vadd.f32 %v2496, %v2885
    %v2887 = vpop.f32.mrb[0].mxu0
    %v2888 = vpop.f32.mrb[0].mxu0
    %2889 = vdwg.mxu0
    %2890 = vmatprep.subr.bf16.mxu0 %v1586
    %2891 = vmatpush1.bf16.msra.mxu0 %v1585
    %2892 = vmatprep.subr.bf16.mxu0 %v1594
    %2893 = vmatpush1.bf16.msra.mxu0 %v1593
    %2894 = vmatprep.subr.bf16.mxu0 %v1602
    %2895 = vmatpush1.bf16.msra.mxu0 %v1601
    %2896 = vmatprep.subr.bf16.mxu0 %v1610
    %2897 = vmatpush1.bf16.msra.mxu0 %v1609
    %2898 = vmatprep.subr.bf16.mxu0 %v1618
    %2899 = vmatpush1.bf16.msra.mxu0 %v1617
    %2900 = vmatprep.subr.bf16.mxu0 %v1626
    %2901 = vmatpush1.bf16.msra.mxu0 %v1625
    %2902 = vmatprep.subr.bf16.mxu0 %v1634
    %2903 = vmatpush1.bf16.msra.mxu0 %v1633
    %2904 = vmatprep.subr.bf16.mxu0 %v1642
    %2905 = vmatpush1.bf16.msra.mxu0 %v1641
    %2906 = vmatprep.subr.bf16.mxu0 %v1650
    %2907 = vmatpush1.bf16.msra.mxu0 %v1649
    %2908 = vmatprep.subr.bf16.mxu0 %v1658
    %2909 = vmatpush1.bf16.msra.mxu0 %v1657
    %2910 = vmatprep.subr.bf16.mxu0 %v1666
    %2911 = vmatpush1.bf16.msra.mxu0 %v1665
    %2912 = vmatprep.subr.bf16.mxu0 %v1674
    %2913 = vmatpush1.bf16.msra.mxu0 %v1673
    %2914 = vmatprep.subr.bf16.mxu0 %v1682
    %2915 = vmatpush1.bf16.msra.mxu0 %v1681
    %2916 = vmatprep.subr.bf16.mxu0 %v1690
    %2917 = vmatpush1.bf16.msra.mxu0 %v1689
    %2918 = vmatprep.subr.bf16.mxu0 %v1698
    %2919 = vmatpush1.bf16.msra.mxu0 %v1697
    %2920 = vmatprep.subr.bf16.mxu0 %v1706
    %2921 = vmatpush1.bf16.msra.mxu0 %v1705
    %2922 = vmatprep.mubr.bf16.mxu0 %v1442
    %2923 = vmatmul.mubr.bf16.gmra.mrb[0].mxu0 %v1441
    %v2924 = vpop.f32.mrb[0].mxu0
    %v2925 = vadd.f32 %v2884, %v2924
    %v2926 = vpop.f32.mrb[0].mxu0
    %v2927 = vadd.f32 %v2886, %v2926
    %v2928 = vpop.f32.mrb[0].mxu0
    %v2929 = vpop.f32.mrb[0].mxu0
    %2930 = vdwg.mxu0
    %2931 = vmatprep.subr.bf16.mxu0 %v1714
    %2932 = vmatpush1.bf16.msra.mxu0 %v1713
    %2933 = vmatprep.subr.bf16.mxu0 %v1722
    %2934 = vmatpush1.bf16.msra.mxu0 %v1721
    %2935 = vmatprep.subr.bf16.mxu0 %v1730
    %2936 = vmatpush1.bf16.msra.mxu0 %v1729
    %2937 = vmatprep.subr.bf16.mxu0 %v1738
    %2938 = vmatpush1.bf16.msra.mxu0 %v1737
    %2939 = vmatprep.subr.bf16.mxu0 %v1746
    %2940 = vmatpush1.bf16.msra.mxu0 %v1745
    %2941 = vmatprep.subr.bf16.mxu0 %v1754
    %2942 = vmatpush1.bf16.msra.mxu0 %v1753
    %2943 = vmatprep.subr.bf16.mxu0 %v1762
    %2944 = vmatpush1.bf16.msra.mxu0 %v1761
    %2945 = vmatprep.subr.bf16.mxu0 %v1770
    %2946 = vmatpush1.bf16.msra.mxu0 %v1769
    %2947 = vmatprep.subr.bf16.mxu0 %v1778
    %2948 = vmatpush1.bf16.msra.mxu0 %v1777
    %2949 = vmatprep.subr.bf16.mxu0 %v1786
    %2950 = vmatpush1.bf16.msra.mxu0 %v1785
    %2951 = vmatprep.subr.bf16.mxu0 %v1794
    %2952 = vmatpush1.bf16.msra.mxu0 %v1793
    %2953 = vmatprep.subr.bf16.mxu0 %v1802
    %2954 = vmatpush1.bf16.msra.mxu0 %v1801
    %2955 = vmatprep.subr.bf16.mxu0 %v1810
    %2956 = vmatpush1.bf16.msra.mxu0 %v1809
    %2957 = vmatprep.subr.bf16.mxu0 %v1818
    %2958 = vmatpush1.bf16.msra.mxu0 %v1817
    %2959 = vmatprep.subr.bf16.mxu0 %v1826
    %2960 = vmatpush1.bf16.msra.mxu0 %v1825
    %2961 = vmatprep.subr.bf16.mxu0 %v1834
    %2962 = vmatpush1.bf16.msra.mxu0 %v1833
    %2963 = vmatprep.mubr.bf16.mxu0 %v1444
    %2964 = vmatmul.mubr.bf16.gmra.mrb[0].mxu0 %v1443
    %v2965 = vpop.f32.mrb[0].mxu0
    %v2966 = vadd.f32 %v2925, %v2965
    %v2967 = vpop.f32.mrb[0].mxu0
    %v2968 = vadd.f32 %v2927, %v2967
    %v2969 = vpop.f32.mrb[0].mxu0
    %v2970 = vpop.f32.mrb[0].mxu0
    %2971 = vdwg.mxu0
    %2972 = vmatprep.subr.bf16.mxu0 %v1842
    %2973 = vmatpush1.bf16.msra.mxu0 %v1841
    %2974 = vmatprep.subr.bf16.mxu0 %v1850
    %2975 = vmatpush1.bf16.msra.mxu0 %v1849
    %2976 = vmatprep.subr.bf16.mxu0 %v1858
    %2977 = vmatpush1.bf16.msra.mxu0 %v1857
    %2978 = vmatprep.subr.bf16.mxu0 %v1866
    %2979 = vmatpush1.bf16.msra.mxu0 %v1865
    %2980 = vmatprep.subr.bf16.mxu0 %v1874
    %2981 = vmatpush1.bf16.msra.mxu0 %v1873
    %2982 = vmatprep.subr.bf16.mxu0 %v1882
    %2983 = vmatpush1.bf16.msra.mxu0 %v1881
    %2984 = vmatprep.subr.bf16.mxu0 %v1890
    %2985 = vmatpush1.bf16.msra.mxu0 %v1889
    %2986 = vmatprep.subr.bf16.mxu0 %v1898
    %2987 = vmatpush1.bf16.msra.mxu0 %v1897
    %2988 = vmatprep.subr.bf16.mxu0 %v1906
    %2989 = vmatpush1.bf16.msra.mxu0 %v1905
    %2990 = vmatprep.subr.bf16.mxu0 %v1914
    %2991 = vmatpush1.bf16.msra.mxu0 %v1913
    %2992 = vmatprep.subr.bf16.mxu0 %v1922
    %2993 = vmatpush1.bf16.msra.mxu0 %v1921
    %2994 = vmatprep.subr.bf16.mxu0 %v1930
    %2995 = vmatpush1.bf16.msra.mxu0 %v1929
    %2996 = vmatprep.subr.bf16.mxu0 %v1938
    %2997 = vmatpush1.bf16.msra.mxu0 %v1937
    %2998 = vmatprep.subr.bf16.mxu0 %v1946
    %2999 = vmatpush1.bf16.msra.mxu0 %v1945
    %3000 = vmatprep.subr.bf16.mxu0 %v1954
    %3001 = vmatpush1.bf16.msra.mxu0 %v1953
    %3002 = vmatprep.subr.bf16.mxu0 %v1962
    %3003 = vmatpush1.bf16.msra.mxu0 %v1961
    %3004 = vmatprep.mubr.bf16.mxu0 %v1446
    %3005 = vmatmul.mubr.bf16.gmra.mrb[0].mxu0 %v1445
    %v3006 = vpop.f32.mrb[0].mxu0
    %v3007 = vadd.f32 %v2966, %v3006
    %v3008 = vpop.f32.mrb[0].mxu0
    %v3009 = vadd.f32 %v2968, %v3008
    %v3010 = vpop.f32.mrb[0].mxu0
    %v3011 = vpop.f32.mrb[0].mxu0
    %3012 = vdwg.mxu0
    %3013 = vmatprep.subr.bf16.mxu0 %v1970
    %3014 = vmatpush1.bf16.msra.mxu0 %v1969
    %3015 = vmatprep.subr.bf16.mxu0 %v1978
    %3016 = vmatpush1.bf16.msra.mxu0 %v1977
    %3017 = vmatprep.subr.bf16.mxu0 %v1986
    %3018 = vmatpush1.bf16.msra.mxu0 %v1985
    %3019 = vmatprep.subr.bf16.mxu0 %v1994
    %3020 = vmatpush1.bf16.msra.mxu0 %v1993
    %3021 = vmatprep.subr.bf16.mxu0 %v2002
    %3022 = vmatpush1.bf16.msra.mxu0 %v2001
    %3023 = vmatprep.subr.bf16.mxu0 %v2010
    %3024 = vmatpush1.bf16.msra.mxu0 %v2009
    %3025 = vmatprep.subr.bf16.mxu0 %v2018
    %3026 = vmatpush1.bf16.msra.mxu0 %v2017
    %3027 = vmatprep.subr.bf16.mxu0 %v2026
    %3028 = vmatpush1.bf16.msra.mxu0 %v2025
    %3029 = vmatprep.subr.bf16.mxu0 %v2034
    %3030 = vmatpush1.bf16.msra.mxu0 %v2033
    %3031 = vmatprep.subr.bf16.mxu0 %v2042
    %3032 = vmatpush1.bf16.msra.mxu0 %v2041
    %3033 = vmatprep.subr.bf16.mxu0 %v2050
    %3034 = vmatpush1.bf16.msra.mxu0 %v2049
    %3035 = vmatprep.subr.bf16.mxu0 %v2058
    %3036 = vmatpush1.bf16.msra.mxu0 %v2057
    %3037 = vmatprep.subr.bf16.mxu0 %v2066
    %3038 = vmatpush1.bf16.msra.mxu0 %v2065
    %3039 = vmatprep.subr.bf16.mxu0 %v2074
    %3040 = vmatpush1.bf16.msra.mxu0 %v2073
    %3041 = vmatprep.subr.bf16.mxu0 %v2082
    %3042 = vmatpush1.bf16.msra.mxu0 %v2081
    %3043 = vmatprep.subr.bf16.mxu0 %v2090
    %3044 = vmatpush1.bf16.msra.mxu0 %v2089
    %3045 = vmatprep.mubr.bf16.mxu0 %v1448
    %3046 = vmatmul.mubr.bf16.gmra.mrb[0].mxu0 %v1447
    %v3047 = vpop.f32.mrb[0].mxu0
    %v3048 = vadd.f32 %v3007, %v3047
    %v3049 = vpop.f32.mrb[0].mxu0
    %v3050 = vadd.f32 %v3009, %v3049
    %v3051 = vpop.f32.mrb[0].mxu0
    %v3052 = vpop.f32.mrb[0].mxu0
    %3053 = vdwg.mxu0
    %3054 = vmatprep.subr.bf16.mxu0 %v2098
    %3055 = vmatpush1.bf16.msra.mxu0 %v2097
    %3056 = vmatprep.subr.bf16.mxu0 %v2106
    %3057 = vmatpush1.bf16.msra.mxu0 %v2105
    %3058 = vmatprep.subr.bf16.mxu0 %v2114
    %3059 = vmatpush1.bf16.msra.mxu0 %v2113
    %3060 = vmatprep.subr.bf16.mxu0 %v2122
    %3061 = vmatpush1.bf16.msra.mxu0 %v2121
    %3062 = vmatprep.subr.bf16.mxu0 %v2130
    %3063 = vmatpush1.bf16.msra.mxu0 %v2129
    %3064 = vmatprep.subr.bf16.mxu0 %v2138
    %3065 = vmatpush1.bf16.msra.mxu0 %v2137
    %3066 = vmatprep.subr.bf16.mxu0 %v2146
    %3067 = vmatpush1.bf16.msra.mxu0 %v2145
    %3068 = vmatprep.subr.bf16.mxu0 %v2154
    %3069 = vmatpush1.bf16.msra.mxu0 %v2153
    %3070 = vmatprep.subr.bf16.mxu0 %v2162
    %3071 = vmatpush1.bf16.msra.mxu0 %v2161
    %3072 = vmatprep.subr.bf16.mxu0 %v2170
    %3073 = vmatpush1.bf16.msra.mxu0 %v2169
    %3074 = vmatprep.subr.bf16.mxu0 %v2178
    %3075 = vmatpush1.bf16.msra.mxu0 %v2177
    %3076 = vmatprep.subr.bf16.mxu0 %v2186
    %3077 = vmatpush1.bf16.msra.mxu0 %v2185
    %3078 = vmatprep.subr.bf16.mxu0 %v2194
    %3079 = vmatpush1.bf16.msra.mxu0 %v2193
    %3080 = vmatprep.subr.bf16.mxu0 %v2202
    %3081 = vmatpush1.bf16.msra.mxu0 %v2201
    %3082 = vmatprep.subr.bf16.mxu0 %v2210
    %3083 = vmatpush1.bf16.msra.mxu0 %v2209
    %3084 = vmatprep.subr.bf16.mxu0 %v2218
    %3085 = vmatpush1.bf16.msra.mxu0 %v2217
    %3086 = vmatprep.mubr.bf16.mxu0 %v1450
    %3087 = vmatmul.mubr.bf16.gmra.mrb[0].mxu0 %v1449
    %v3088 = vpop.f32.mrb[0].mxu0
    %v3089 = vadd.f32 %v3048, %v3088
    %v3090 = vpop.f32.mrb[0].mxu0
    %v3091 = vadd.f32 %v3050, %v3090
    %v3092 = vpop.f32.mrb[0].mxu0
    %v3093 = vpop.f32.mrb[0].mxu0
    %3094 = vdwg.mxu0
    %3095 = vmatprep.subr.bf16.mxu0 %v2226
    %3096 = vmatpush1.bf16.msra.mxu0 %v2225
    %3097 = vmatprep.subr.bf16.mxu0 %v2234
    %3098 = vmatpush1.bf16.msra.mxu0 %v2233
    %3099 = vmatprep.subr.bf16.mxu0 %v2242
    %3100 = vmatpush1.bf16.msra.mxu0 %v2241
    %3101 = vmatprep.subr.bf16.mxu0 %v2250
    %3102 = vmatpush1.bf16.msra.mxu0 %v2249
    %3103 = vmatprep.subr.bf16.mxu0 %v2258
    %3104 = vmatpush1.bf16.msra.mxu0 %v2257
    %3105 = vmatprep.subr.bf16.mxu0 %v2266
    %3106 = vmatpush1.bf16.msra.mxu0 %v2265
    %3107 = vmatprep.subr.bf16.mxu0 %v2274
    %3108 = vmatpush1.bf16.msra.mxu0 %v2273
    %3109 = vmatprep.subr.bf16.mxu0 %v2282
    %3110 = vmatpush1.bf16.msra.mxu0 %v2281
    %3111 = vmatprep.subr.bf16.mxu0 %v2290
    %3112 = vmatpush1.bf16.msra.mxu0 %v2289
    %3113 = vmatprep.subr.bf16.mxu0 %v2298
    %3114 = vmatpush1.bf16.msra.mxu0 %v2297
    %3115 = vmatprep.subr.bf16.mxu0 %v2306
    %3116 = vmatpush1.bf16.msra.mxu0 %v2305
    %3117 = vmatprep.subr.bf16.mxu0 %v2314
    %3118 = vmatpush1.bf16.msra.mxu0 %v2313
    %3119 = vmatprep.subr.bf16.mxu0 %v2322
    %3120 = vmatpush1.bf16.msra.mxu0 %v2321
    %3121 = vmatprep.subr.bf16.mxu0 %v2330
    %3122 = vmatpush1.bf16.msra.mxu0 %v2329
    %3123 = vmatprep.subr.bf16.mxu0 %v2338
    %3124 = vmatpush1.bf16.msra.mxu0 %v2337
    %3125 = vmatprep.subr.bf16.mxu0 %v2346
    %3126 = vmatpush1.bf16.msra.mxu0 %v2345
    %3127 = vmatprep.mubr.bf16.mxu0 %v1452
    %3128 = vmatmul.mubr.bf16.gmra.mrb[0].mxu0 %v1451
    %v3129 = vpop.f32.mrb[0].mxu0
    %v3130 = vadd.f32 %v3089, %v3129
    %v3131 = vpop.f32.mrb[0].mxu0
    %v3132 = vadd.f32 %v3091, %v3131
    %v3133 = vpop.f32.mrb[0].mxu0
    %v3134 = vpop.f32.mrb[0].mxu0
    %3135 = vdwg.mxu0
    %3136 = vmatprep.subr.bf16.mxu0 %v2354
    %3137 = vmatpush1.bf16.msra.mxu0 %v2353
    %3138 = vmatprep.subr.bf16.mxu0 %v2362
    %3139 = vmatpush1.bf16.msra.mxu0 %v2361
    %3140 = vmatprep.subr.bf16.mxu0 %v2370
    %3141 = vmatpush1.bf16.msra.mxu0 %v2369
    %3142 = vmatprep.subr.bf16.mxu0 %v2378
    %3143 = vmatpush1.bf16.msra.mxu0 %v2377
    %3144 = vmatprep.subr.bf16.mxu0 %v2386
    %3145 = vmatpush1.bf16.msra.mxu0 %v2385
    %3146 = vmatprep.subr.bf16.mxu0 %v2394
    %3147 = vmatpush1.bf16.msra.mxu0 %v2393
    %3148 = vmatprep.subr.bf16.mxu0 %v2402
    %3149 = vmatpush1.bf16.msra.mxu0 %v2401
    %3150 = vmatprep.subr.bf16.mxu0 %v2410
    %3151 = vmatpush1.bf16.msra.mxu0 %v2409
    %3152 = vmatprep.subr.bf16.mxu0 %v2418
    %3153 = vmatpush1.bf16.msra.mxu0 %v2417
    %3154 = vmatprep.subr.bf16.mxu0 %v2426
    %3155 = vmatpush1.bf16.msra.mxu0 %v2425
    %3156 = vmatprep.subr.bf16.mxu0 %v2434
    %3157 = vmatpush1.bf16.msra.mxu0 %v2433
    %3158 = vmatprep.subr.bf16.mxu0 %v2442
    %3159 = vmatpush1.bf16.msra.mxu0 %v2441
    %3160 = vmatprep.subr.bf16.mxu0 %v2450
    %3161 = vmatpush1.bf16.msra.mxu0 %v2449
    %3162 = vmatprep.subr.bf16.mxu0 %v2458
    %3163 = vmatpush1.bf16.msra.mxu0 %v2457
    %3164 = vmatprep.subr.bf16.mxu0 %v2466
    %3165 = vmatpush1.bf16.msra.mxu0 %v2465
    %3166 = vmatprep.subr.bf16.mxu0 %v2474
    %3167 = vmatpush1.bf16.msra.mxu0 %v2473
    %3168 = vmatprep.mubr.bf16.mxu0 %v1454
    %3169 = vmatmul.mubr.bf16.gmra.mrb[0].mxu0 %v1453
    %v3170 = vpop.f32.mrb[0].mxu0
    %v3171 = vadd.f32 %v3130, %v3170
    %v3172 = vpop.f32.mrb[0].mxu0
    %v3173 = vadd.f32 %v3132, %v3172
    %v3174 = vpop.f32.mrb[0].mxu0
    %v3175 = vpop.f32.mrb[0].mxu0
    %3176 = vdwg.mxu0
    %3177 = vmatprep.subr.bf16.mxu0 %v1460
    %3178 = vmatpush1.bf16.msra.mxu0 %v1459
    %3179 = vmatprep.subr.bf16.mxu0 %v1468
    %3180 = vmatpush1.bf16.msra.mxu0 %v1467
    %3181 = vmatprep.subr.bf16.mxu0 %v1476
    %3182 = vmatpush1.bf16.msra.mxu0 %v1475
    %3183 = vmatprep.subr.bf16.mxu0 %v1484
    %3184 = vmatpush1.bf16.msra.mxu0 %v1483
    %3185 = vmatprep.subr.bf16.mxu0 %v1492
    %3186 = vmatpush1.bf16.msra.mxu0 %v1491
    %3187 = vmatprep.subr.bf16.mxu0 %v1500
    %3188 = vmatpush1.bf16.msra.mxu0 %v1499
    %3189 = vmatprep.subr.bf16.mxu0 %v1508
    %3190 = vmatpush1.bf16.msra.mxu0 %v1507
    %3191 = vmatprep.subr.bf16.mxu0 %v1516
    %3192 = vmatpush1.bf16.msra.mxu0 %v1515
    %3193 = vmatprep.subr.bf16.mxu0 %v1524
    %3194 = vmatpush1.bf16.msra.mxu0 %v1523
    %3195 = vmatprep.subr.bf16.mxu0 %v1532
    %3196 = vmatpush1.bf16.msra.mxu0 %v1531
    %3197 = vmatprep.subr.bf16.mxu0 %v1540
    %3198 = vmatpush1.bf16.msra.mxu0 %v1539
    %3199 = vmatprep.subr.bf16.mxu0 %v1548
    %3200 = vmatpush1.bf16.msra.mxu0 %v1547
    %3201 = vmatprep.subr.bf16.mxu0 %v1556
    %3202 = vmatpush1.bf16.msra.mxu0 %v1555
    %3203 = vmatprep.subr.bf16.mxu0 %v1564
    %3204 = vmatpush1.bf16.msra.mxu0 %v1563
    %3205 = vmatprep.subr.bf16.mxu0 %v1572
    %3206 = vmatpush1.bf16.msra.mxu0 %v1571
    %3207 = vmatprep.subr.bf16.mxu0 %v1580
    %3208 = vmatpush1.bf16.msra.mxu0 %v1579
    %3209 = vmatprep.mubr.bf16.mxu0 %v1440
    %3210 = vmatmul.mubr.bf16.gmra.mrb[0].mxu0 %v1439
    %v3211 = vpop.f32.mrb[0].mxu0
    %v3212 = vadd.f32 %v2500, %v3211
    %v3213 = vpop.f32.mrb[0].mxu0
    %v3214 = vadd.f32 %v2504, %v3213
    %v3215 = vpop.f32.mrb[0].mxu0
    %v3216 = vpop.f32.mrb[0].mxu0
    %3217 = vdwg.mxu0
    %3218 = vmatprep.subr.bf16.mxu0 %v1588
    %3219 = vmatpush1.bf16.msra.mxu0 %v1587
    %3220 = vmatprep.subr.bf16.mxu0 %v1596
    %3221 = vmatpush1.bf16.msra.mxu0 %v1595
    %3222 = vmatprep.subr.bf16.mxu0 %v1604
    %3223 = vmatpush1.bf16.msra.mxu0 %v1603
    %3224 = vmatprep.subr.bf16.mxu0 %v1612
    %3225 = vmatpush1.bf16.msra.mxu0 %v1611
    %3226 = vmatprep.subr.bf16.mxu0 %v1620
    %3227 = vmatpush1.bf16.msra.mxu0 %v1619
    %3228 = vmatprep.subr.bf16.mxu0 %v1628
    %3229 = vmatpush1.bf16.msra.mxu0 %v1627
    %3230 = vmatprep.subr.bf16.mxu0 %v1636
    %3231 = vmatpush1.bf16.msra.mxu0 %v1635
    %3232 = vmatprep.subr.bf16.mxu0 %v1644
    %3233 = vmatpush1.bf16.msra.mxu0 %v1643
    %3234 = vmatprep.subr.bf16.mxu0 %v1652
    %3235 = vmatpush1.bf16.msra.mxu0 %v1651
    %3236 = vmatprep.subr.bf16.mxu0 %v1660
    %3237 = vmatpush1.bf16.msra.mxu0 %v1659
    %3238 = vmatprep.subr.bf16.mxu0 %v1668
    %3239 = vmatpush1.bf16.msra.mxu0 %v1667
    %3240 = vmatprep.subr.bf16.mxu0 %v1676
    %3241 = vmatpush1.bf16.msra.mxu0 %v1675
    %3242 = vmatprep.subr.bf16.mxu0 %v1684
    %3243 = vmatpush1.bf16.msra.mxu0 %v1683
    %3244 = vmatprep.subr.bf16.mxu0 %v1692
    %3245 = vmatpush1.bf16.msra.mxu0 %v1691
    %3246 = vmatprep.subr.bf16.mxu0 %v1700
    %3247 = vmatpush1.bf16.msra.mxu0 %v1699
    %3248 = vmatprep.subr.bf16.mxu0 %v1708
    %3249 = vmatpush1.bf16.msra.mxu0 %v1707
    %3250 = vmatprep.mubr.bf16.mxu0 %v1442
    %3251 = vmatmul.mubr.bf16.gmra.mrb[0].mxu0 %v1441
    %v3252 = vpop.f32.mrb[0].mxu0
    %v3253 = vadd.f32 %v3212, %v3252
    %v3254 = vpop.f32.mrb[0].mxu0
    %v3255 = vadd.f32 %v3214, %v3254
    %v3256 = vpop.f32.mrb[0].mxu0
    %v3257 = vpop.f32.mrb[0].mxu0
    %3258 = vdwg.mxu0
    %3259 = vmatprep.subr.bf16.mxu0 %v1716
    %3260 = vmatpush1.bf16.msra.mxu0 %v1715
    %3261 = vmatprep.subr.bf16.mxu0 %v1724
    %3262 = vmatpush1.bf16.msra.mxu0 %v1723
    %3263 = vmatprep.subr.bf16.mxu0 %v1732
    %3264 = vmatpush1.bf16.msra.mxu0 %v1731
    %3265 = vmatprep.subr.bf16.mxu0 %v1740
    %3266 = vmatpush1.bf16.msra.mxu0 %v1739
    %3267 = vmatprep.subr.bf16.mxu0 %v1748
    %3268 = vmatpush1.bf16.msra.mxu0 %v1747
    %3269 = vmatprep.subr.bf16.mxu0 %v1756
    %3270 = vmatpush1.bf16.msra.mxu0 %v1755
    %3271 = vmatprep.subr.bf16.mxu0 %v1764
    %3272 = vmatpush1.bf16.msra.mxu0 %v1763
    %3273 = vmatprep.subr.bf16.mxu0 %v1772
    %3274 = vmatpush1.bf16.msra.mxu0 %v1771
    %3275 = vmatprep.subr.bf16.mxu0 %v1780
    %3276 = vmatpush1.bf16.msra.mxu0 %v1779
    %3277 = vmatprep.subr.bf16.mxu0 %v1788
    %3278 = vmatpush1.bf16.msra.mxu0 %v1787
    %3279 = vmatprep.subr.bf16.mxu0 %v1796
    %3280 = vmatpush1.bf16.msra.mxu0 %v1795
    %3281 = vmatprep.subr.bf16.mxu0 %v1804
    %3282 = vmatpush1.bf16.msra.mxu0 %v1803
    %3283 = vmatprep.subr.bf16.mxu0 %v1812
    %3284 = vmatpush1.bf16.msra.mxu0 %v1811
    %3285 = vmatprep.subr.bf16.mxu0 %v1820
    %3286 = vmatpush1.bf16.msra.mxu0 %v1819
    %3287 = vmatprep.subr.bf16.mxu0 %v1828
    %3288 = vmatpush1.bf16.msra.mxu0 %v1827
    %3289 = vmatprep.subr.bf16.mxu0 %v1836
    %3290 = vmatpush1.bf16.msra.mxu0 %v1835
    %3291 = vmatprep.mubr.bf16.mxu0 %v1444
    %3292 = vmatmul.mubr.bf16.gmra.mrb[0].mxu0 %v1443
    %v3293 = vpop.f32.mrb[0].mxu0
    %v3294 = vadd.f32 %v3253, %v3293
    %v3295 = vpop.f32.mrb[0].mxu0
    %v3296 = vadd.f32 %v3255, %v3295
    %v3297 = vpop.f32.mrb[0].mxu0
    %v3298 = vpop.f32.mrb[0].mxu0
    %3299 = vdwg.mxu0
    %3300 = vmatprep.subr.bf16.mxu0 %v1844
    %3301 = vmatpush1.bf16.msra.mxu0 %v1843
    %3302 = vmatprep.subr.bf16.mxu0 %v1852
    %3303 = vmatpush1.bf16.msra.mxu0 %v1851
    %3304 = vmatprep.subr.bf16.mxu0 %v1860
    %3305 = vmatpush1.bf16.msra.mxu0 %v1859
    %3306 = vmatprep.subr.bf16.mxu0 %v1868
    %3307 = vmatpush1.bf16.msra.mxu0 %v1867
    %3308 = vmatprep.subr.bf16.mxu0 %v1876
    %3309 = vmatpush1.bf16.msra.mxu0 %v1875
    %3310 = vmatprep.subr.bf16.mxu0 %v1884
    %3311 = vmatpush1.bf16.msra.mxu0 %v1883
    %3312 = vmatprep.subr.bf16.mxu0 %v1892
    %3313 = vmatpush1.bf16.msra.mxu0 %v1891
    %3314 = vmatprep.subr.bf16.mxu0 %v1900
    %3315 = vmatpush1.bf16.msra.mxu0 %v1899
    %3316 = vmatprep.subr.bf16.mxu0 %v1908
    %3317 = vmatpush1.bf16.msra.mxu0 %v1907
    %3318 = vmatprep.subr.bf16.mxu0 %v1916
    %3319 = vmatpush1.bf16.msra.mxu0 %v1915
    %3320 = vmatprep.subr.bf16.mxu0 %v1924
    %3321 = vmatpush1.bf16.msra.mxu0 %v1923
    %3322 = vmatprep.subr.bf16.mxu0 %v1932
    %3323 = vmatpush1.bf16.msra.mxu0 %v1931
    %3324 = vmatprep.subr.bf16.mxu0 %v1940
    %3325 = vmatpush1.bf16.msra.mxu0 %v1939
    %3326 = vmatprep.subr.bf16.mxu0 %v1948
    %3327 = vmatpush1.bf16.msra.mxu0 %v1947
    %3328 = vmatprep.subr.bf16.mxu0 %v1956
    %3329 = vmatpush1.bf16.msra.mxu0 %v1955
    %3330 = vmatprep.subr.bf16.mxu0 %v1964
    %3331 = vmatpush1.bf16.msra.mxu0 %v1963
    %3332 = vmatprep.mubr.bf16.mxu0 %v1446
    %3333 = vmatmul.mubr.bf16.gmra.mrb[0].mxu0 %v1445
    %v3334 = vpop.f32.mrb[0].mxu0
    %v3335 = vadd.f32 %v3294, %v3334
    %v3336 = vpop.f32.mrb[0].mxu0
    %v3337 = vadd.f32 %v3296, %v3336
    %v3338 = vpop.f32.mrb[0].mxu0
    %v3339 = vpop.f32.mrb[0].mxu0
    %3340 = vdwg.mxu0
    %3341 = vmatprep.subr.bf16.mxu0 %v1972
    %3342 = vmatpush1.bf16.msra.mxu0 %v1971
    %3343 = vmatprep.subr.bf16.mxu0 %v1980
    %3344 = vmatpush1.bf16.msra.mxu0 %v1979
    %3345 = vmatprep.subr.bf16.mxu0 %v1988
    %3346 = vmatpush1.bf16.msra.mxu0 %v1987
    %3347 = vmatprep.subr.bf16.mxu0 %v1996
    %3348 = vmatpush1.bf16.msra.mxu0 %v1995
    %3349 = vmatprep.subr.bf16.mxu0 %v2004
    %3350 = vmatpush1.bf16.msra.mxu0 %v2003
    %3351 = vmatprep.subr.bf16.mxu0 %v2012
    %3352 = vmatpush1.bf16.msra.mxu0 %v2011
    %3353 = vmatprep.subr.bf16.mxu0 %v2020
    %3354 = vmatpush1.bf16.msra.mxu0 %v2019
    %3355 = vmatprep.subr.bf16.mxu0 %v2028
    %3356 = vmatpush1.bf16.msra.mxu0 %v2027
    %3357 = vmatprep.subr.bf16.mxu0 %v2036
    %3358 = vmatpush1.bf16.msra.mxu0 %v2035
    %3359 = vmatprep.subr.bf16.mxu0 %v2044
    %3360 = vmatpush1.bf16.msra.mxu0 %v2043
    %3361 = vmatprep.subr.bf16.mxu0 %v2052
    %3362 = vmatpush1.bf16.msra.mxu0 %v2051
    %3363 = vmatprep.subr.bf16.mxu0 %v2060
    %3364 = vmatpush1.bf16.msra.mxu0 %v2059
    %3365 = vmatprep.subr.bf16.mxu0 %v2068
    %3366 = vmatpush1.bf16.msra.mxu0 %v2067
    %3367 = vmatprep.subr.bf16.mxu0 %v2076
    %3368 = vmatpush1.bf16.msra.mxu0 %v2075
    %3369 = vmatprep.subr.bf16.mxu0 %v2084
    %3370 = vmatpush1.bf16.msra.mxu0 %v2083
    %3371 = vmatprep.subr.bf16.mxu0 %v2092
    %3372 = vmatpush1.bf16.msra.mxu0 %v2091
    %3373 = vmatprep.mubr.bf16.mxu0 %v1448
    %3374 = vmatmul.mubr.bf16.gmra.mrb[0].mxu0 %v1447
    %v3375 = vpop.f32.mrb[0].mxu0
    %v3376 = vadd.f32 %v3335, %v3375
    %v3377 = vpop.f32.mrb[0].mxu0
    %v3378 = vadd.f32 %v3337, %v3377
    %v3379 = vpop.f32.mrb[0].mxu0
    %v3380 = vpop.f32.mrb[0].mxu0
    %3381 = vdwg.mxu0
    %3382 = vmatprep.subr.bf16.mxu0 %v2100
    %3383 = vmatpush1.bf16.msra.mxu0 %v2099
    %3384 = vmatprep.subr.bf16.mxu0 %v2108
    %3385 = vmatpush1.bf16.msra.mxu0 %v2107
    %3386 = vmatprep.subr.bf16.mxu0 %v2116
    %3387 = vmatpush1.bf16.msra.mxu0 %v2115
    %3388 = vmatprep.subr.bf16.mxu0 %v2124
    %3389 = vmatpush1.bf16.msra.mxu0 %v2123
    %3390 = vmatprep.subr.bf16.mxu0 %v2132
    %3391 = vmatpush1.bf16.msra.mxu0 %v2131
    %3392 = vmatprep.subr.bf16.mxu0 %v2140
    %3393 = vmatpush1.bf16.msra.mxu0 %v2139
    %3394 = vmatprep.subr.bf16.mxu0 %v2148
    %3395 = vmatpush1.bf16.msra.mxu0 %v2147
    %3396 = vmatprep.subr.bf16.mxu0 %v2156
    %3397 = vmatpush1.bf16.msra.mxu0 %v2155
    %3398 = vmatprep.subr.bf16.mxu0 %v2164
    %3399 = vmatpush1.bf16.msra.mxu0 %v2163
    %3400 = vmatprep.subr.bf16.mxu0 %v2172
    %3401 = vmatpush1.bf16.msra.mxu0 %v2171
    %3402 = vmatprep.subr.bf16.mxu0 %v2180
    %3403 = vmatpush1.bf16.msra.mxu0 %v2179
    %3404 = vmatprep.subr.bf16.mxu0 %v2188
    %3405 = vmatpush1.bf16.msra.mxu0 %v2187
    %3406 = vmatprep.subr.bf16.mxu0 %v2196
    %3407 = vmatpush1.bf16.msra.mxu0 %v2195
    %3408 = vmatprep.subr.bf16.mxu0 %v2204
    %3409 = vmatpush1.bf16.msra.mxu0 %v2203
    %3410 = vmatprep.subr.bf16.mxu0 %v2212
    %3411 = vmatpush1.bf16.msra.mxu0 %v2211
    %3412 = vmatprep.subr.bf16.mxu0 %v2220
    %3413 = vmatpush1.bf16.msra.mxu0 %v2219
    %3414 = vmatprep.mubr.bf16.mxu0 %v1450
    %3415 = vmatmul.mubr.bf16.gmra.mrb[0].mxu0 %v1449
    %v3416 = vpop.f32.mrb[0].mxu0
    %v3417 = vadd.f32 %v3376, %v3416
    %v3418 = vpop.f32.mrb[0].mxu0
    %v3419 = vadd.f32 %v3378, %v3418
    %v3420 = vpop.f32.mrb[0].mxu0
    %v3421 = vpop.f32.mrb[0].mxu0
    %3422 = vdwg.mxu0
    %3423 = vmatprep.subr.bf16.mxu0 %v2228
    %3424 = vmatpush1.bf16.msra.mxu0 %v2227
    %3425 = vmatprep.subr.bf16.mxu0 %v2236
    %3426 = vmatpush1.bf16.msra.mxu0 %v2235
    %3427 = vmatprep.subr.bf16.mxu0 %v2244
    %3428 = vmatpush1.bf16.msra.mxu0 %v2243
    %3429 = vmatprep.subr.bf16.mxu0 %v2252
    %3430 = vmatpush1.bf16.msra.mxu0 %v2251
    %3431 = vmatprep.subr.bf16.mxu0 %v2260
    %3432 = vmatpush1.bf16.msra.mxu0 %v2259
    %3433 = vmatprep.subr.bf16.mxu0 %v2268
    %3434 = vmatpush1.bf16.msra.mxu0 %v2267
    %3435 = vmatprep.subr.bf16.mxu0 %v2276
    %3436 = vmatpush1.bf16.msra.mxu0 %v2275
    %3437 = vmatprep.subr.bf16.mxu0 %v2284
    %3438 = vmatpush1.bf16.msra.mxu0 %v2283
    %3439 = vmatprep.subr.bf16.mxu0 %v2292
    %3440 = vmatpush1.bf16.msra.mxu0 %v2291
    %3441 = vmatprep.subr.bf16.mxu0 %v2300
    %3442 = vmatpush1.bf16.msra.mxu0 %v2299
    %3443 = vmatprep.subr.bf16.mxu0 %v2308
    %3444 = vmatpush1.bf16.msra.mxu0 %v2307
    %3445 = vmatprep.subr.bf16.mxu0 %v2316
    %3446 = vmatpush1.bf16.msra.mxu0 %v2315
    %3447 = vmatprep.subr.bf16.mxu0 %v2324
    %3448 = vmatpush1.bf16.msra.mxu0 %v2323
    %3449 = vmatprep.subr.bf16.mxu0 %v2332
    %3450 = vmatpush1.bf16.msra.mxu0 %v2331
    %3451 = vmatprep.subr.bf16.mxu0 %v2340
    %3452 = vmatpush1.bf16.msra.mxu0 %v2339
    %3453 = vmatprep.subr.bf16.mxu0 %v2348
    %3454 = vmatpush1.bf16.msra.mxu0 %v2347
    %3455 = vmatprep.mubr.bf16.mxu0 %v1452
    %3456 = vmatmul.mubr.bf16.gmra.mrb[0].mxu0 %v1451
    %v3457 = vpop.f32.mrb[0].mxu0
    %v3458 = vadd.f32 %v3417, %v3457
    %v3459 = vpop.f32.mrb[0].mxu0
    %v3460 = vadd.f32 %v3419, %v3459
    %v3461 = vpop.f32.mrb[0].mxu0
    %v3462 = vpop.f32.mrb[0].mxu0
    %3463 = vdwg.mxu0
    %3464 = vmatprep.subr.bf16.mxu0 %v2356
    %3465 = vmatpush1.bf16.msra.mxu0 %v2355
    %3466 = vmatprep.subr.bf16.mxu0 %v2364
    %3467 = vmatpush1.bf16.msra.mxu0 %v2363
    %3468 = vmatprep.subr.bf16.mxu0 %v2372
    %3469 = vmatpush1.bf16.msra.mxu0 %v2371
    %3470 = vmatprep.subr.bf16.mxu0 %v2380
    %3471 = vmatpush1.bf16.msra.mxu0 %v2379
    %3472 = vmatprep.subr.bf16.mxu0 %v2388
    %3473 = vmatpush1.bf16.msra.mxu0 %v2387
    %3474 = vmatprep.subr.bf16.mxu0 %v2396
    %3475 = vmatpush1.bf16.msra.mxu0 %v2395
    %3476 = vmatprep.subr.bf16.mxu0 %v2404
    %3477 = vmatpush1.bf16.msra.mxu0 %v2403
    %3478 = vmatprep.subr.bf16.mxu0 %v2412
    %3479 = vmatpush1.bf16.msra.mxu0 %v2411
    %3480 = vmatprep.subr.bf16.mxu0 %v2420
    %3481 = vmatpush1.bf16.msra.mxu0 %v2419
    %3482 = vmatprep.subr.bf16.mxu0 %v2428
    %3483 = vmatpush1.bf16.msra.mxu0 %v2427
    %3484 = vmatprep.subr.bf16.mxu0 %v2436
    %3485 = vmatpush1.bf16.msra.mxu0 %v2435
    %3486 = vmatprep.subr.bf16.mxu0 %v2444
    %3487 = vmatpush1.bf16.msra.mxu0 %v2443
    %3488 = vmatprep.subr.bf16.mxu0 %v2452
    %3489 = vmatpush1.bf16.msra.mxu0 %v2451
    %3490 = vmatprep.subr.bf16.mxu0 %v2460
    %3491 = vmatpush1.bf16.msra.mxu0 %v2459
    %3492 = vmatprep.subr.bf16.mxu0 %v2468
    %3493 = vmatpush1.bf16.msra.mxu0 %v2467
    %3494 = vmatprep.subr.bf16.mxu0 %v2476
    %3495 = vmatpush1.bf16.msra.mxu0 %v2475
    %3496 = vmatprep.mubr.bf16.mxu0 %v1454
    %3497 = vmatmul.mubr.bf16.gmra.mrb[0].mxu0 %v1453
    %v3498 = vpop.f32.mrb[0].mxu0
    %v3499 = vadd.f32 %v3458, %v3498
    %v3500 = vpop.f32.mrb[0].mxu0
    %v3501 = vadd.f32 %v3460, %v3500
    %v3502 = vpop.f32.mrb[0].mxu0
    %v3503 = vpop.f32.mrb[0].mxu0
    %3504 = vdwg.mxu0
    %3505 = vmatprep.subr.bf16.mxu0 %v1462
    %3506 = vmatpush1.bf16.msra.mxu0 %v1461
    %3507 = vmatprep.subr.bf16.mxu0 %v1470
    %3508 = vmatpush1.bf16.msra.mxu0 %v1469
    %3509 = vmatprep.subr.bf16.mxu0 %v1478
    %3510 = vmatpush1.bf16.msra.mxu0 %v1477
    %3511 = vmatprep.subr.bf16.mxu0 %v1486
    %3512 = vmatpush1.bf16.msra.mxu0 %v1485
    %3513 = vmatprep.subr.bf16.mxu0 %v1494
    %3514 = vmatpush1.bf16.msra.mxu0 %v1493
    %3515 = vmatprep.subr.bf16.mxu0 %v1502
    %3516 = vmatpush1.bf16.msra.mxu0 %v1501
    %3517 = vmatprep.subr.bf16.mxu0 %v1510
    %3518 = vmatpush1.bf16.msra.mxu0 %v1509
    %3519 = vmatprep.subr.bf16.mxu0 %v1518
    %3520 = vmatpush1.bf16.msra.mxu0 %v1517
    %3521 = vmatprep.subr.bf16.mxu0 %v1526
    %3522 = vmatpush1.bf16.msra.mxu0 %v1525
    %3523 = vmatprep.subr.bf16.mxu0 %v1534
    %3524 = vmatpush1.bf16.msra.mxu0 %v1533
    %3525 = vmatprep.subr.bf16.mxu0 %v1542
    %3526 = vmatpush1.bf16.msra.mxu0 %v1541
    %3527 = vmatprep.subr.bf16.mxu0 %v1550
    %3528 = vmatpush1.bf16.msra.mxu0 %v1549
    %3529 = vmatprep.subr.bf16.mxu0 %v1558
    %3530 = vmatpush1.bf16.msra.mxu0 %v1557
    %3531 = vmatprep.subr.bf16.mxu0 %v1566
    %3532 = vmatpush1.bf16.msra.mxu0 %v1565
    %3533 = vmatprep.subr.bf16.mxu0 %v1574
    %3534 = vmatpush1.bf16.msra.mxu0 %v1573
    %3535 = vmatprep.subr.bf16.mxu0 %v1582
    %3536 = vmatpush1.bf16.msra.mxu0 %v1581
    %3537 = vmatprep.mubr.bf16.mxu0 %v1440
    %3538 = vmatmul.mubr.bf16.gmra.mrb[0].mxu0 %v1439
    %v3539 = vpop.f32.mrb[0].mxu0
    %v3540 = vadd.f32 %v2508, %v3539
    %v3541 = vpop.f32.mrb[0].mxu0
    %v3542 = vadd.f32 %v2512, %v3541
    %v3543 = vpop.f32.mrb[0].mxu0
    %v3544 = vpop.f32.mrb[0].mxu0
    %3545 = vdwg.mxu0
    %3546 = vmatprep.subr.bf16.mxu0 %v1590
    %3547 = vmatpush1.bf16.msra.mxu0 %v1589
    %3548 = vmatprep.subr.bf16.mxu0 %v1598
    %3549 = vmatpush1.bf16.msra.mxu0 %v1597
    %3550 = vmatprep.subr.bf16.mxu0 %v1606
    %3551 = vmatpush1.bf16.msra.mxu0 %v1605
    %3552 = vmatprep.subr.bf16.mxu0 %v1614
    %3553 = vmatpush1.bf16.msra.mxu0 %v1613
    %3554 = vmatprep.subr.bf16.mxu0 %v1622
    %3555 = vmatpush1.bf16.msra.mxu0 %v1621
    %3556 = vmatprep.subr.bf16.mxu0 %v1630
    %3557 = vmatpush1.bf16.msra.mxu0 %v1629
    %3558 = vmatprep.subr.bf16.mxu0 %v1638
    %3559 = vmatpush1.bf16.msra.mxu0 %v1637
    %3560 = vmatprep.subr.bf16.mxu0 %v1646
    %3561 = vmatpush1.bf16.msra.mxu0 %v1645
    %3562 = vmatprep.subr.bf16.mxu0 %v1654
    %3563 = vmatpush1.bf16.msra.mxu0 %v1653
    %3564 = vmatprep.subr.bf16.mxu0 %v1662
    %3565 = vmatpush1.bf16.msra.mxu0 %v1661
    %3566 = vmatprep.subr.bf16.mxu0 %v1670
    %3567 = vmatpush1.bf16.msra.mxu0 %v1669
    %3568 = vmatprep.subr.bf16.mxu0 %v1678
    %3569 = vmatpush1.bf16.msra.mxu0 %v1677
    %3570 = vmatprep.subr.bf16.mxu0 %v1686
    %3571 = vmatpush1.bf16.msra.mxu0 %v1685
    %3572 = vmatprep.subr.bf16.mxu0 %v1694
    %3573 = vmatpush1.bf16.msra.mxu0 %v1693
    %3574 = vmatprep.subr.bf16.mxu0 %v1702
    %3575 = vmatpush1.bf16.msra.mxu0 %v1701
    %3576 = vmatprep.subr.bf16.mxu0 %v1710
    %3577 = vmatpush1.bf16.msra.mxu0 %v1709
    %3578 = vmatprep.mubr.bf16.mxu0 %v1442
    %3579 = vmatmul.mubr.bf16.gmra.mrb[0].mxu0 %v1441
    %v3580 = vpop.f32.mrb[0].mxu0
    %v3581 = vadd.f32 %v3540, %v3580
    %v3582 = vpop.f32.mrb[0].mxu0
    %v3583 = vadd.f32 %v3542, %v3582
    %v3584 = vpop.f32.mrb[0].mxu0
    %v3585 = vpop.f32.mrb[0].mxu0
    %3586 = vdwg.mxu0
    %3587 = vmatprep.subr.bf16.mxu0 %v1718
    %3588 = vmatpush1.bf16.msra.mxu0 %v1717
    %3589 = vmatprep.subr.bf16.mxu0 %v1726
    %3590 = vmatpush1.bf16.msra.mxu0 %v1725
    %3591 = vmatprep.subr.bf16.mxu0 %v1734
    %3592 = vmatpush1.bf16.msra.mxu0 %v1733
    %3593 = vmatprep.subr.bf16.mxu0 %v1742
    %3594 = vmatpush1.bf16.msra.mxu0 %v1741
    %3595 = vmatprep.subr.bf16.mxu0 %v1750
    %3596 = vmatpush1.bf16.msra.mxu0 %v1749
    %3597 = vmatprep.subr.bf16.mxu0 %v1758
    %3598 = vmatpush1.bf16.msra.mxu0 %v1757
    %3599 = vmatprep.subr.bf16.mxu0 %v1766
    %3600 = vmatpush1.bf16.msra.mxu0 %v1765
    %3601 = vmatprep.subr.bf16.mxu0 %v1774
    %3602 = vmatpush1.bf16.msra.mxu0 %v1773
    %3603 = vmatprep.subr.bf16.mxu0 %v1782
    %3604 = vmatpush1.bf16.msra.mxu0 %v1781
    %3605 = vmatprep.subr.bf16.mxu0 %v1790
    %3606 = vmatpush1.bf16.msra.mxu0 %v1789
    %3607 = vmatprep.subr.bf16.mxu0 %v1798
    %3608 = vmatpush1.bf16.msra.mxu0 %v1797
    %3609 = vmatprep.subr.bf16.mxu0 %v1806
    %3610 = vmatpush1.bf16.msra.mxu0 %v1805
    %3611 = vmatprep.subr.bf16.mxu0 %v1814
    %3612 = vmatpush1.bf16.msra.mxu0 %v1813
    %3613 = vmatprep.subr.bf16.mxu0 %v1822
    %3614 = vmatpush1.bf16.msra.mxu0 %v1821
    %3615 = vmatprep.subr.bf16.mxu0 %v1830
    %3616 = vmatpush1.bf16.msra.mxu0 %v1829
    %3617 = vmatprep.subr.bf16.mxu0 %v1838
    %3618 = vmatpush1.bf16.msra.mxu0 %v1837
    %3619 = vmatprep.mubr.bf16.mxu0 %v1444
    %3620 = vmatmul.mubr.bf16.gmra.mrb[0].mxu0 %v1443
    %v3621 = vpop.f32.mrb[0].mxu0
    %v3622 = vadd.f32 %v3581, %v3621
    %v3623 = vpop.f32.mrb[0].mxu0
    %v3624 = vadd.f32 %v3583, %v3623
    %v3625 = vpop.f32.mrb[0].mxu0
    %v3626 = vpop.f32.mrb[0].mxu0
    %3627 = vdwg.mxu0
    %3628 = vmatprep.subr.bf16.mxu0 %v1846
    %3629 = vmatpush1.bf16.msra.mxu0 %v1845
    %3630 = vmatprep.subr.bf16.mxu0 %v1854
    %3631 = vmatpush1.bf16.msra.mxu0 %v1853
    %3632 = vmatprep.subr.bf16.mxu0 %v1862
    %3633 = vmatpush1.bf16.msra.mxu0 %v1861
    %3634 = vmatprep.subr.bf16.mxu0 %v1870
    %3635 = vmatpush1.bf16.msra.mxu0 %v1869
    %3636 = vmatprep.subr.bf16.mxu0 %v1878
    %3637 = vmatpush1.bf16.msra.mxu0 %v1877
    %3638 = vmatprep.subr.bf16.mxu0 %v1886
    %3639 = vmatpush1.bf16.msra.mxu0 %v1885
    %3640 = vmatprep.subr.bf16.mxu0 %v1894
    %3641 = vmatpush1.bf16.msra.mxu0 %v1893
    %3642 = vmatprep.subr.bf16.mxu0 %v1902
    %3643 = vmatpush1.bf16.msra.mxu0 %v1901
    %3644 = vmatprep.subr.bf16.mxu0 %v1910
    %3645 = vmatpush1.bf16.msra.mxu0 %v1909
    %3646 = vmatprep.subr.bf16.mxu0 %v1918
    %3647 = vmatpush1.bf16.msra.mxu0 %v1917
    %3648 = vmatprep.subr.bf16.mxu0 %v1926
    %3649 = vmatpush1.bf16.msra.mxu0 %v1925
    %3650 = vmatprep.subr.bf16.mxu0 %v1934
    %3651 = vmatpush1.bf16.msra.mxu0 %v1933
    %3652 = vmatprep.subr.bf16.mxu0 %v1942
    %3653 = vmatpush1.bf16.msra.mxu0 %v1941
    %3654 = vmatprep.subr.bf16.mxu0 %v1950
    %3655 = vmatpush1.bf16.msra.mxu0 %v1949
    %3656 = vmatprep.subr.bf16.mxu0 %v1958
    %3657 = vmatpush1.bf16.msra.mxu0 %v1957
    %3658 = vmatprep.subr.bf16.mxu0 %v1966
    %3659 = vmatpush1.bf16.msra.mxu0 %v1965
    %3660 = vmatprep.mubr.bf16.mxu0 %v1446
    %3661 = vmatmul.mubr.bf16.gmra.mrb[0].mxu0 %v1445
    %v3662 = vpop.f32.mrb[0].mxu0
    %v3663 = vadd.f32 %v3622, %v3662
    %v3664 = vpop.f32.mrb[0].mxu0
    %v3665 = vadd.f32 %v3624, %v3664
    %v3666 = vpop.f32.mrb[0].mxu0
    %v3667 = vpop.f32.mrb[0].mxu0
    %3668 = vdwg.mxu0
    %3669 = vmatprep.subr.bf16.mxu0 %v1974
    %3670 = vmatpush1.bf16.msra.mxu0 %v1973
    %3671 = vmatprep.subr.bf16.mxu0 %v1982
    %3672 = vmatpush1.bf16.msra.mxu0 %v1981
    %3673 = vmatprep.subr.bf16.mxu0 %v1990
    %3674 = vmatpush1.bf16.msra.mxu0 %v1989
    %3675 = vmatprep.subr.bf16.mxu0 %v1998
    %3676 = vmatpush1.bf16.msra.mxu0 %v1997
    %3677 = vmatprep.subr.bf16.mxu0 %v2006
    %3678 = vmatpush1.bf16.msra.mxu0 %v2005
    %3679 = vmatprep.subr.bf16.mxu0 %v2014
    %3680 = vmatpush1.bf16.msra.mxu0 %v2013
    %3681 = vmatprep.subr.bf16.mxu0 %v2022
    %3682 = vmatpush1.bf16.msra.mxu0 %v2021
    %3683 = vmatprep.subr.bf16.mxu0 %v2030
    %3684 = vmatpush1.bf16.msra.mxu0 %v2029
    %3685 = vmatprep.subr.bf16.mxu0 %v2038
    %3686 = vmatpush1.bf16.msra.mxu0 %v2037
    %3687 = vmatprep.subr.bf16.mxu0 %v2046
    %3688 = vmatpush1.bf16.msra.mxu0 %v2045
    %3689 = vmatprep.subr.bf16.mxu0 %v2054
    %3690 = vmatpush1.bf16.msra.mxu0 %v2053
    %3691 = vmatprep.subr.bf16.mxu0 %v2062
    %3692 = vmatpush1.bf16.msra.mxu0 %v2061
    %3693 = vmatprep.subr.bf16.mxu0 %v2070
    %3694 = vmatpush1.bf16.msra.mxu0 %v2069
    %3695 = vmatprep.subr.bf16.mxu0 %v2078
    %3696 = vmatpush1.bf16.msra.mxu0 %v2077
    %3697 = vmatprep.subr.bf16.mxu0 %v2086
    %3698 = vmatpush1.bf16.msra.mxu0 %v2085
    %3699 = vmatprep.subr.bf16.mxu0 %v2094
    %3700 = vmatpush1.bf16.msra.mxu0 %v2093
    %3701 = vmatprep.mubr.bf16.mxu0 %v1448
    %3702 = vmatmul.mubr.bf16.gmra.mrb[0].mxu0 %v1447
    %v3703 = vpop.f32.mrb[0].mxu0
    %v3704 = vadd.f32 %v3663, %v3703
    %v3705 = vpop.f32.mrb[0].mxu0
    %v3706 = vadd.f32 %v3665, %v3705
    %v3707 = vpop.f32.mrb[0].mxu0
    %v3708 = vpop.f32.mrb[0].mxu0
    %3709 = vdwg.mxu0
    %3710 = vmatprep.subr.bf16.mxu0 %v2102
    %3711 = vmatpush1.bf16.msra.mxu0 %v2101
    %3712 = vmatprep.subr.bf16.mxu0 %v2110
    %3713 = vmatpush1.bf16.msra.mxu0 %v2109
    %3714 = vmatprep.subr.bf16.mxu0 %v2118
    %3715 = vmatpush1.bf16.msra.mxu0 %v2117
    %3716 = vmatprep.subr.bf16.mxu0 %v2126
    %3717 = vmatpush1.bf16.msra.mxu0 %v2125
    %3718 = vmatprep.subr.bf16.mxu0 %v2134
    %3719 = vmatpush1.bf16.msra.mxu0 %v2133
    %3720 = vmatprep.subr.bf16.mxu0 %v2142
    %3721 = vmatpush1.bf16.msra.mxu0 %v2141
    %3722 = vmatprep.subr.bf16.mxu0 %v2150
    %3723 = vmatpush1.bf16.msra.mxu0 %v2149
    %3724 = vmatprep.subr.bf16.mxu0 %v2158
    %3725 = vmatpush1.bf16.msra.mxu0 %v2157
    %3726 = vmatprep.subr.bf16.mxu0 %v2166
    %3727 = vmatpush1.bf16.msra.mxu0 %v2165
    %3728 = vmatprep.subr.bf16.mxu0 %v2174
    %3729 = vmatpush1.bf16.msra.mxu0 %v2173
    %3730 = vmatprep.subr.bf16.mxu0 %v2182
    %3731 = vmatpush1.bf16.msra.mxu0 %v2181
    %3732 = vmatprep.subr.bf16.mxu0 %v2190
    %3733 = vmatpush1.bf16.msra.mxu0 %v2189
    %3734 = vmatprep.subr.bf16.mxu0 %v2198
    %3735 = vmatpush1.bf16.msra.mxu0 %v2197
    %3736 = vmatprep.subr.bf16.mxu0 %v2206
    %3737 = vmatpush1.bf16.msra.mxu0 %v2205
    %3738 = vmatprep.subr.bf16.mxu0 %v2214
    %3739 = vmatpush1.bf16.msra.mxu0 %v2213
    %3740 = vmatprep.subr.bf16.mxu0 %v2222
    %3741 = vmatpush1.bf16.msra.mxu0 %v2221
    %3742 = vmatprep.mubr.bf16.mxu0 %v1450
    %3743 = vmatmul.mubr.bf16.gmra.mrb[0].mxu0 %v1449
    %v3744 = vpop.f32.mrb[0].mxu0
    %v3745 = vadd.f32 %v3704, %v3744
    %v3746 = vpop.f32.mrb[0].mxu0
    %v3747 = vadd.f32 %v3706, %v3746
    %v3748 = vpop.f32.mrb[0].mxu0
    %v3749 = vpop.f32.mrb[0].mxu0
    %3750 = vdwg.mxu0
    %3751 = vmatprep.subr.bf16.mxu0 %v2230
    %3752 = vmatpush1.bf16.msra.mxu0 %v2229
    %3753 = vmatprep.subr.bf16.mxu0 %v2238
    %3754 = vmatpush1.bf16.msra.mxu0 %v2237
    %3755 = vmatprep.subr.bf16.mxu0 %v2246
    %3756 = vmatpush1.bf16.msra.mxu0 %v2245
    %3757 = vmatprep.subr.bf16.mxu0 %v2254
    %3758 = vmatpush1.bf16.msra.mxu0 %v2253
    %3759 = vmatprep.subr.bf16.mxu0 %v2262
    %3760 = vmatpush1.bf16.msra.mxu0 %v2261
    %3761 = vmatprep.subr.bf16.mxu0 %v2270
    %3762 = vmatpush1.bf16.msra.mxu0 %v2269
    %3763 = vmatprep.subr.bf16.mxu0 %v2278
    %3764 = vmatpush1.bf16.msra.mxu0 %v2277
    %3765 = vmatprep.subr.bf16.mxu0 %v2286
    %3766 = vmatpush1.bf16.msra.mxu0 %v2285
    %3767 = vmatprep.subr.bf16.mxu0 %v2294
    %3768 = vmatpush1.bf16.msra.mxu0 %v2293
    %3769 = vmatprep.subr.bf16.mxu0 %v2302
    %3770 = vmatpush1.bf16.msra.mxu0 %v2301
    %3771 = vmatprep.subr.bf16.mxu0 %v2310
    %3772 = vmatpush1.bf16.msra.mxu0 %v2309
    %3773 = vmatprep.subr.bf16.mxu0 %v2318
    %3774 = vmatpush1.bf16.msra.mxu0 %v2317
    %3775 = vmatprep.subr.bf16.mxu0 %v2326
    %3776 = vmatpush1.bf16.msra.mxu0 %v2325
    %3777 = vmatprep.subr.bf16.mxu0 %v2334
    %3778 = vmatpush1.bf16.msra.mxu0 %v2333
    %3779 = vmatprep.subr.bf16.mxu0 %v2342
    %3780 = vmatpush1.bf16.msra.mxu0 %v2341
    %3781 = vmatprep.subr.bf16.mxu0 %v2350
    %3782 = vmatpush1.bf16.msra.mxu0 %v2349
    %3783 = vmatprep.mubr.bf16.mxu0 %v1452
    %3784 = vmatmul.mubr.bf16.gmra.mrb[0].mxu0 %v1451
    %v3785 = vpop.f32.mrb[0].mxu0
    %v3786 = vadd.f32 %v3745, %v3785
    %v3787 = vpop.f32.mrb[0].mxu0
    %v3788 = vadd.f32 %v3747, %v3787
    %v3789 = vpop.f32.mrb[0].mxu0
    %v3790 = vpop.f32.mrb[0].mxu0
    %3791 = vdwg.mxu0
    %3792 = vmatprep.subr.bf16.mxu0 %v2358
    %3793 = vmatpush1.bf16.msra.mxu0 %v2357
    %3794 = vmatprep.subr.bf16.mxu0 %v2366
    %3795 = vmatpush1.bf16.msra.mxu0 %v2365
    %3796 = vmatprep.subr.bf16.mxu0 %v2374
    %3797 = vmatpush1.bf16.msra.mxu0 %v2373
    %3798 = vmatprep.subr.bf16.mxu0 %v2382
    %3799 = vmatpush1.bf16.msra.mxu0 %v2381
    %3800 = vmatprep.subr.bf16.mxu0 %v2390
    %3801 = vmatpush1.bf16.msra.mxu0 %v2389
    %3802 = vmatprep.subr.bf16.mxu0 %v2398
    %3803 = vmatpush1.bf16.msra.mxu0 %v2397
    %3804 = vmatprep.subr.bf16.mxu0 %v2406
    %3805 = vmatpush1.bf16.msra.mxu0 %v2405
    %3806 = vmatprep.subr.bf16.mxu0 %v2414
    %3807 = vmatpush1.bf16.msra.mxu0 %v2413
    %3808 = vmatprep.subr.bf16.mxu0 %v2422
    %3809 = vmatpush1.bf16.msra.mxu0 %v2421
    %3810 = vmatprep.subr.bf16.mxu0 %v2430
    %3811 = vmatpush1.bf16.msra.mxu0 %v2429
    %3812 = vmatprep.subr.bf16.mxu0 %v2438
    %3813 = vmatpush1.bf16.msra.mxu0 %v2437
    %3814 = vmatprep.subr.bf16.mxu0 %v2446
    %3815 = vmatpush1.bf16.msra.mxu0 %v2445
    %3816 = vmatprep.subr.bf16.mxu0 %v2454
    %3817 = vmatpush1.bf16.msra.mxu0 %v2453
    %3818 = vmatprep.subr.bf16.mxu0 %v2462
    %3819 = vmatpush1.bf16.msra.mxu0 %v2461
    %3820 = vmatprep.subr.bf16.mxu0 %v2470
    %3821 = vmatpush1.bf16.msra.mxu0 %v2469
    %3822 = vmatprep.subr.bf16.mxu0 %v2478
    %3823 = vmatpush1.bf16.msra.mxu0 %v2477
    %3824 = vmatprep.mubr.bf16.mxu0 %v1454
    %3825 = vmatmul.mubr.bf16.gmra.mrb[0].mxu0 %v1453
    %v3826 = vpop.f32.mrb[0].mxu0
    %v3827 = vadd.f32 %v3786, %v3826
    %v3828 = vpop.f32.mrb[0].mxu0
    %v3829 = vadd.f32 %v3788, %v3828
    %v3830 = vpop.f32.mrb[0].mxu0
    %v3831 = vpop.f32.mrb[0].mxu0
    %3832 = vdwg.mxu0
    %vm3833 = vcmp.ge.f32.partialorder %v2843, 0.0
    %vm3834 = vcmp.ge.f32.partialorder %v2845, 0.0
    %vm3835 = vcmp.ge.f32.partialorder %v3171, 0.0
    %vm3836 = vcmp.ge.f32.partialorder %v3173, 0.0
    %vm3837 = vcmp.ge.f32.partialorder %v3499, 0.0
    %vm3838 = vcmp.ge.f32.partialorder %v3501, 0.0
    %vm3839 = vcmp.ge.f32.partialorder %v3827, 0.0
    %vm3840 = vcmp.ge.f32.partialorder %v3829, 0.0
    %v3841 = vmul.f32 %v2843, 0.15
    %v3842 = vmul.f32 %v2845, 0.15
    %v3843 = vmul.f32 %v3171, 0.15
    %v3844 = vmul.f32 %v3173, 0.15
    %v3845 = vmul.f32 %v3499, 0.15
    %v3846 = vmul.f32 %v3501, 0.15
    %v3847 = vmul.f32 %v3827, 0.15
    %v3848 = vmul.f32 %v3829, 0.15
    %v3849 = vsel %vm3833, %v2843, %v3841
    %v3850 = vsel %vm3834, %v2845, %v3842
    %v3851 = vsel %vm3835, %v3171, %v3843
    %v3852 = vsel %vm3836, %v3173, %v3844
    %v3853 = vsel %vm3837, %v3499, %v3845
    %v3854 = vsel %vm3838, %v3501, %v3846
    %v3855 = vsel %vm3839, %v3827, %v3847
    %v3856 = vsel %vm3840, %v3829, %v3848
    %3857 = vst [vmem:[#allocation3] sm:$0xff] %v3849
    %3858 = vst [vmem:[#allocation3 + $0x8] sm:$0xff] %v3850
    %3859 = vst [vmem:[#allocation3 + $0x10] sm:$0xff] %v3851
    %3860 = vst [vmem:[#allocation3 + $0x18] sm:$0xff] %v3852
    %3861 = vst [vmem:[#allocation3 + $0x20] sm:$0xff] %v3853
    %3862 = vst [vmem:[#allocation3 + $0x28] sm:$0xff] %v3854
    %3863 = vst [vmem:[#allocation3 + $0x30] sm:$0xff] %v3855
    %3864 = vst [vmem:[#allocation3 + $0x38] sm:$0xff] %v3856
    %s3865 = smul.u32 4, 128
    %s3866 = smul.u32 %s3865, 4
    %s3867 = sshll.u32 %s3866, 4
    %3868 = dma.done %s775, %s3867
    %v3869 = vld [vmem:[#allocation3] sm:$0xff]
    %v3870 = vld [vmem:[#allocation3 + $0x8] sm:$0xff]
    %v3871 = vld [vmem:[#allocation3 + $0x10] sm:$0xff]
    %v3872 = vld [vmem:[#allocation3 + $0x18] sm:$0xff]
    %v3873 = vld [vmem:[#allocation3 + $0x20] sm:$0xff]
    %v3874 = vld [vmem:[#allocation3 + $0x28] sm:$0xff]
    %v3875 = vld [vmem:[#allocation3 + $0x30] sm:$0xff]
    %v3876 = vld [vmem:[#allocation3 + $0x38] sm:$0xff]
    %v3877 = vpack.c.bf16 %v3869, %v3869
    %v3878 = vpack.c.bf16 %v3870, %v3870
    %v3879 = vpack.c.bf16 %v3871, %v3871
    %v3880 = vpack.c.bf16 %v3872, %v3872
    %v3881 = vpack.c.bf16 %v3873, %v3873
    %v3882 = vpack.c.bf16 %v3874, %v3874
    %v3883 = vpack.c.bf16 %v3875, %v3875
    %v3884 = vpack.c.bf16 %v3876, %v3876
    %v3885 = vld [vmem:[#allocation6] sm:$0xff]
    %v3886 = vld [vmem:[#allocation6 + $0x8] sm:$0xff]
    %v3887 = vld [vmem:[#allocation6 + $0x10] sm:$0xff]
    %v3888 = vld [vmem:[#allocation6 + $0x18] sm:$0xff]
    %v3889 = vld [vmem:[#allocation6 + $0x20] sm:$0xff]
    %v3890 = vld [vmem:[#allocation6 + $0x28] sm:$0xff]
    %v3891 = vld [vmem:[#allocation6 + $0x30] sm:$0xff]
    %v3892 = vld [vmem:[#allocation6 + $0x38] sm:$0xff]
    %v3893 = vld [vmem:[#allocation6 + $0x40] sm:$0xff]
    %v3894 = vld [vmem:[#allocation6 + $0x48] sm:$0xff]
    %v3895 = vld [vmem:[#allocation6 + $0x50] sm:$0xff]
    %v3896 = vld [vmem:[#allocation6 + $0x58] sm:$0xff]
    %v3897 = vld [vmem:[#allocation6 + $0x60] sm:$0xff]
    %v3898 = vld [vmem:[#allocation6 + $0x68] sm:$0xff]
    %v3899 = vld [vmem:[#allocation6 + $0x70] sm:$0xff]
    %v3900 = vld [vmem:[#allocation6 + $0x78] sm:$0xff]
    %v3901 = vld [vmem:[#allocation6 + $0x80] sm:$0xff]
    %v3902 = vld [vmem:[#allocation6 + $0x88] sm:$0xff]
    %v3903 = vld [vmem:[#allocation6 + $0x90] sm:$0xff]
    %v3904 = vld [vmem:[#allocation6 + $0x98] sm:$0xff]
    %v3905 = vld [vmem:[#allocation6 + $0xa0] sm:$0xff]
    %v3906 = vld [vmem:[#allocation6 + $0xa8] sm:$0xff]
    %v3907 = vld [vmem:[#allocation6 + $0xb0] sm:$0xff]
    %v3908 = vld [vmem:[#allocation6 + $0xb8] sm:$0xff]
    %v3909 = vld [vmem:[#allocation6 + $0xc0] sm:$0xff]
    %v3910 = vld [vmem:[#allocation6 + $0xc8] sm:$0xff]
    %v3911 = vld [vmem:[#allocation6 + $0xd0] sm:$0xff]
    %v3912 = vld [vmem:[#allocation6 + $0xd8] sm:$0xff]
    %v3913 = vld [vmem:[#allocation6 + $0xe0] sm:$0xff]
    %v3914 = vld [vmem:[#allocation6 + $0xe8] sm:$0xff]
    %v3915 = vld [vmem:[#allocation6 + $0xf0] sm:$0xff]
    %v3916 = vld [vmem:[#allocation6 + $0xf8] sm:$0xff]
    %v3917 = vld [vmem:[#allocation6 + $0x100] sm:$0xff]
    %v3918 = vld [vmem:[#allocation6 + $0x108] sm:$0xff]
    %v3919 = vld [vmem:[#allocation6 + $0x110] sm:$0xff]
    %v3920 = vld [vmem:[#allocation6 + $0x118] sm:$0xff]
    %v3921 = vld [vmem:[#allocation6 + $0x120] sm:$0xff]
    %v3922 = vld [vmem:[#allocation6 + $0x128] sm:$0xff]
    %v3923 = vld [vmem:[#allocation6 + $0x130] sm:$0xff]
    %v3924 = vld [vmem:[#allocation6 + $0x138] sm:$0xff]
    %v3925 = vld [vmem:[#allocation6 + $0x140] sm:$0xff]
    %v3926 = vld [vmem:[#allocation6 + $0x148] sm:$0xff]
    %v3927 = vld [vmem:[#allocation6 + $0x150] sm:$0xff]
    %v3928 = vld [vmem:[#allocation6 + $0x158] sm:$0xff]
    %v3929 = vld [vmem:[#allocation6 + $0x160] sm:$0xff]
    %v3930 = vld [vmem:[#allocation6 + $0x168] sm:$0xff]
    %v3931 = vld [vmem:[#allocation6 + $0x170] sm:$0xff]
    %v3932 = vld [vmem:[#allocation6 + $0x178] sm:$0xff]
    %v3933 = vld [vmem:[#allocation6 + $0x180] sm:$0xff]
    %v3934 = vld [vmem:[#allocation6 + $0x188] sm:$0xff]
    %v3935 = vld [vmem:[#allocation6 + $0x190] sm:$0xff]
    %v3936 = vld [vmem:[#allocation6 + $0x198] sm:$0xff]
    %v3937 = vld [vmem:[#allocation6 + $0x1a0] sm:$0xff]
    %v3938 = vld [vmem:[#allocation6 + $0x1a8] sm:$0xff]
    %v3939 = vld [vmem:[#allocation6 + $0x1b0] sm:$0xff]
    %v3940 = vld [vmem:[#allocation6 + $0x1b8] sm:$0xff]
    %v3941 = vld [vmem:[#allocation6 + $0x1c0] sm:$0xff]
    %v3942 = vld [vmem:[#allocation6 + $0x1c8] sm:$0xff]
    %v3943 = vld [vmem:[#allocation6 + $0x1d0] sm:$0xff]
    %v3944 = vld [vmem:[#allocation6 + $0x1d8] sm:$0xff]
    %v3945 = vld [vmem:[#allocation6 + $0x1e0] sm:$0xff]
    %v3946 = vld [vmem:[#allocation6 + $0x1e8] sm:$0xff]
    %v3947 = vld [vmem:[#allocation6 + $0x1f0] sm:$0xff]
    %v3948 = vld [vmem:[#allocation6 + $0x1f8] sm:$0xff]
    %v3949 = vld [vmem:[#allocation6 + $0x200] sm:$0xff]
    %v3950 = vld [vmem:[#allocation6 + $0x208] sm:$0xff]
    %v3951 = vld [vmem:[#allocation6 + $0x210] sm:$0xff]
    %v3952 = vld [vmem:[#allocation6 + $0x218] sm:$0xff]
    %v3953 = vld [vmem:[#allocation6 + $0x220] sm:$0xff]
    %v3954 = vld [vmem:[#allocation6 + $0x228] sm:$0xff]
    %v3955 = vld [vmem:[#allocation6 + $0x230] sm:$0xff]
    %v3956 = vld [vmem:[#allocation6 + $0x238] sm:$0xff]
    %v3957 = vld [vmem:[#allocation6 + $0x240] sm:$0xff]
    %v3958 = vld [vmem:[#allocation6 + $0x248] sm:$0xff]
    %v3959 = vld [vmem:[#allocation6 + $0x250] sm:$0xff]
    %v3960 = vld [vmem:[#allocation6 + $0x258] sm:$0xff]
    %v3961 = vld [vmem:[#allocation6 + $0x260] sm:$0xff]
    %v3962 = vld [vmem:[#allocation6 + $0x268] sm:$0xff]
    %v3963 = vld [vmem:[#allocation6 + $0x270] sm:$0xff]
    %v3964 = vld [vmem:[#allocation6 + $0x278] sm:$0xff]
    %v3965 = vld [vmem:[#allocation6 + $0x280] sm:$0xff]
    %v3966 = vld [vmem:[#allocation6 + $0x288] sm:$0xff]
    %v3967 = vld [vmem:[#allocation6 + $0x290] sm:$0xff]
    %v3968 = vld [vmem:[#allocation6 + $0x298] sm:$0xff]
    %v3969 = vld [vmem:[#allocation6 + $0x2a0] sm:$0xff]
    %v3970 = vld [vmem:[#allocation6 + $0x2a8] sm:$0xff]
    %v3971 = vld [vmem:[#allocation6 + $0x2b0] sm:$0xff]
    %v3972 = vld [vmem:[#allocation6 + $0x2b8] sm:$0xff]
    %v3973 = vld [vmem:[#allocation6 + $0x2c0] sm:$0xff]
    %v3974 = vld [vmem:[#allocation6 + $0x2c8] sm:$0xff]
    %v3975 = vld [vmem:[#allocation6 + $0x2d0] sm:$0xff]
    %v3976 = vld [vmem:[#allocation6 + $0x2d8] sm:$0xff]
    %v3977 = vld [vmem:[#allocation6 + $0x2e0] sm:$0xff]
    %v3978 = vld [vmem:[#allocation6 + $0x2e8] sm:$0xff]
    %v3979 = vld [vmem:[#allocation6 + $0x2f0] sm:$0xff]
    %v3980 = vld [vmem:[#allocation6 + $0x2f8] sm:$0xff]
    %v3981 = vld [vmem:[#allocation6 + $0x300] sm:$0xff]
    %v3982 = vld [vmem:[#allocation6 + $0x308] sm:$0xff]
    %v3983 = vld [vmem:[#allocation6 + $0x310] sm:$0xff]
    %v3984 = vld [vmem:[#allocation6 + $0x318] sm:$0xff]
    %v3985 = vld [vmem:[#allocation6 + $0x320] sm:$0xff]
    %v3986 = vld [vmem:[#allocation6 + $0x328] sm:$0xff]
    %v3987 = vld [vmem:[#allocation6 + $0x330] sm:$0xff]
    %v3988 = vld [vmem:[#allocation6 + $0x338] sm:$0xff]
    %v3989 = vld [vmem:[#allocation6 + $0x340] sm:$0xff]
    %v3990 = vld [vmem:[#allocation6 + $0x348] sm:$0xff]
    %v3991 = vld [vmem:[#allocation6 + $0x350] sm:$0xff]
    %v3992 = vld [vmem:[#allocation6 + $0x358] sm:$0xff]
    %v3993 = vld [vmem:[#allocation6 + $0x360] sm:$0xff]
    %v3994 = vld [vmem:[#allocation6 + $0x368] sm:$0xff]
    %v3995 = vld [vmem:[#allocation6 + $0x370] sm:$0xff]
    %v3996 = vld [vmem:[#allocation6 + $0x378] sm:$0xff]
    %v3997 = vld [vmem:[#allocation6 + $0x380] sm:$0xff]
    %v3998 = vld [vmem:[#allocation6 + $0x388] sm:$0xff]
    %v3999 = vld [vmem:[#allocation6 + $0x390] sm:$0xff]
    %v4000 = vld [vmem:[#allocation6 + $0x398] sm:$0xff]
    %v4001 = vld [vmem:[#allocation6 + $0x3a0] sm:$0xff]
    %v4002 = vld [vmem:[#allocation6 + $0x3a8] sm:$0xff]
    %v4003 = vld [vmem:[#allocation6 + $0x3b0] sm:$0xff]
    %v4004 = vld [vmem:[#allocation6 + $0x3b8] sm:$0xff]
    %v4005 = vld [vmem:[#allocation6 + $0x3c0] sm:$0xff]
    %v4006 = vld [vmem:[#allocation6 + $0x3c8] sm:$0xff]
    %v4007 = vld [vmem:[#allocation6 + $0x3d0] sm:$0xff]
    %v4008 = vld [vmem:[#allocation6 + $0x3d8] sm:$0xff]
    %v4009 = vld [vmem:[#allocation6 + $0x3e0] sm:$0xff]
    %v4010 = vld [vmem:[#allocation6 + $0x3e8] sm:$0xff]
    %v4011 = vld [vmem:[#allocation6 + $0x3f0] sm:$0xff]
    %v4012 = vld [vmem:[#allocation6 + $0x3f8] sm:$0xff]
    %v4013 = vld [vmem:[#allocation6 + $0x400] sm:$0xff]
    %v4014 = vld [vmem:[#allocation6 + $0x408] sm:$0xff]
    %v4015 = vld [vmem:[#allocation6 + $0x410] sm:$0xff]
    %v4016 = vld [vmem:[#allocation6 + $0x418] sm:$0xff]
    %v4017 = vld [vmem:[#allocation6 + $0x420] sm:$0xff]
    %v4018 = vld [vmem:[#allocation6 + $0x428] sm:$0xff]
    %v4019 = vld [vmem:[#allocation6 + $0x430] sm:$0xff]
    %v4020 = vld [vmem:[#allocation6 + $0x438] sm:$0xff]
    %v4021 = vld [vmem:[#allocation6 + $0x440] sm:$0xff]
    %v4022 = vld [vmem:[#allocation6 + $0x448] sm:$0xff]
    %v4023 = vld [vmem:[#allocation6 + $0x450] sm:$0xff]
    %v4024 = vld [vmem:[#allocation6 + $0x458] sm:$0xff]
    %v4025 = vld [vmem:[#allocation6 + $0x460] sm:$0xff]
    %v4026 = vld [vmem:[#allocation6 + $0x468] sm:$0xff]
    %v4027 = vld [vmem:[#allocation6 + $0x470] sm:$0xff]
    %v4028 = vld [vmem:[#allocation6 + $0x478] sm:$0xff]
    %v4029 = vld [vmem:[#allocation6 + $0x480] sm:$0xff]
    %v4030 = vld [vmem:[#allocation6 + $0x488] sm:$0xff]
    %v4031 = vld [vmem:[#allocation6 + $0x490] sm:$0xff]
    %v4032 = vld [vmem:[#allocation6 + $0x498] sm:$0xff]
    %v4033 = vld [vmem:[#allocation6 + $0x4a0] sm:$0xff]
    %v4034 = vld [vmem:[#allocation6 + $0x4a8] sm:$0xff]
    %v4035 = vld [vmem:[#allocation6 + $0x4b0] sm:$0xff]
    %v4036 = vld [vmem:[#allocation6 + $0x4b8] sm:$0xff]
    %v4037 = vld [vmem:[#allocation6 + $0x4c0] sm:$0xff]
    %v4038 = vld [vmem:[#allocation6 + $0x4c8] sm:$0xff]
    %v4039 = vld [vmem:[#allocation6 + $0x4d0] sm:$0xff]
    %v4040 = vld [vmem:[#allocation6 + $0x4d8] sm:$0xff]
    %v4041 = vld [vmem:[#allocation6 + $0x4e0] sm:$0xff]
    %v4042 = vld [vmem:[#allocation6 + $0x4e8] sm:$0xff]
    %v4043 = vld [vmem:[#allocation6 + $0x4f0] sm:$0xff]
    %v4044 = vld [vmem:[#allocation6 + $0x4f8] sm:$0xff]
    %v4045 = vld [vmem:[#allocation6 + $0x500] sm:$0xff]
    %v4046 = vld [vmem:[#allocation6 + $0x508] sm:$0xff]
    %v4047 = vld [vmem:[#allocation6 + $0x510] sm:$0xff]
    %v4048 = vld [vmem:[#allocation6 + $0x518] sm:$0xff]
    %v4049 = vld [vmem:[#allocation6 + $0x520] sm:$0xff]
    %v4050 = vld [vmem:[#allocation6 + $0x528] sm:$0xff]
    %v4051 = vld [vmem:[#allocation6 + $0x530] sm:$0xff]
    %v4052 = vld [vmem:[#allocation6 + $0x538] sm:$0xff]
    %v4053 = vld [vmem:[#allocation6 + $0x540] sm:$0xff]
    %v4054 = vld [vmem:[#allocation6 + $0x548] sm:$0xff]
    %v4055 = vld [vmem:[#allocation6 + $0x550] sm:$0xff]
    %v4056 = vld [vmem:[#allocation6 + $0x558] sm:$0xff]
    %v4057 = vld [vmem:[#allocation6 + $0x560] sm:$0xff]
    %v4058 = vld [vmem:[#allocation6 + $0x568] sm:$0xff]
    %v4059 = vld [vmem:[#allocation6 + $0x570] sm:$0xff]
    %v4060 = vld [vmem:[#allocation6 + $0x578] sm:$0xff]
    %v4061 = vld [vmem:[#allocation6 + $0x580] sm:$0xff]
    %v4062 = vld [vmem:[#allocation6 + $0x588] sm:$0xff]
    %v4063 = vld [vmem:[#allocation6 + $0x590] sm:$0xff]
    %v4064 = vld [vmem:[#allocation6 + $0x598] sm:$0xff]
    %v4065 = vld [vmem:[#allocation6 + $0x5a0] sm:$0xff]
    %v4066 = vld [vmem:[#allocation6 + $0x5a8] sm:$0xff]
    %v4067 = vld [vmem:[#allocation6 + $0x5b0] sm:$0xff]
    %v4068 = vld [vmem:[#allocation6 + $0x5b8] sm:$0xff]
    %v4069 = vld [vmem:[#allocation6 + $0x5c0] sm:$0xff]
    %v4070 = vld [vmem:[#allocation6 + $0x5c8] sm:$0xff]
    %v4071 = vld [vmem:[#allocation6 + $0x5d0] sm:$0xff]
    %v4072 = vld [vmem:[#allocation6 + $0x5d8] sm:$0xff]
    %v4073 = vld [vmem:[#allocation6 + $0x5e0] sm:$0xff]
    %v4074 = vld [vmem:[#allocation6 + $0x5e8] sm:$0xff]
    %v4075 = vld [vmem:[#allocation6 + $0x5f0] sm:$0xff]
    %v4076 = vld [vmem:[#allocation6 + $0x5f8] sm:$0xff]
    %v4077 = vld [vmem:[#allocation6 + $0x600] sm:$0xff]
    %v4078 = vld [vmem:[#allocation6 + $0x608] sm:$0xff]
    %v4079 = vld [vmem:[#allocation6 + $0x610] sm:$0xff]
    %v4080 = vld [vmem:[#allocation6 + $0x618] sm:$0xff]
    %v4081 = vld [vmem:[#allocation6 + $0x620] sm:$0xff]
    %v4082 = vld [vmem:[#allocation6 + $0x628] sm:$0xff]
    %v4083 = vld [vmem:[#allocation6 + $0x630] sm:$0xff]
    %v4084 = vld [vmem:[#allocation6 + $0x638] sm:$0xff]
    %v4085 = vld [vmem:[#allocation6 + $0x640] sm:$0xff]
    %v4086 = vld [vmem:[#allocation6 + $0x648] sm:$0xff]
    %v4087 = vld [vmem:[#allocation6 + $0x650] sm:$0xff]
    %v4088 = vld [vmem:[#allocation6 + $0x658] sm:$0xff]
    %v4089 = vld [vmem:[#allocation6 + $0x660] sm:$0xff]
    %v4090 = vld [vmem:[#allocation6 + $0x668] sm:$0xff]
    %v4091 = vld [vmem:[#allocation6 + $0x670] sm:$0xff]
    %v4092 = vld [vmem:[#allocation6 + $0x678] sm:$0xff]
    %v4093 = vld [vmem:[#allocation6 + $0x680] sm:$0xff]
    %v4094 = vld [vmem:[#allocation6 + $0x688] sm:$0xff]
    %v4095 = vld [vmem:[#allocation6 + $0x690] sm:$0xff]
    %v4096 = vld [vmem:[#allocation6 + $0x698] sm:$0xff]
    %v4097 = vld [vmem:[#allocation6 + $0x6a0] sm:$0xff]
    %v4098 = vld [vmem:[#allocation6 + $0x6a8] sm:$0xff]
    %v4099 = vld [vmem:[#allocation6 + $0x6b0] sm:$0xff]
    %v4100 = vld [vmem:[#allocation6 + $0x6b8] sm:$0xff]
    %v4101 = vld [vmem:[#allocation6 + $0x6c0] sm:$0xff]
    %v4102 = vld [vmem:[#allocation6 + $0x6c8] sm:$0xff]
    %v4103 = vld [vmem:[#allocation6 + $0x6d0] sm:$0xff]
    %v4104 = vld [vmem:[#allocation6 + $0x6d8] sm:$0xff]
    %v4105 = vld [vmem:[#allocation6 + $0x6e0] sm:$0xff]
    %v4106 = vld [vmem:[#allocation6 + $0x6e8] sm:$0xff]
    %v4107 = vld [vmem:[#allocation6 + $0x6f0] sm:$0xff]
    %v4108 = vld [vmem:[#allocation6 + $0x6f8] sm:$0xff]
    %v4109 = vld [vmem:[#allocation6 + $0x700] sm:$0xff]
    %v4110 = vld [vmem:[#allocation6 + $0x708] sm:$0xff]
    %v4111 = vld [vmem:[#allocation6 + $0x710] sm:$0xff]
    %v4112 = vld [vmem:[#allocation6 + $0x718] sm:$0xff]
    %v4113 = vld [vmem:[#allocation6 + $0x720] sm:$0xff]
    %v4114 = vld [vmem:[#allocation6 + $0x728] sm:$0xff]
    %v4115 = vld [vmem:[#allocation6 + $0x730] sm:$0xff]
    %v4116 = vld [vmem:[#allocation6 + $0x738] sm:$0xff]
    %v4117 = vld [vmem:[#allocation6 + $0x740] sm:$0xff]
    %v4118 = vld [vmem:[#allocation6 + $0x748] sm:$0xff]
    %v4119 = vld [vmem:[#allocation6 + $0x750] sm:$0xff]
    %v4120 = vld [vmem:[#allocation6 + $0x758] sm:$0xff]
    %v4121 = vld [vmem:[#allocation6 + $0x760] sm:$0xff]
    %v4122 = vld [vmem:[#allocation6 + $0x768] sm:$0xff]
    %v4123 = vld [vmem:[#allocation6 + $0x770] sm:$0xff]
    %v4124 = vld [vmem:[#allocation6 + $0x778] sm:$0xff]
    %v4125 = vld [vmem:[#allocation6 + $0x780] sm:$0xff]
    %v4126 = vld [vmem:[#allocation6 + $0x788] sm:$0xff]
    %v4127 = vld [vmem:[#allocation6 + $0x790] sm:$0xff]
    %v4128 = vld [vmem:[#allocation6 + $0x798] sm:$0xff]
    %v4129 = vld [vmem:[#allocation6 + $0x7a0] sm:$0xff]
    %v4130 = vld [vmem:[#allocation6 + $0x7a8] sm:$0xff]
    %v4131 = vld [vmem:[#allocation6 + $0x7b0] sm:$0xff]
    %v4132 = vld [vmem:[#allocation6 + $0x7b8] sm:$0xff]
    %v4133 = vld [vmem:[#allocation6 + $0x7c0] sm:$0xff]
    %v4134 = vld [vmem:[#allocation6 + $0x7c8] sm:$0xff]
    %v4135 = vld [vmem:[#allocation6 + $0x7d0] sm:$0xff]
    %v4136 = vld [vmem:[#allocation6 + $0x7d8] sm:$0xff]
    %v4137 = vld [vmem:[#allocation6 + $0x7e0] sm:$0xff]
    %v4138 = vld [vmem:[#allocation6 + $0x7e8] sm:$0xff]
    %v4139 = vld [vmem:[#allocation6 + $0x7f0] sm:$0xff]
    %v4140 = vld [vmem:[#allocation6 + $0x7f8] sm:$0xff]
    %v4141 = vld [vmem:[#allocation13] sm:$0xf]
    %v4143 = vlaneseq
    %v4144 = vshrl.u32 %v4143, 7
    %v4145 = vsub.s32 0, %v4144
    %v4146 = vrot.slane %v4141, %v4145
    %v4147 = vlaneseq
    %v4148 = vshrl.u32 %v4147, 7
    %v4149 = vsub.s32 1, %v4148
    %v4150 = vrot.slane %v4141, %v4149
    %v4151 = vlaneseq
    %v4152 = vshrl.u32 %v4151, 7
    %v4153 = vsub.s32 2, %v4152
    %v4154 = vrot.slane %v4141, %v4153
    %v4155 = vlaneseq
    %v4156 = vshrl.u32 %v4155, 7
    %v4157 = vsub.s32 3, %v4156
    %v4158 = vrot.slane %v4141, %v4157
    %4163 = vmatprep.subr.bf16.mxu0 %v3886
    %4164 = vmatpush1.bf16.msra.mxu0 %v3885
    %4165 = vmatprep.subr.bf16.mxu0 %v3890
    %4166 = vmatpush1.bf16.msra.mxu0 %v3889
    %4167 = vmatprep.subr.bf16.mxu0 %v3894
    %4168 = vmatpush1.bf16.msra.mxu0 %v3893
    %4169 = vmatprep.subr.bf16.mxu0 %v3898
    %4170 = vmatpush1.bf16.msra.mxu0 %v3897
    %4171 = vmatprep.subr.bf16.mxu0 %v3902
    %4172 = vmatpush1.bf16.msra.mxu0 %v3901
    %4173 = vmatprep.subr.bf16.mxu0 %v3906
    %4174 = vmatpush1.bf16.msra.mxu0 %v3905
    %4175 = vmatprep.subr.bf16.mxu0 %v3910
    %4176 = vmatpush1.bf16.msra.mxu0 %v3909
    %4177 = vmatprep.subr.bf16.mxu0 %v3914
    %4178 = vmatpush1.bf16.msra.mxu0 %v3913
    %4179 = vmatprep.subr.bf16.mxu0 %v3918
    %4180 = vmatpush1.bf16.msra.mxu0 %v3917
    %4181 = vmatprep.subr.bf16.mxu0 %v3922
    %4182 = vmatpush1.bf16.msra.mxu0 %v3921
    %4183 = vmatprep.subr.bf16.mxu0 %v3926
    %4184 = vmatpush1.bf16.msra.mxu0 %v3925
    %4185 = vmatprep.subr.bf16.mxu0 %v3930
    %4186 = vmatpush1.bf16.msra.mxu0 %v3929
    %4187 = vmatprep.subr.bf16.mxu0 %v3934
    %4188 = vmatpush1.bf16.msra.mxu0 %v3933
    %4189 = vmatprep.subr.bf16.mxu0 %v3938
    %4190 = vmatpush1.bf16.msra.mxu0 %v3937
    %4191 = vmatprep.subr.bf16.mxu0 %v3942
    %4192 = vmatpush1.bf16.msra.mxu0 %v3941
    %4193 = vmatprep.subr.bf16.mxu0 %v3946
    %4194 = vmatpush1.bf16.msra.mxu0 %v3945
    %4195 = vmatprep.mubr.bf16.mxu0 %v3878
    %4196 = vmatmul.mubr.bf16.gmra.mrb[0].mxu0 %v3877
    %v4197 = vpop.f32.mrb[0].mxu0
    %v4198 = vadd.f32 %v4146, %v4197
    %v4199 = vpop.f32.mrb[0].mxu0
    %v4200 = vadd.f32 %v4150, %v4199
    %v4201 = vpop.f32.mrb[0].mxu0
    %v4202 = vpop.f32.mrb[0].mxu0
    %4203 = vdwg.mxu0
    %4204 = vmatprep.subr.bf16.mxu0 %v3950
    %4205 = vmatpush1.bf16.msra.mxu0 %v3949
    %4206 = vmatprep.subr.bf16.mxu0 %v3954
    %4207 = vmatpush1.bf16.msra.mxu0 %v3953
    %4208 = vmatprep.subr.bf16.mxu0 %v3958
    %4209 = vmatpush1.bf16.msra.mxu0 %v3957
    %4210 = vmatprep.subr.bf16.mxu0 %v3962
    %4211 = vmatpush1.bf16.msra.mxu0 %v3961
    %4212 = vmatprep.subr.bf16.mxu0 %v3966
    %4213 = vmatpush1.bf16.msra.mxu0 %v3965
    %4214 = vmatprep.subr.bf16.mxu0 %v3970
    %4215 = vmatpush1.bf16.msra.mxu0 %v3969
    %4216 = vmatprep.subr.bf16.mxu0 %v3974
    %4217 = vmatpush1.bf16.msra.mxu0 %v3973
    %4218 = vmatprep.subr.bf16.mxu0 %v3978
    %4219 = vmatpush1.bf16.msra.mxu0 %v3977
    %4220 = vmatprep.subr.bf16.mxu0 %v3982
    %4221 = vmatpush1.bf16.msra.mxu0 %v3981
    %4222 = vmatprep.subr.bf16.mxu0 %v3986
    %4223 = vmatpush1.bf16.msra.mxu0 %v3985
    %4224 = vmatprep.subr.bf16.mxu0 %v3990
    %4225 = vmatpush1.bf16.msra.mxu0 %v3989
    %4226 = vmatprep.subr.bf16.mxu0 %v3994
    %4227 = vmatpush1.bf16.msra.mxu0 %v3993
    %4228 = vmatprep.subr.bf16.mxu0 %v3998
    %4229 = vmatpush1.bf16.msra.mxu0 %v3997
    %4230 = vmatprep.subr.bf16.mxu0 %v4002
    %4231 = vmatpush1.bf16.msra.mxu0 %v4001
    %4232 = vmatprep.subr.bf16.mxu0 %v4006
    %4233 = vmatpush1.bf16.msra.mxu0 %v4005
    %4234 = vmatprep.subr.bf16.mxu0 %v4010
    %4235 = vmatpush1.bf16.msra.mxu0 %v4009
    %4236 = vmatprep.mubr.bf16.mxu0 %v3880
    %4237 = vmatmul.mubr.bf16.gmra.mrb[0].mxu0 %v3879
    %v4238 = vpop.f32.mrb[0].mxu0
    %v4239 = vadd.f32 %v4198, %v4238
    %v4240 = vpop.f32.mrb[0].mxu0
    %v4241 = vadd.f32 %v4200, %v4240
    %v4242 = vpop.f32.mrb[0].mxu0
    %v4243 = vpop.f32.mrb[0].mxu0
    %4244 = vdwg.mxu0
    %4245 = vmatprep.subr.bf16.mxu0 %v4014
    %4246 = vmatpush1.bf16.msra.mxu0 %v4013
    %4247 = vmatprep.subr.bf16.mxu0 %v4018
    %4248 = vmatpush1.bf16.msra.mxu0 %v4017
    %4249 = vmatprep.subr.bf16.mxu0 %v4022
    %4250 = vmatpush1.bf16.msra.mxu0 %v4021
    %4251 = vmatprep.subr.bf16.mxu0 %v4026
    %4252 = vmatpush1.bf16.msra.mxu0 %v4025
    %4253 = vmatprep.subr.bf16.mxu0 %v4030
    %4254 = vmatpush1.bf16.msra.mxu0 %v4029
    %4255 = vmatprep.subr.bf16.mxu0 %v4034
    %4256 = vmatpush1.bf16.msra.mxu0 %v4033
    %4257 = vmatprep.subr.bf16.mxu0 %v4038
    %4258 = vmatpush1.bf16.msra.mxu0 %v4037
    %4259 = vmatprep.subr.bf16.mxu0 %v4042
    %4260 = vmatpush1.bf16.msra.mxu0 %v4041
    %4261 = vmatprep.subr.bf16.mxu0 %v4046
    %4262 = vmatpush1.bf16.msra.mxu0 %v4045
    %4263 = vmatprep.subr.bf16.mxu0 %v4050
    %4264 = vmatpush1.bf16.msra.mxu0 %v4049
    %4265 = vmatprep.subr.bf16.mxu0 %v4054
    %4266 = vmatpush1.bf16.msra.mxu0 %v4053
    %4267 = vmatprep.subr.bf16.mxu0 %v4058
    %4268 = vmatpush1.bf16.msra.mxu0 %v4057
    %4269 = vmatprep.subr.bf16.mxu0 %v4062
    %4270 = vmatpush1.bf16.msra.mxu0 %v4061
    %4271 = vmatprep.subr.bf16.mxu0 %v4066
    %4272 = vmatpush1.bf16.msra.mxu0 %v4065
    %4273 = vmatprep.subr.bf16.mxu0 %v4070
    %4274 = vmatpush1.bf16.msra.mxu0 %v4069
    %4275 = vmatprep.subr.bf16.mxu0 %v4074
    %4276 = vmatpush1.bf16.msra.mxu0 %v4073
    %4277 = vmatprep.mubr.bf16.mxu0 %v3882
    %4278 = vmatmul.mubr.bf16.gmra.mrb[0].mxu0 %v3881
    %v4279 = vpop.f32.mrb[0].mxu0
    %v4280 = vadd.f32 %v4239, %v4279
    %v4281 = vpop.f32.mrb[0].mxu0
    %v4282 = vadd.f32 %v4241, %v4281
    %v4283 = vpop.f32.mrb[0].mxu0
    %v4284 = vpop.f32.mrb[0].mxu0
    %4285 = vdwg.mxu0
    %4286 = vmatprep.subr.bf16.mxu0 %v4078
    %4287 = vmatpush1.bf16.msra.mxu0 %v4077
    %4288 = vmatprep.subr.bf16.mxu0 %v4082
    %4289 = vmatpush1.bf16.msra.mxu0 %v4081
    %4290 = vmatprep.subr.bf16.mxu0 %v4086
    %4291 = vmatpush1.bf16.msra.mxu0 %v4085
    %4292 = vmatprep.subr.bf16.mxu0 %v4090
    %4293 = vmatpush1.bf16.msra.mxu0 %v4089
    %4294 = vmatprep.subr.bf16.mxu0 %v4094
    %4295 = vmatpush1.bf16.msra.mxu0 %v4093
    %4296 = vmatprep.subr.bf16.mxu0 %v4098
    %4297 = vmatpush1.bf16.msra.mxu0 %v4097
    %4298 = vmatprep.subr.bf16.mxu0 %v4102
    %4299 = vmatpush1.bf16.msra.mxu0 %v4101
    %4300 = vmatprep.subr.bf16.mxu0 %v4106
    %4301 = vmatpush1.bf16.msra.mxu0 %v4105
    %4302 = vmatprep.subr.bf16.mxu0 %v4110
    %4303 = vmatpush1.bf16.msra.mxu0 %v4109
    %4304 = vmatprep.subr.bf16.mxu0 %v4114
    %4305 = vmatpush1.bf16.msra.mxu0 %v4113
    %4306 = vmatprep.subr.bf16.mxu0 %v4118
    %4307 = vmatpush1.bf16.msra.mxu0 %v4117
    %4308 = vmatprep.subr.bf16.mxu0 %v4122
    %4309 = vmatpush1.bf16.msra.mxu0 %v4121
    %4310 = vmatprep.subr.bf16.mxu0 %v4126
    %4311 = vmatpush1.bf16.msra.mxu0 %v4125
    %4312 = vmatprep.subr.bf16.mxu0 %v4130
    %4313 = vmatpush1.bf16.msra.mxu0 %v4129
    %4314 = vmatprep.subr.bf16.mxu0 %v4134
    %4315 = vmatpush1.bf16.msra.mxu0 %v4133
    %4316 = vmatprep.subr.bf16.mxu0 %v4138
    %4317 = vmatpush1.bf16.msra.mxu0 %v4137
    %4318 = vmatprep.mubr.bf16.mxu0 %v3884
    %4319 = vmatmul.mubr.bf16.gmra.mrb[0].mxu0 %v3883
    %v4320 = vpop.f32.mrb[0].mxu0
    %v4321 = vadd.f32 %v4280, %v4320
    %v4322 = vpop.f32.mrb[0].mxu0
    %v4323 = vadd.f32 %v4282, %v4322
    %v4324 = vpop.f32.mrb[0].mxu0
    %v4325 = vpop.f32.mrb[0].mxu0
    %4326 = vdwg.mxu0
    %4327 = vmatprep.subr.bf16.mxu0 %v3888
    %4328 = vmatpush1.bf16.msra.mxu0 %v3887
    %4329 = vmatprep.subr.bf16.mxu0 %v3892
    %4330 = vmatpush1.bf16.msra.mxu0 %v3891
    %4331 = vmatprep.subr.bf16.mxu0 %v3896
    %4332 = vmatpush1.bf16.msra.mxu0 %v3895
    %4333 = vmatprep.subr.bf16.mxu0 %v3900
    %4334 = vmatpush1.bf16.msra.mxu0 %v3899
    %4335 = vmatprep.subr.bf16.mxu0 %v3904
    %4336 = vmatpush1.bf16.msra.mxu0 %v3903
    %4337 = vmatprep.subr.bf16.mxu0 %v3908
    %4338 = vmatpush1.bf16.msra.mxu0 %v3907
    %4339 = vmatprep.subr.bf16.mxu0 %v3912
    %4340 = vmatpush1.bf16.msra.mxu0 %v3911
    %4341 = vmatprep.subr.bf16.mxu0 %v3916
    %4342 = vmatpush1.bf16.msra.mxu0 %v3915
    %4343 = vmatprep.subr.bf16.mxu0 %v3920
    %4344 = vmatpush1.bf16.msra.mxu0 %v3919
    %4345 = vmatprep.subr.bf16.mxu0 %v3924
    %4346 = vmatpush1.bf16.msra.mxu0 %v3923
    %4347 = vmatprep.subr.bf16.mxu0 %v3928
    %4348 = vmatpush1.bf16.msra.mxu0 %v3927
    %4349 = vmatprep.subr.bf16.mxu0 %v3932
    %4350 = vmatpush1.bf16.msra.mxu0 %v3931
    %4351 = vmatprep.subr.bf16.mxu0 %v3936
    %4352 = vmatpush1.bf16.msra.mxu0 %v3935
    %4353 = vmatprep.subr.bf16.mxu0 %v3940
    %4354 = vmatpush1.bf16.msra.mxu0 %v3939
    %4355 = vmatprep.subr.bf16.mxu0 %v3944
    %4356 = vmatpush1.bf16.msra.mxu0 %v3943
    %4357 = vmatprep.subr.bf16.mxu0 %v3948
    %4358 = vmatpush1.bf16.msra.mxu0 %v3947
    %4359 = vmatprep.mubr.bf16.mxu0 %v3878
    %4360 = vmatmul.mubr.bf16.gmra.mrb[0].mxu0 %v3877
    %v4361 = vpop.f32.mrb[0].mxu0
    %v4362 = vadd.f32 %v4154, %v4361
    %v4363 = vpop.f32.mrb[0].mxu0
    %v4364 = vadd.f32 %v4158, %v4363
    %v4365 = vpop.f32.mrb[0].mxu0
    %v4366 = vpop.f32.mrb[0].mxu0
    %4367 = vdwg.mxu0
    %4368 = vmatprep.subr.bf16.mxu0 %v3952
    %4369 = vmatpush1.bf16.msra.mxu0 %v3951
    %4370 = vmatprep.subr.bf16.mxu0 %v3956
    %4371 = vmatpush1.bf16.msra.mxu0 %v3955
    %4372 = vmatprep.subr.bf16.mxu0 %v3960
    %4373 = vmatpush1.bf16.msra.mxu0 %v3959
    %4374 = vmatprep.subr.bf16.mxu0 %v3964
    %4375 = vmatpush1.bf16.msra.mxu0 %v3963
    %4376 = vmatprep.subr.bf16.mxu0 %v3968
    %4377 = vmatpush1.bf16.msra.mxu0 %v3967
    %4378 = vmatprep.subr.bf16.mxu0 %v3972
    %4379 = vmatpush1.bf16.msra.mxu0 %v3971
    %4380 = vmatprep.subr.bf16.mxu0 %v3976
    %4381 = vmatpush1.bf16.msra.mxu0 %v3975
    %4382 = vmatprep.subr.bf16.mxu0 %v3980
    %4383 = vmatpush1.bf16.msra.mxu0 %v3979
    %4384 = vmatprep.subr.bf16.mxu0 %v3984
    %4385 = vmatpush1.bf16.msra.mxu0 %v3983
    %4386 = vmatprep.subr.bf16.mxu0 %v3988
    %4387 = vmatpush1.bf16.msra.mxu0 %v3987
    %4388 = vmatprep.subr.bf16.mxu0 %v3992
    %4389 = vmatpush1.bf16.msra.mxu0 %v3991
    %4390 = vmatprep.subr.bf16.mxu0 %v3996
    %4391 = vmatpush1.bf16.msra.mxu0 %v3995
    %4392 = vmatprep.subr.bf16.mxu0 %v4000
    %4393 = vmatpush1.bf16.msra.mxu0 %v3999
    %4394 = vmatprep.subr.bf16.mxu0 %v4004
    %4395 = vmatpush1.bf16.msra.mxu0 %v4003
    %4396 = vmatprep.subr.bf16.mxu0 %v4008
    %4397 = vmatpush1.bf16.msra.mxu0 %v4007
    %4398 = vmatprep.subr.bf16.mxu0 %v4012
    %4399 = vmatpush1.bf16.msra.mxu0 %v4011
    %4400 = vmatprep.mubr.bf16.mxu0 %v3880
    %4401 = vmatmul.mubr.bf16.gmra.mrb[0].mxu0 %v3879
    %v4402 = vpop.f32.mrb[0].mxu0
    %v4403 = vadd.f32 %v4362, %v4402
    %v4404 = vpop.f32.mrb[0].mxu0
    %v4405 = vadd.f32 %v4364, %v4404
    %v4406 = vpop.f32.mrb[0].mxu0
    %v4407 = vpop.f32.mrb[0].mxu0
    %4408 = vdwg.mxu0
    %4409 = vmatprep.subr.bf16.mxu0 %v4016
    %4410 = vmatpush1.bf16.msra.mxu0 %v4015
    %4411 = vmatprep.subr.bf16.mxu0 %v4020
    %4412 = vmatpush1.bf16.msra.mxu0 %v4019
    %4413 = vmatprep.subr.bf16.mxu0 %v4024
    %4414 = vmatpush1.bf16.msra.mxu0 %v4023
    %4415 = vmatprep.subr.bf16.mxu0 %v4028
    %4416 = vmatpush1.bf16.msra.mxu0 %v4027
    %4417 = vmatprep.subr.bf16.mxu0 %v4032
    %4418 = vmatpush1.bf16.msra.mxu0 %v4031
    %4419 = vmatprep.subr.bf16.mxu0 %v4036
    %4420 = vmatpush1.bf16.msra.mxu0 %v4035
    %4421 = vmatprep.subr.bf16.mxu0 %v4040
    %4422 = vmatpush1.bf16.msra.mxu0 %v4039
    %4423 = vmatprep.subr.bf16.mxu0 %v4044
    %4424 = vmatpush1.bf16.msra.mxu0 %v4043
    %4425 = vmatprep.subr.bf16.mxu0 %v4048
    %4426 = vmatpush1.bf16.msra.mxu0 %v4047
    %4427 = vmatprep.subr.bf16.mxu0 %v4052
    %4428 = vmatpush1.bf16.msra.mxu0 %v4051
    %4429 = vmatprep.subr.bf16.mxu0 %v4056
    %4430 = vmatpush1.bf16.msra.mxu0 %v4055
    %4431 = vmatprep.subr.bf16.mxu0 %v4060
    %4432 = vmatpush1.bf16.msra.mxu0 %v4059
    %4433 = vmatprep.subr.bf16.mxu0 %v4064
    %4434 = vmatpush1.bf16.msra.mxu0 %v4063
    %4435 = vmatprep.subr.bf16.mxu0 %v4068
    %4436 = vmatpush1.bf16.msra.mxu0 %v4067
    %4437 = vmatprep.subr.bf16.mxu0 %v4072
    %4438 = vmatpush1.bf16.msra.mxu0 %v4071
    %4439 = vmatprep.subr.bf16.mxu0 %v4076
    %4440 = vmatpush1.bf16.msra.mxu0 %v4075
    %4441 = vmatprep.mubr.bf16.mxu0 %v3882
    %4442 = vmatmul.mubr.bf16.gmra.mrb[0].mxu0 %v3881
    %v4443 = vpop.f32.mrb[0].mxu0
    %v4444 = vadd.f32 %v4403, %v4443
    %v4445 = vpop.f32.mrb[0].mxu0
    %v4446 = vadd.f32 %v4405, %v4445
    %v4447 = vpop.f32.mrb[0].mxu0
    %v4448 = vpop.f32.mrb[0].mxu0
    %4449 = vdwg.mxu0
    %4450 = vmatprep.subr.bf16.mxu0 %v4080
    %4451 = vmatpush1.bf16.msra.mxu0 %v4079
    %4452 = vmatprep.subr.bf16.mxu0 %v4084
    %4453 = vmatpush1.bf16.msra.mxu0 %v4083
    %4454 = vmatprep.subr.bf16.mxu0 %v4088
    %4455 = vmatpush1.bf16.msra.mxu0 %v4087
    %4456 = vmatprep.subr.bf16.mxu0 %v4092
    %4457 = vmatpush1.bf16.msra.mxu0 %v4091
    %4458 = vmatprep.subr.bf16.mxu0 %v4096
    %4459 = vmatpush1.bf16.msra.mxu0 %v4095
    %4460 = vmatprep.subr.bf16.mxu0 %v4100
    %4461 = vmatpush1.bf16.msra.mxu0 %v4099
    %4462 = vmatprep.subr.bf16.mxu0 %v4104
    %4463 = vmatpush1.bf16.msra.mxu0 %v4103
    %4464 = vmatprep.subr.bf16.mxu0 %v4108
    %4465 = vmatpush1.bf16.msra.mxu0 %v4107
    %4466 = vmatprep.subr.bf16.mxu0 %v4112
    %4467 = vmatpush1.bf16.msra.mxu0 %v4111
    %4468 = vmatprep.subr.bf16.mxu0 %v4116
    %4469 = vmatpush1.bf16.msra.mxu0 %v4115
    %4470 = vmatprep.subr.bf16.mxu0 %v4120
    %4471 = vmatpush1.bf16.msra.mxu0 %v4119
    %4472 = vmatprep.subr.bf16.mxu0 %v4124
    %4473 = vmatpush1.bf16.msra.mxu0 %v4123
    %4474 = vmatprep.subr.bf16.mxu0 %v4128
    %4475 = vmatpush1.bf16.msra.mxu0 %v4127
    %4476 = vmatprep.subr.bf16.mxu0 %v4132
    %4477 = vmatpush1.bf16.msra.mxu0 %v4131
    %4478 = vmatprep.subr.bf16.mxu0 %v4136
    %4479 = vmatpush1.bf16.msra.mxu0 %v4135
    %4480 = vmatprep.subr.bf16.mxu0 %v4140
    %4481 = vmatpush1.bf16.msra.mxu0 %v4139
    %4482 = vmatprep.mubr.bf16.mxu0 %v3884
    %4483 = vmatmul.mubr.bf16.gmra.mrb[0].mxu0 %v3883
    %v4484 = vpop.f32.mrb[0].mxu0
    %v4485 = vadd.f32 %v4444, %v4484
    %v4486 = vpop.f32.mrb[0].mxu0
    %v4487 = vadd.f32 %v4446, %v4486
    %v4488 = vpop.f32.mrb[0].mxu0
    %v4489 = vpop.f32.mrb[0].mxu0
    %4490 = vdwg.mxu0
    %4491 = vst [vmem:[#allocation14] sm:$0xff] %v4321
    %4492 = vst [vmem:[#allocation14 + $0x8] sm:$0xff] %v4323
    %4493 = vst [vmem:[#allocation14 + $0x10] sm:$0xff] %v4485
    %4494 = vst [vmem:[#allocation14 + $0x18] sm:$0xff] %v4487
    // Predicated region
    $region30: #{embedding_net_forward.1} parent=1 // pred_check
      _
    $region31: #{embedding_net_forward.1} parent=1 // pred_check_branch
      %4496 = sbr.rel (0) target = $region33
    $region32: #{embedding_net_forward.1} parent=1 // pred_region
      %s4498 = ssub.s32 512, 512
      %4499 = vsyncadd [#allocation10], %s4498
      %s4501 = sshll.u32 [#allocation14], 4
      %s4502 = int_to_ptr.vmem [resolvable:$true] %s4501
      %4504 = dma.vmem_to_hbm [thread:$0]  %s4502, 512, %s7, [#allocation10]
    $region33: #{embedding_net_forward.1} parent=1 // pred_fallthru
      _
    // Predicated region
    $region34: #{embedding_net_forward.1} parent=1 // pred_check
      _
    $region35: #{embedding_net_forward.1} parent=1 // pred_check_branch
      %4506 = sbr.rel (0) target = $region37
    $region36: #{embedding_net_forward.1} parent=1 // pred_region
      %4507 = dma.done [#allocation10], 512
    $region37: #{embedding_net_forward.1} parent=1 // pred_fallthru
      _
    %4508 = vsyncpa [#allocation9], 1
    %4509 = vsyncpa [#allocation12], 1
    %4510 = vsyncpa [#allocation10], 1
  %4511 = vsyncmov [#allocation7]
  %s4512 = vpop.sfrf %4511
  %p4513 = scmp.eq.s32.totalorder %s4512, 0
  %p4514 = pneg %p4513
  %4516 = shalt.err (%p4514)
  %s4517 = scalar_lea.sflag [#allocation7], 1
  %4518 = vsyncmov %s4517
  %s4519 = vpop.sfrf %4518
  %p4520 = scmp.eq.s32.totalorder %s4519, 0
  %p4521 = pneg %p4520
  %4523 = shalt.err (%p4521)
  %s4524 = scalar_lea.sflag [#allocation7], 2
  %4525 = vsyncmov %s4524
  %s4526 = vpop.sfrf %4525
  %p4527 = scmp.eq.s32.totalorder %s4526, 0
  %p4528 = pneg %p4527
  %4530 = shalt.err (%p4528)
  %s4531 = scalar_lea.sflag [#allocation7], 3
  %4532 = vsyncmov %s4531
  %s4533 = vpop.sfrf %4532
  %p4534 = scmp.eq.s32.totalorder %s4533, 0
  %p4535 = pneg %p4534
  %4537 = shalt.err (%p4535)

</llo_original>
